<compile_context>
chip_gen: v7x
topology: tpu7x:2x2x1
jax: 0.10.0
libtpu: 0.0.40
codegen_flags: <defaults>
</compile_context>

<pallas_src>
import jax
import jax.numpy as jnp
from jax import lax
from jax.experimental import pallas as pl
from jax.experimental.pallas import tpu as pltpu

# ----------------------------------------------------------------------------------
# Loihi neuron / simulation parameters (deterministic stand-in for params['neuron'] /
# params['simulation'] from the VT-SNN yaml config).
# ----------------------------------------------------------------------------------
NEURON = dict(vThMant=80, vDecay=128, iDecay=1024, refDelay=1, wgtExp=0)
TS = 1  # simulation time step (Ts)

THETA = NEURON["vThMant"] * (1 << 6)        # firing threshold (fixed point) = 5120
W_SCALE = 1 << (6 + NEURON["wgtExp"])       # weight scaling into fixed point = 64
I_DECAY = NEURON["iDecay"]
V_DECAY = NEURON["vDecay"]
REF_DELAY = NEURON["refDelay"]


def _loihi_decay(x, d):
    """Loihi fixed-point decay toward zero: sign(x) * ((|x| * (4096 - d)) >> 12)."""
    # TODO(synk): exact bit-level rounding of the original slayerLoihi CUDA kernel for
    # negative states is approximated by this decay-toward-zero form.
    sgn = jnp.where(x < 0, jnp.int32(-1), jnp.int32(1))
    mag = jnp.abs(x)
    return sgn * lax.shift_right_logical(mag * jnp.int32(4096 - d), 12)


def _loihi_scan(wx_ref, out_ref, T, N, C):
    """Sequential Loihi CUBA neuron scan + delayShift(1).

    wx_ref : (T*N, C) int32 VMEM ref of pre-scaled weighted inputs (row block t = time t).
    out_ref: (T*N, C) float32 VMEM ref of output spikes; out[0]=0, spike(t) -> out[t+1].
    """
    out_ref[pl.ds(0, N)] = jnp.zeros((N, C), out_ref.dtype)

    def step(t, carry):
        u, v, ref = carry                                       # int32 (N, C) each
        row = pl.multiple_of(t * N, N)
        u = _loihi_decay(u, I_DECAY) + wx_ref[pl.ds(row, N)]    # current (integrates always)
        if REF_DELAY == 1:
            active = ref == 0                                   # simplified refractory
        else:
            active = ref <= 0
        v_upd = _loihi_decay(v, V_DECAY) + u
        v_new = jnp.where(active, v_upd, v)                     # hold voltage while refractory
        fire = jnp.logical_and(active, v_new >= THETA)
        spike = jnp.where(fire, jnp.float32(1.0 / TS), jnp.float32(0.0))
        v_next = jnp.where(fire, jnp.int32(0), v_new)           # reset on spike
        if REF_DELAY == 1:
            ref_next = fire.astype(jnp.int32)
        else:
            ref_next = jnp.where(fire, jnp.int32(REF_DELAY),
                                 jnp.maximum(ref - 1, jnp.int32(0)))
        # delayShift(., 1): spike generated at t lands at output time t + 1.
        out_ref[pl.ds(row + N, N)] = spike.astype(out_ref.dtype)
        return u, v_next, ref_next

    z = jnp.zeros((N, C), jnp.int32)
    # The spike of the last time step (t = T-1) is shifted out of range, so only the
    # first T-1 steps affect the output.  Fully unrolled: T is small and static.
    lax.fori_loop(0, T - 1, step, (z, z, z), unroll=True)


def slayer_loihi_mm(x_flat, w1, w2, *, T, N):
    """Fused forward: block-diag(tact_fc|vis_fc) -> Loihi -> shift -> combi -> Loihi -> shift.

    x_flat: (T*N, Cin_t + Cin_v) float32 spikes (time-major, rows = (t, n)).
    w1    : (Cin_t + Cin_v, Cto + Cvo) block-diagonal first-stage weight.
    w2    : (Cto + Cvo, Cout) combi weight.
    returns (T*N, Cout) float32 output spikes.
    """
    TN, _ = x_flat.shape
    assert TN == T * N
    Cmid = w1.shape[1]
    Cout = w2.shape[1]

    def kernel(x_ref, w1_ref, w2_ref, o_ref, wx1_ref, sp1_ref, wx2_ref):
        scale = jnp.float32(W_SCALE * TS)

        # ---- Stage 1: hoisted dense matmul (tact & vis fused block-diagonally) ----
        wx1 = jnp.dot(x_ref[...], w1_ref[...], preferred_element_type=jnp.float32)
        wx1_ref[...] = (scale * wx1).astype(jnp.int32)          # scale + int32 cast once
        # Joint tact+vis neuron scan; sp1 rows land in [tact | vis] channel order, so the
        # torch.cat(dim=1) feeding the combi layer is free.
        _loihi_scan(wx1_ref, sp1_ref, T, N, Cmid)

        # ---- Stage 2 (combi): hoisted matmul over the delayed stage-1 spike train ----
        wx2 = jnp.dot(sp1_ref[...], w2_ref[...], preferred_element_type=jnp.float32)
        wx2_ref[...] = (scale * wx2).astype(jnp.int32)
        _loihi_scan(wx2_ref, o_ref, T, N, Cout)

    # Everything is whole-array resident in VMEM (a few KB total at these sizes).
    # TODO(synk): at real VT-SNN sizes (T~325, vis Cin~2304) the vis input should be kept
    # in HBM (memory_space=pl.ANY) and streamed in time chunks with double-buffered DMAs.
    return pl.pallas_call(
        kernel,
        out_shape=jax.ShapeDtypeStruct((TN, Cout), jnp.float32),
        in_specs=[
            pl.BlockSpec(memory_space=pltpu.MemorySpace.VMEM),
            pl.BlockSpec(memory_space=pltpu.MemorySpace.VMEM),
            pl.BlockSpec(memory_space=pltpu.MemorySpace.VMEM),
        ],
        out_specs=pl.BlockSpec(memory_space=pltpu.MemorySpace.VMEM),
        scratch_shapes=[
            pltpu.VMEM((TN, Cmid), jnp.int32),    # stage-1 weighted inputs
            pltpu.VMEM((TN, Cmid), jnp.float32),  # stage-1 (delayed) spikes = combi input
            pltpu.VMEM((TN, Cout), jnp.int32),    # stage-2 weighted inputs
        ],
    )(x_flat, w1, w2)


class SlayerLoihiMMPallas:
    """JAX/Pallas reimplementation of SlayerLoihiMM.forward (weights are synthetic)."""

    def __init__(self, key, tact_input_size, vis_input_size,
                 tact_output_size, vis_output_size, output_size):
        k1, k2, k3 = jax.random.split(key, 3)
        scale = 0.35  # chosen so the synthetic network actually emits spikes
        # weights stored as (Cin, Cout) so the kernel can do x @ W directly
        w_tact = scale * jax.random.normal(k1, (tact_input_size, tact_output_size), jnp.float32)
        w_vis = scale * jax.random.normal(k2, (vis_input_size, vis_output_size), jnp.float32)
        self.w_combi = scale * jax.random.normal(
            k3, (tact_output_size + vis_output_size, output_size), jnp.float32)

        # Block-diagonal fusion of tact_fc and vis_fc: one matmul + one neuron scan
        # produces both intermediate spike trains in [tact | vis] channel order.
        cin = tact_input_size + vis_input_size
        cmid = tact_output_size + vis_output_size
        w1 = jnp.zeros((cin, cmid), jnp.float32)
        w1 = w1.at[:tact_input_size, :tact_output_size].set(w_tact)
        w1 = w1.at[tact_input_size:, tact_output_size:].set(w_vis)
        self.w1 = w1

    @staticmethod
    def _to_tnc(x_nc11t):
        # layout: torch (N, C, 1, 1, T) -> kernel (T, N, C)
        n, c, _, _, t = x_nc11t.shape
        return jnp.transpose(x_nc11t.reshape(n, c, t), (2, 0, 1))

    def __call__(self, spike_tact, spike_vis):
        xt = self._to_tnc(spike_tact)                     # (T, N, Cti)
        xv = self._to_tnc(spike_vis)                      # (T, N, Cvi)
        T, N, _ = xt.shape
        # channel concat of the inputs (matches the block-diagonal w1 ordering)
        x = jnp.concatenate([xt, xv], axis=-1)            # (T, N, Cti+Cvi)
        x_flat = x.reshape(T * N, x.shape[-1])            # rows ordered (t, n)

        out_flat = slayer_loihi_mm(x_flat, self.w1, self.w_combi, T=T, N=N)  # (T*N, Cout)

        # back to torch layout (N, C, 1, 1, T)
        cout = out_flat.shape[-1]
        out_tnc = out_flat.reshape(T, N, cout)
        return jnp.transpose(out_tnc, (1, 2, 0)).reshape(N, cout, 1, 1, T)


if __name__ == "__main__":
    key = jax.random.PRNGKey(0)
    k_w, k_t, k_v = jax.random.split(key, 3)

    # small shapes consistent with the module's forward
    N, T = 2, 16
    TACT_IN, VIS_IN = 24, 40
    TACT_OUT, VIS_OUT, OUT = 16, 16, 8

    model = SlayerLoihiMMPallas(k_w, TACT_IN, VIS_IN, TACT_OUT, VIS_OUT, OUT)

    # binary spike trains, torch layout (N, C, 1, 1, T)
    spike_tact = (jax.random.uniform(k_t, (N, TACT_IN, 1, 1, T)) < 0.3).astype(jnp.float32)
    spike_vis = (jax.random.uniform(k_v, (N, VIS_IN, 1, 1, T)) < 0.3).astype(jnp.float32)

    out = model(spike_tact, spike_vis)
    out = jax.block_until_ready(out)

    assert out.shape == (N, OUT, 1, 1, T), out.shape
    assert out.dtype == jnp.float32
    # outputs are spikes: 0 or 1/TS
    assert bool(jnp.all((out == 0.0) | (out == 1.0 / TS)))
    print("KERNEL_OK")
</pallas_src>

<mosaic_0001>
module attributes {stable_mosaic.version = 11 : i64} {
  func.func @kernel(%arg0: memref<32x64xf32, #tpu.memory_space<vmem>>, %arg1: memref<64x32xf32, #tpu.memory_space<vmem>>, %arg2: memref<32x8xf32, #tpu.memory_space<vmem>>, %arg3: memref<32x8xf32, #tpu.memory_space<vmem>>, %arg4: memref<32x32xi32, #tpu.memory_space<vmem>>, %arg5: memref<32x32xf32, #tpu.memory_space<vmem>>, %arg6: memref<32x8xi32, #tpu.memory_space<vmem>>) attributes {dimension_semantics = [], scalar_prefetch = 0 : i64, scratch_operands = 3 : i64, tpu.core_type = #tpu.core_type<tc>} {
    %c0 = arith.constant 0 : index
    %c0_0 = arith.constant 0 : index
    %0 = vector.load %arg0[%c0, %c0_0] : memref<32x64xf32, #tpu.memory_space<vmem>>, vector<32x64xf32>
    %c0_1 = arith.constant 0 : index
    %c0_2 = arith.constant 0 : index
    %1 = vector.load %arg1[%c0_1, %c0_2] : memref<64x32xf32, #tpu.memory_space<vmem>>, vector<64x32xf32>
    %cst = arith.constant dense<0.000000e+00> : vector<32x32xf32>
    %2 = tpu.matmul %0, %1, %cst {dimension_numbers = #tpu.dot_dimension_numbers<[1], [0], [0], [1], [0, 0, 1, 1], [], []>} : vector<32x64xf32>, vector<64x32xf32>, vector<32x32xf32> -> vector<32x32xf32>
    %cst_3 = arith.constant 6.400000e+01 : f32
    %3 = vector.broadcast %cst_3 : f32 to vector<32x32xf32>
    %4 = arith.mulf %3, %2 : vector<32x32xf32>
    %5 = arith.fptosi %4 : vector<32x32xf32> to vector<32x32xi32>
    %c0_4 = arith.constant 0 : index
    %c0_5 = arith.constant 0 : index
    %6 = vector.load %arg4[%c0_4, %c0_5] : memref<32x32xi32, #tpu.memory_space<vmem>>, vector<32x32xi32>
    tpu.vector_store %arg4[%c0_4, %c0_5], %5 {strides = array<i32>} : memref<32x32xi32, #tpu.memory_space<vmem>>, vector<32x32xi32>,
    %cst_6 = arith.constant 0.000000e+00 : f32
    %7 = vector.broadcast %cst_6 : f32 to vector<2x32xf32>
    %c0_7 = arith.constant 0 : index
    %c0_8 = arith.constant 0 : index
    %8 = vector.load %arg5[%c0_7, %c0_8] : memref<32x32xf32, #tpu.memory_space<vmem>>, vector<2x32xf32>
    tpu.vector_store %arg5[%c0_7, %c0_8], %7 {strides = array<i32>} : memref<32x32xf32, #tpu.memory_space<vmem>>, vector<2x32xf32>,
    %c0_i32 = arith.constant 0 : i32
    %9 = vector.broadcast %c0_i32 : i32 to vector<2x32xi32>
    %c0_i32_9 = arith.constant 0 : i32
    %c2_i32 = arith.constant 2 : i32
    %10 = arith.muli %c0_i32_9, %c2_i32 : i32
    %11 = tpu.assume_multiple %10, 2 : i32
    %c0_i32_10 = arith.constant 0 : i32
    %12 = vector.broadcast %c0_i32_10 : i32 to vector<2x32xi32>
    %13 = arith.cmpi slt, %9, %12 : vector<2x32xi32>
    %c-1_i32 = arith.constant -1 : i32
    %c1_i32 = arith.constant 1 : i32
    %14 = vector.broadcast %c-1_i32 : i32 to vector<2x32xi32>
    %15 = vector.broadcast %c1_i32 : i32 to vector<2x32xi32>
    %16 = arith.select %13, %14, %15 : vector<2x32xi1>, vector<2x32xi32>
    %17 = math.absi %9 : vector<2x32xi32>
    %c3072_i32 = arith.constant 3072 : i32
    %18 = vector.broadcast %c3072_i32 : i32 to vector<2x32xi32>
    %19 = arith.muli %17, %18 : vector<2x32xi32>
    %c12_i32 = arith.constant 12 : i32
    %20 = vector.broadcast %c12_i32 : i32 to vector<2x32xi32>
    %21 = arith.shrui %19, %20 : vector<2x32xi32>
    %22 = arith.muli %16, %21 : vector<2x32xi32>
    %23 = arith.index_cast %11 : i32 to index
    %c0_11 = arith.constant 0 : index
    %24 = vector.load %arg4[%23, %c0_11] : memref<32x32xi32, #tpu.memory_space<vmem>>, vector<2x32xi32>
    %25 = arith.addi %22, %24 : vector<2x32xi32>
    %c0_i32_12 = arith.constant 0 : i32
    %26 = vector.broadcast %c0_i32_12 : i32 to vector<2x32xi32>
    %27 = arith.cmpi eq, %9, %26 : vector<2x32xi32>
    %c0_i32_13 = arith.constant 0 : i32
    %28 = vector.broadcast %c0_i32_13 : i32 to vector<2x32xi32>
    %29 = arith.cmpi slt, %9, %28 : vector<2x32xi32>
    %c-1_i32_14 = arith.constant -1 : i32
    %c1_i32_15 = arith.constant 1 : i32
    %30 = vector.broadcast %c-1_i32_14 : i32 to vector<2x32xi32>
    %31 = vector.broadcast %c1_i32_15 : i32 to vector<2x32xi32>
    %32 = arith.select %29, %30, %31 : vector<2x32xi1>, vector<2x32xi32>
    %33 = math.absi %9 : vector<2x32xi32>
    %c3968_i32 = arith.constant 3968 : i32
    %34 = vector.broadcast %c3968_i32 : i32 to vector<2x32xi32>
    %35 = arith.muli %33, %34 : vector<2x32xi32>
    %c12_i32_16 = arith.constant 12 : i32
    %36 = vector.broadcast %c12_i32_16 : i32 to vector<2x32xi32>
    %37 = arith.shrui %35, %36 : vector<2x32xi32>
    %38 = arith.muli %32, %37 : vector<2x32xi32>
    %39 = arith.addi %38, %25 : vector<2x32xi32>
    %40 = arith.select %27, %39, %9 : vector<2x32xi1>, vector<2x32xi32>
    %c5120_i32 = arith.constant 5120 : i32
    %41 = vector.broadcast %c5120_i32 : i32 to vector<2x32xi32>
    %42 = arith.cmpi sge, %40, %41 : vector<2x32xi32>
    %43 = arith.andi %27, %42 : vector<2x32xi1>
    %cst_17 = arith.constant 1.000000e+00 : f32
    %cst_18 = arith.constant 0.000000e+00 : f32
    %44 = vector.broadcast %cst_17 : f32 to vector<2x32xf32>
    %45 = vector.broadcast %cst_18 : f32 to vector<2x32xf32>
    %46 = arith.select %43, %44, %45 : vector<2x32xi1>, vector<2x32xf32>
    %c0_i32_19 = arith.constant 0 : i32
    %47 = vector.broadcast %c0_i32_19 : i32 to vector<2x32xi32>
    %48 = arith.select %43, %47, %40 : vector<2x32xi1>, vector<2x32xi32>
    %49 = arith.extui %43 : vector<2x32xi1> to vector<2x32xi32>
    %c2_i32_20 = arith.constant 2 : i32
    %50 = arith.addi %11, %c2_i32_20 : i32
    %51 = arith.index_cast %50 : i32 to index
    %c0_21 = arith.constant 0 : index
    %52 = vector.load %arg5[%51, %c0_21] : memref<32x32xf32, #tpu.memory_space<vmem>>, vector<2x32xf32>
    tpu.vector_store %arg5[%51, %c0_21], %46 {strides = array<i32>} : memref<32x32xf32, #tpu.memory_space<vmem>>, vector<2x32xf32>,
    %c1_i32_22 = arith.constant 1 : i32
    %c2_i32_23 = arith.constant 2 : i32
    %53 = arith.muli %c1_i32_22, %c2_i32_23 : i32
    %54 = tpu.assume_multiple %53, 2 : i32
    %c0_i32_24 = arith.constant 0 : i32
    %55 = vector.broadcast %c0_i32_24 : i32 to vector<2x32xi32>
    %56 = arith.cmpi slt, %25, %55 : vector<2x32xi32>
    %c-1_i32_25 = arith.constant -1 : i32
    %c1_i32_26 = arith.constant 1 : i32
    %57 = vector.broadcast %c-1_i32_25 : i32 to vector<2x32xi32>
    %58 = vector.broadcast %c1_i32_26 : i32 to vector<2x32xi32>
    %59 = arith.select %56, %57, %58 : vector<2x32xi1>, vector<2x32xi32>
    %60 = math.absi %25 : vector<2x32xi32>
    %c3072_i32_27 = arith.constant 3072 : i32
    %61 = vector.broadcast %c3072_i32_27 : i32 to vector<2x32xi32>
    %62 = arith.muli %60, %61 : vector<2x32xi32>
    %c12_i32_28 = arith.constant 12 : i32
    %63 = vector.broadcast %c12_i32_28 : i32 to vector<2x32xi32>
    %64 = arith.shrui %62, %63 : vector<2x32xi32>
    %65 = arith.muli %59, %64 : vector<2x32xi32>
    %66 = arith.index_cast %54 : i32 to index
    %c0_29 = arith.constant 0 : index
    %67 = vector.load %arg4[%66, %c0_29] : memref<32x32xi32, #tpu.memory_space<vmem>>, vector<2x32xi32>
    %68 = arith.addi %65, %67 : vector<2x32xi32>
    %c0_i32_30 = arith.constant 0 : i32
    %69 = vector.broadcast %c0_i32_30 : i32 to vector<2x32xi32>
    %70 = arith.cmpi eq, %49, %69 : vector<2x32xi32>
    %c0_i32_31 = arith.constant 0 : i32
    %71 = vector.broadcast %c0_i32_31 : i32 to vector<2x32xi32>
    %72 = arith.cmpi slt, %48, %71 : vector<2x32xi32>
    %c-1_i32_32 = arith.constant -1 : i32
    %c1_i32_33 = arith.constant 1 : i32
    %73 = vector.broadcast %c-1_i32_32 : i32 to vector<2x32xi32>
    %74 = vector.broadcast %c1_i32_33 : i32 to vector<2x32xi32>
    %75 = arith.select %72, %73, %74 : vector<2x32xi1>, vector<2x32xi32>
    %76 = math.absi %48 : vector<2x32xi32>
    %c3968_i32_34 = arith.constant 3968 : i32
    %77 = vector.broadcast %c3968_i32_34 : i32 to vector<2x32xi32>
    %78 = arith.muli %76, %77 : vector<2x32xi32>
    %c12_i32_35 = arith.constant 12 : i32
    %79 = vector.broadcast %c12_i32_35 : i32 to vector<2x32xi32>
    %80 = arith.shrui %78, %79 : vector<2x32xi32>
    %81 = arith.muli %75, %80 : vector<2x32xi32>
    %82 = arith.addi %81, %68 : vector<2x32xi32>
    %83 = arith.select %70, %82, %48 : vector<2x32xi1>, vector<2x32xi32>
    %c5120_i32_36 = arith.constant 5120 : i32
    %84 = vector.broadcast %c5120_i32_36 : i32 to vector<2x32xi32>
    %85 = arith.cmpi sge, %83, %84 : vector<2x32xi32>
    %86 = arith.andi %70, %85 : vector<2x32xi1>
    %cst_37 = arith.constant 1.000000e+00 : f32
    %cst_38 = arith.constant 0.000000e+00 : f32
    %87 = vector.broadcast %cst_37 : f32 to vector<2x32xf32>
    %88 = vector.broadcast %cst_38 : f32 to vector<2x32xf32>
    %89 = arith.select %86, %87, %88 : vector<2x32xi1>, vector<2x32xf32>
    %c0_i32_39 = arith.constant 0 : i32
    %90 = vector.broadcast %c0_i32_39 : i32 to vector<2x32xi32>
    %91 = arith.select %86, %90, %83 : vector<2x32xi1>, vector<2x32xi32>
    %92 = arith.extui %86 : vector<2x32xi1> to vector<2x32xi32>
    %c2_i32_40 = arith.constant 2 : i32
    %93 = arith.addi %54, %c2_i32_40 : i32
    %94 = arith.index_cast %93 : i32 to index
    %c0_41 = arith.constant 0 : index
    %95 = vector.load %arg5[%94, %c0_41] : memref<32x32xf32, #tpu.memory_space<vmem>>, vector<2x32xf32>
    tpu.vector_store %arg5[%94, %c0_41], %89 {strides = array<i32>} : memref<32x32xf32, #tpu.memory_space<vmem>>, vector<2x32xf32>,
    %c2_i32_42 = arith.constant 2 : i32
    %c2_i32_43 = arith.constant 2 : i32
    %96 = arith.muli %c2_i32_42, %c2_i32_43 : i32
    %97 = tpu.assume_multiple %96, 2 : i32
    %c0_i32_44 = arith.constant 0 : i32
    %98 = vector.broadcast %c0_i32_44 : i32 to vector<2x32xi32>
    %99 = arith.cmpi slt, %68, %98 : vector<2x32xi32>
    %c-1_i32_45 = arith.constant -1 : i32
    %c1_i32_46 = arith.constant 1 : i32
    %100 = vector.broadcast %c-1_i32_45 : i32 to vector<2x32xi32>
    %101 = vector.broadcast %c1_i32_46 : i32 to vector<2x32xi32>
    %102 = arith.select %99, %100, %101 : vector<2x32xi1>, vector<2x32xi32>
    %103 = math.absi %68 : vector<2x32xi32>
    %c3072_i32_47 = arith.constant 3072 : i32
    %104 = vector.broadcast %c3072_i32_47 : i32 to vector<2x32xi32>
    %105 = arith.muli %103, %104 : vector<2x32xi32>
    %c12_i32_48 = arith.constant 12 : i32
    %106 = vector.broadcast %c12_i32_48 : i32 to vector<2x32xi32>
    %107 = arith.shrui %105, %106 : vector<2x32xi32>
    %108 = arith.muli %102, %107 : vector<2x32xi32>
    %109 = arith.index_cast %97 : i32 to index
    %c0_49 = arith.constant 0 : index
    %110 = vector.load %arg4[%109, %c0_49] : memref<32x32xi32, #tpu.memory_space<vmem>>, vector<2x32xi32>
    %111 = arith.addi %108, %110 : vector<2x32xi32>
    %c0_i32_50 = arith.constant 0 : i32
    %112 = vector.broadcast %c0_i32_50 : i32 to vector<2x32xi32>
    %113 = arith.cmpi eq, %92, %112 : vector<2x32xi32>
    %c0_i32_51 = arith.constant 0 : i32
    %114 = vector.broadcast %c0_i32_51 : i32 to vector<2x32xi32>
    %115 = arith.cmpi slt, %91, %114 : vector<2x32xi32>
    %c-1_i32_52 = arith.constant -1 : i32
    %c1_i32_53 = arith.constant 1 : i32
    %116 = vector.broadcast %c-1_i32_52 : i32 to vector<2x32xi32>
    %117 = vector.broadcast %c1_i32_53 : i32 to vector<2x32xi32>
    %118 = arith.select %115, %116, %117 : vector<2x32xi1>, vector<2x32xi32>
    %119 = math.absi %91 : vector<2x32xi32>
    %c3968_i32_54 = arith.constant 3968 : i32
    %120 = vector.broadcast %c3968_i32_54 : i32 to vector<2x32xi32>
    %121 = arith.muli %119, %120 : vector<2x32xi32>
    %c12_i32_55 = arith.constant 12 : i32
    %122 = vector.broadcast %c12_i32_55 : i32 to vector<2x32xi32>
    %123 = arith.shrui %121, %122 : vector<2x32xi32>
    %124 = arith.muli %118, %123 : vector<2x32xi32>
    %125 = arith.addi %124, %111 : vector<2x32xi32>
    %126 = arith.select %113, %125, %91 : vector<2x32xi1>, vector<2x32xi32>
    %c5120_i32_56 = arith.constant 5120 : i32
    %127 = vector.broadcast %c5120_i32_56 : i32 to vector<2x32xi32>
    %128 = arith.cmpi sge, %126, %127 : vector<2x32xi32>
    %129 = arith.andi %113, %128 : vector<2x32xi1>
    %cst_57 = arith.constant 1.000000e+00 : f32
    %cst_58 = arith.constant 0.000000e+00 : f32
    %130 = vector.broadcast %cst_57 : f32 to vector<2x32xf32>
    %131 = vector.broadcast %cst_58 : f32 to vector<2x32xf32>
    %132 = arith.select %129, %130, %131 : vector<2x32xi1>, vector<2x32xf32>
    %c0_i32_59 = arith.constant 0 : i32
    %133 = vector.broadcast %c0_i32_59 : i32 to vector<2x32xi32>
    %134 = arith.select %129, %133, %126 : vector<2x32xi1>, vector<2x32xi32>
    %135 = arith.extui %129 : vector<2x32xi1> to vector<2x32xi32>
    %c2_i32_60 = arith.constant 2 : i32
    %136 = arith.addi %97, %c2_i32_60 : i32
    %137 = arith.index_cast %136 : i32 to index
    %c0_61 = arith.constant 0 : index
    %138 = vector.load %arg5[%137, %c0_61] : memref<32x32xf32, #tpu.memory_space<vmem>>, vector<2x32xf32>
    tpu.vector_store %arg5[%137, %c0_61], %132 {strides = array<i32>} : memref<32x32xf32, #tpu.memory_space<vmem>>, vector<2x32xf32>,
    %c3_i32 = arith.constant 3 : i32
    %c2_i32_62 = arith.constant 2 : i32
    %139 = arith.muli %c3_i32, %c2_i32_62 : i32
    %140 = tpu.assume_multiple %139, 2 : i32
    %c0_i32_63 = arith.constant 0 : i32
    %141 = vector.broadcast %c0_i32_63 : i32 to vector<2x32xi32>
    %142 = arith.cmpi slt, %111, %141 : vector<2x32xi32>
    %c-1_i32_64 = arith.constant -1 : i32
    %c1_i32_65 = arith.constant 1 : i32
    %143 = vector.broadcast %c-1_i32_64 : i32 to vector<2x32xi32>
    %144 = vector.broadcast %c1_i32_65 : i32 to vector<2x32xi32>
    %145 = arith.select %142, %143, %144 : vector<2x32xi1>, vector<2x32xi32>
    %146 = math.absi %111 : vector<2x32xi32>
    %c3072_i32_66 = arith.constant 3072 : i32
    %147 = vector.broadcast %c3072_i32_66 : i32 to vector<2x32xi32>
    %148 = arith.muli %146, %147 : vector<2x32xi32>
    %c12_i32_67 = arith.constant 12 : i32
    %149 = vector.broadcast %c12_i32_67 : i32 to vector<2x32xi32>
    %150 = arith.shrui %148, %149 : vector<2x32xi32>
    %151 = arith.muli %145, %150 : vector<2x32xi32>
    %152 = arith.index_cast %140 : i32 to index
    %c0_68 = arith.constant 0 : index
    %153 = vector.load %arg4[%152, %c0_68] : memref<32x32xi32, #tpu.memory_space<vmem>>, vector<2x32xi32>
    %154 = arith.addi %151, %153 : vector<2x32xi32>
    %c0_i32_69 = arith.constant 0 : i32
    %155 = vector.broadcast %c0_i32_69 : i32 to vector<2x32xi32>
    %156 = arith.cmpi eq, %135, %155 : vector<2x32xi32>
    %c0_i32_70 = arith.constant 0 : i32
    %157 = vector.broadcast %c0_i32_70 : i32 to vector<2x32xi32>
    %158 = arith.cmpi slt, %134, %157 : vector<2x32xi32>
    %c-1_i32_71 = arith.constant -1 : i32
    %c1_i32_72 = arith.constant 1 : i32
    %159 = vector.broadcast %c-1_i32_71 : i32 to vector<2x32xi32>
    %160 = vector.broadcast %c1_i32_72 : i32 to vector<2x32xi32>
    %161 = arith.select %158, %159, %160 : vector<2x32xi1>, vector<2x32xi32>
    %162 = math.absi %134 : vector<2x32xi32>
    %c3968_i32_73 = arith.constant 3968 : i32
    %163 = vector.broadcast %c3968_i32_73 : i32 to vector<2x32xi32>
    %164 = arith.muli %162, %163 : vector<2x32xi32>
    %c12_i32_74 = arith.constant 12 : i32
    %165 = vector.broadcast %c12_i32_74 : i32 to vector<2x32xi32>
    %166 = arith.shrui %164, %165 : vector<2x32xi32>
    %167 = arith.muli %161, %166 : vector<2x32xi32>
    %168 = arith.addi %167, %154 : vector<2x32xi32>
    %169 = arith.select %156, %168, %134 : vector<2x32xi1>, vector<2x32xi32>
    %c5120_i32_75 = arith.constant 5120 : i32
    %170 = vector.broadcast %c5120_i32_75 : i32 to vector<2x32xi32>
    %171 = arith.cmpi sge, %169, %170 : vector<2x32xi32>
    %172 = arith.andi %156, %171 : vector<2x32xi1>
    %cst_76 = arith.constant 1.000000e+00 : f32
    %cst_77 = arith.constant 0.000000e+00 : f32
    %173 = vector.broadcast %cst_76 : f32 to vector<2x32xf32>
    %174 = vector.broadcast %cst_77 : f32 to vector<2x32xf32>
    %175 = arith.select %172, %173, %174 : vector<2x32xi1>, vector<2x32xf32>
    %c0_i32_78 = arith.constant 0 : i32
    %176 = vector.broadcast %c0_i32_78 : i32 to vector<2x32xi32>
    %177 = arith.select %172, %176, %169 : vector<2x32xi1>, vector<2x32xi32>
    %178 = arith.extui %172 : vector<2x32xi1> to vector<2x32xi32>
    %c2_i32_79 = arith.constant 2 : i32
    %179 = arith.addi %140, %c2_i32_79 : i32
    %180 = arith.index_cast %179 : i32 to index
    %c0_80 = arith.constant 0 : index
    %181 = vector.load %arg5[%180, %c0_80] : memref<32x32xf32, #tpu.memory_space<vmem>>, vector<2x32xf32>
    tpu.vector_store %arg5[%180, %c0_80], %175 {strides = array<i32>} : memref<32x32xf32, #tpu.memory_space<vmem>>, vector<2x32xf32>,
    %c4_i32 = arith.constant 4 : i32
    %c2_i32_81 = arith.constant 2 : i32
    %182 = arith.muli %c4_i32, %c2_i32_81 : i32
    %183 = tpu.assume_multiple %182, 2 : i32
    %c0_i32_82 = arith.constant 0 : i32
    %184 = vector.broadcast %c0_i32_82 : i32 to vector<2x32xi32>
    %185 = arith.cmpi slt, %154, %184 : vector<2x32xi32>
    %c-1_i32_83 = arith.constant -1 : i32
    %c1_i32_84 = arith.constant 1 : i32
    %186 = vector.broadcast %c-1_i32_83 : i32 to vector<2x32xi32>
    %187 = vector.broadcast %c1_i32_84 : i32 to vector<2x32xi32>
    %188 = arith.select %185, %186, %187 : vector<2x32xi1>, vector<2x32xi32>
    %189 = math.absi %154 : vector<2x32xi32>
    %c3072_i32_85 = arith.constant 3072 : i32
    %190 = vector.broadcast %c3072_i32_85 : i32 to vector<2x32xi32>
    %191 = arith.muli %189, %190 : vector<2x32xi32>
    %c12_i32_86 = arith.constant 12 : i32
    %192 = vector.broadcast %c12_i32_86 : i32 to vector<2x32xi32>
    %193 = arith.shrui %191, %192 : vector<2x32xi32>
    %194 = arith.muli %188, %193 : vector<2x32xi32>
    %195 = arith.index_cast %183 : i32 to index
    %c0_87 = arith.constant 0 : index
    %196 = vector.load %arg4[%195, %c0_87] : memref<32x32xi32, #tpu.memory_space<vmem>>, vector<2x32xi32>
    %197 = arith.addi %194, %196 : vector<2x32xi32>
    %c0_i32_88 = arith.constant 0 : i32
    %198 = vector.broadcast %c0_i32_88 : i32 to vector<2x32xi32>
    %199 = arith.cmpi eq, %178, %198 : vector<2x32xi32>
    %c0_i32_89 = arith.constant 0 : i32
    %200 = vector.broadcast %c0_i32_89 : i32 to vector<2x32xi32>
    %201 = arith.cmpi slt, %177, %200 : vector<2x32xi32>
    %c-1_i32_90 = arith.constant -1 : i32
    %c1_i32_91 = arith.constant 1 : i32
    %202 = vector.broadcast %c-1_i32_90 : i32 to vector<2x32xi32>
    %203 = vector.broadcast %c1_i32_91 : i32 to vector<2x32xi32>
    %204 = arith.select %201, %202, %203 : vector<2x32xi1>, vector<2x32xi32>
    %205 = math.absi %177 : vector<2x32xi32>
    %c3968_i32_92 = arith.constant 3968 : i32
    %206 = vector.broadcast %c3968_i32_92 : i32 to vector<2x32xi32>
    %207 = arith.muli %205, %206 : vector<2x32xi32>
    %c12_i32_93 = arith.constant 12 : i32
    %208 = vector.broadcast %c12_i32_93 : i32 to vector<2x32xi32>
    %209 = arith.shrui %207, %208 : vector<2x32xi32>
    %210 = arith.muli %204, %209 : vector<2x32xi32>
    %211 = arith.addi %210, %197 : vector<2x32xi32>
    %212 = arith.select %199, %211, %177 : vector<2x32xi1>, vector<2x32xi32>
    %c5120_i32_94 = arith.constant 5120 : i32
    %213 = vector.broadcast %c5120_i32_94 : i32 to vector<2x32xi32>
    %214 = arith.cmpi sge, %212, %213 : vector<2x32xi32>
    %215 = arith.andi %199, %214 : vector<2x32xi1>
    %cst_95 = arith.constant 1.000000e+00 : f32
    %cst_96 = arith.constant 0.000000e+00 : f32
    %216 = vector.broadcast %cst_95 : f32 to vector<2x32xf32>
    %217 = vector.broadcast %cst_96 : f32 to vector<2x32xf32>
    %218 = arith.select %215, %216, %217 : vector<2x32xi1>, vector<2x32xf32>
    %c0_i32_97 = arith.constant 0 : i32
    %219 = vector.broadcast %c0_i32_97 : i32 to vector<2x32xi32>
    %220 = arith.select %215, %219, %212 : vector<2x32xi1>, vector<2x32xi32>
    %221 = arith.extui %215 : vector<2x32xi1> to vector<2x32xi32>
    %c2_i32_98 = arith.constant 2 : i32
    %222 = arith.addi %183, %c2_i32_98 : i32
    %223 = arith.index_cast %222 : i32 to index
    %c0_99 = arith.constant 0 : index
    %224 = vector.load %arg5[%223, %c0_99] : memref<32x32xf32, #tpu.memory_space<vmem>>, vector<2x32xf32>
    tpu.vector_store %arg5[%223, %c0_99], %218 {strides = array<i32>} : memref<32x32xf32, #tpu.memory_space<vmem>>, vector<2x32xf32>,
    %c5_i32 = arith.constant 5 : i32
    %c2_i32_100 = arith.constant 2 : i32
    %225 = arith.muli %c5_i32, %c2_i32_100 : i32
    %226 = tpu.assume_multiple %225, 2 : i32
    %c0_i32_101 = arith.constant 0 : i32
    %227 = vector.broadcast %c0_i32_101 : i32 to vector<2x32xi32>
    %228 = arith.cmpi slt, %197, %227 : vector<2x32xi32>
    %c-1_i32_102 = arith.constant -1 : i32
    %c1_i32_103 = arith.constant 1 : i32
    %229 = vector.broadcast %c-1_i32_102 : i32 to vector<2x32xi32>
    %230 = vector.broadcast %c1_i32_103 : i32 to vector<2x32xi32>
    %231 = arith.select %228, %229, %230 : vector<2x32xi1>, vector<2x32xi32>
    %232 = math.absi %197 : vector<2x32xi32>
    %c3072_i32_104 = arith.constant 3072 : i32
    %233 = vector.broadcast %c3072_i32_104 : i32 to vector<2x32xi32>
    %234 = arith.muli %232, %233 : vector<2x32xi32>
    %c12_i32_105 = arith.constant 12 : i32
    %235 = vector.broadcast %c12_i32_105 : i32 to vector<2x32xi32>
    %236 = arith.shrui %234, %235 : vector<2x32xi32>
    %237 = arith.muli %231, %236 : vector<2x32xi32>
    %238 = arith.index_cast %226 : i32 to index
    %c0_106 = arith.constant 0 : index
    %239 = vector.load %arg4[%238, %c0_106] : memref<32x32xi32, #tpu.memory_space<vmem>>, vector<2x32xi32>
    %240 = arith.addi %237, %239 : vector<2x32xi32>
    %c0_i32_107 = arith.constant 0 : i32
    %241 = vector.broadcast %c0_i32_107 : i32 to vector<2x32xi32>
    %242 = arith.cmpi eq, %221, %241 : vector<2x32xi32>
    %c0_i32_108 = arith.constant 0 : i32
    %243 = vector.broadcast %c0_i32_108 : i32 to vector<2x32xi32>
    %244 = arith.cmpi slt, %220, %243 : vector<2x32xi32>
    %c-1_i32_109 = arith.constant -1 : i32
    %c1_i32_110 = arith.constant 1 : i32
    %245 = vector.broadcast %c-1_i32_109 : i32 to vector<2x32xi32>
    %246 = vector.broadcast %c1_i32_110 : i32 to vector<2x32xi32>
    %247 = arith.select %244, %245, %246 : vector<2x32xi1>, vector<2x32xi32>
    %248 = math.absi %220 : vector<2x32xi32>
    %c3968_i32_111 = arith.constant 3968 : i32
    %249 = vector.broadcast %c3968_i32_111 : i32 to vector<2x32xi32>
    %250 = arith.muli %248, %249 : vector<2x32xi32>
    %c12_i32_112 = arith.constant 12 : i32
    %251 = vector.broadcast %c12_i32_112 : i32 to vector<2x32xi32>
    %252 = arith.shrui %250, %251 : vector<2x32xi32>
    %253 = arith.muli %247, %252 : vector<2x32xi32>
    %254 = arith.addi %253, %240 : vector<2x32xi32>
    %255 = arith.select %242, %254, %220 : vector<2x32xi1>, vector<2x32xi32>
    %c5120_i32_113 = arith.constant 5120 : i32
    %256 = vector.broadcast %c5120_i32_113 : i32 to vector<2x32xi32>
    %257 = arith.cmpi sge, %255, %256 : vector<2x32xi32>
    %258 = arith.andi %242, %257 : vector<2x32xi1>
    %cst_114 = arith.constant 1.000000e+00 : f32
    %cst_115 = arith.constant 0.000000e+00 : f32
    %259 = vector.broadcast %cst_114 : f32 to vector<2x32xf32>
    %260 = vector.broadcast %cst_115 : f32 to vector<2x32xf32>
    %261 = arith.select %258, %259, %260 : vector<2x32xi1>, vector<2x32xf32>
    %c0_i32_116 = arith.constant 0 : i32
    %262 = vector.broadcast %c0_i32_116 : i32 to vector<2x32xi32>
    %263 = arith.select %258, %262, %255 : vector<2x32xi1>, vector<2x32xi32>
    %264 = arith.extui %258 : vector<2x32xi1> to vector<2x32xi32>
    %c2_i32_117 = arith.constant 2 : i32
    %265 = arith.addi %226, %c2_i32_117 : i32
    %266 = arith.index_cast %265 : i32 to index
    %c0_118 = arith.constant 0 : index
    %267 = vector.load %arg5[%266, %c0_118] : memref<32x32xf32, #tpu.memory_space<vmem>>, vector<2x32xf32>
    tpu.vector_store %arg5[%266, %c0_118], %261 {strides = array<i32>} : memref<32x32xf32, #tpu.memory_space<vmem>>, vector<2x32xf32>,
    %c6_i32 = arith.constant 6 : i32
    %c2_i32_119 = arith.constant 2 : i32
    %268 = arith.muli %c6_i32, %c2_i32_119 : i32
    %269 = tpu.assume_multiple %268, 2 : i32
    %c0_i32_120 = arith.constant 0 : i32
    %270 = vector.broadcast %c0_i32_120 : i32 to vector<2x32xi32>
    %271 = arith.cmpi slt, %240, %270 : vector<2x32xi32>
    %c-1_i32_121 = arith.constant -1 : i32
    %c1_i32_122 = arith.constant 1 : i32
    %272 = vector.broadcast %c-1_i32_121 : i32 to vector<2x32xi32>
    %273 = vector.broadcast %c1_i32_122 : i32 to vector<2x32xi32>
    %274 = arith.select %271, %272, %273 : vector<2x32xi1>, vector<2x32xi32>
    %275 = math.absi %240 : vector<2x32xi32>
    %c3072_i32_123 = arith.constant 3072 : i32
    %276 = vector.broadcast %c3072_i32_123 : i32 to vector<2x32xi32>
    %277 = arith.muli %275, %276 : vector<2x32xi32>
    %c12_i32_124 = arith.constant 12 : i32
    %278 = vector.broadcast %c12_i32_124 : i32 to vector<2x32xi32>
    %279 = arith.shrui %277, %278 : vector<2x32xi32>
    %280 = arith.muli %274, %279 : vector<2x32xi32>
    %281 = arith.index_cast %269 : i32 to index
    %c0_125 = arith.constant 0 : index
    %282 = vector.load %arg4[%281, %c0_125] : memref<32x32xi32, #tpu.memory_space<vmem>>, vector<2x32xi32>
    %283 = arith.addi %280, %282 : vector<2x32xi32>
    %c0_i32_126 = arith.constant 0 : i32
    %284 = vector.broadcast %c0_i32_126 : i32 to vector<2x32xi32>
    %285 = arith.cmpi eq, %264, %284 : vector<2x32xi32>
    %c0_i32_127 = arith.constant 0 : i32
    %286 = vector.broadcast %c0_i32_127 : i32 to vector<2x32xi32>
    %287 = arith.cmpi slt, %263, %286 : vector<2x32xi32>
    %c-1_i32_128 = arith.constant -1 : i32
    %c1_i32_129 = arith.constant 1 : i32
    %288 = vector.broadcast %c-1_i32_128 : i32 to vector<2x32xi32>
    %289 = vector.broadcast %c1_i32_129 : i32 to vector<2x32xi32>
    %290 = arith.select %287, %288, %289 : vector<2x32xi1>, vector<2x32xi32>
    %291 = math.absi %263 : vector<2x32xi32>
    %c3968_i32_130 = arith.constant 3968 : i32
    %292 = vector.broadcast %c3968_i32_130 : i32 to vector<2x32xi32>
    %293 = arith.muli %291, %292 : vector<2x32xi32>
    %c12_i32_131 = arith.constant 12 : i32
    %294 = vector.broadcast %c12_i32_131 : i32 to vector<2x32xi32>
    %295 = arith.shrui %293, %294 : vector<2x32xi32>
    %296 = arith.muli %290, %295 : vector<2x32xi32>
    %297 = arith.addi %296, %283 : vector<2x32xi32>
    %298 = arith.select %285, %297, %263 : vector<2x32xi1>, vector<2x32xi32>
    %c5120_i32_132 = arith.constant 5120 : i32
    %299 = vector.broadcast %c5120_i32_132 : i32 to vector<2x32xi32>
    %300 = arith.cmpi sge, %298, %299 : vector<2x32xi32>
    %301 = arith.andi %285, %300 : vector<2x32xi1>
    %cst_133 = arith.constant 1.000000e+00 : f32
    %cst_134 = arith.constant 0.000000e+00 : f32
    %302 = vector.broadcast %cst_133 : f32 to vector<2x32xf32>
    %303 = vector.broadcast %cst_134 : f32 to vector<2x32xf32>
    %304 = arith.select %301, %302, %303 : vector<2x32xi1>, vector<2x32xf32>
    %c0_i32_135 = arith.constant 0 : i32
    %305 = vector.broadcast %c0_i32_135 : i32 to vector<2x32xi32>
    %306 = arith.select %301, %305, %298 : vector<2x32xi1>, vector<2x32xi32>
    %307 = arith.extui %301 : vector<2x32xi1> to vector<2x32xi32>
    %c2_i32_136 = arith.constant 2 : i32
    %308 = arith.addi %269, %c2_i32_136 : i32
    %309 = arith.index_cast %308 : i32 to index
    %c0_137 = arith.constant 0 : index
    %310 = vector.load %arg5[%309, %c0_137] : memref<32x32xf32, #tpu.memory_space<vmem>>, vector<2x32xf32>
    tpu.vector_store %arg5[%309, %c0_137], %304 {strides = array<i32>} : memref<32x32xf32, #tpu.memory_space<vmem>>, vector<2x32xf32>,
    %c7_i32 = arith.constant 7 : i32
    %c2_i32_138 = arith.constant 2 : i32
    %311 = arith.muli %c7_i32, %c2_i32_138 : i32
    %312 = tpu.assume_multiple %311, 2 : i32
    %c0_i32_139 = arith.constant 0 : i32
    %313 = vector.broadcast %c0_i32_139 : i32 to vector<2x32xi32>
    %314 = arith.cmpi slt, %283, %313 : vector<2x32xi32>
    %c-1_i32_140 = arith.constant -1 : i32
    %c1_i32_141 = arith.constant 1 : i32
    %315 = vector.broadcast %c-1_i32_140 : i32 to vector<2x32xi32>
    %316 = vector.broadcast %c1_i32_141 : i32 to vector<2x32xi32>
    %317 = arith.select %314, %315, %316 : vector<2x32xi1>, vector<2x32xi32>
    %318 = math.absi %283 : vector<2x32xi32>
    %c3072_i32_142 = arith.constant 3072 : i32
    %319 = vector.broadcast %c3072_i32_142 : i32 to vector<2x32xi32>
    %320 = arith.muli %318, %319 : vector<2x32xi32>
    %c12_i32_143 = arith.constant 12 : i32
    %321 = vector.broadcast %c12_i32_143 : i32 to vector<2x32xi32>
    %322 = arith.shrui %320, %321 : vector<2x32xi32>
    %323 = arith.muli %317, %322 : vector<2x32xi32>
    %324 = arith.index_cast %312 : i32 to index
    %c0_144 = arith.constant 0 : index
    %325 = vector.load %arg4[%324, %c0_144] : memref<32x32xi32, #tpu.memory_space<vmem>>, vector<2x32xi32>
    %326 = arith.addi %323, %325 : vector<2x32xi32>
    %c0_i32_145 = arith.constant 0 : i32
    %327 = vector.broadcast %c0_i32_145 : i32 to vector<2x32xi32>
    %328 = arith.cmpi eq, %307, %327 : vector<2x32xi32>
    %c0_i32_146 = arith.constant 0 : i32
    %329 = vector.broadcast %c0_i32_146 : i32 to vector<2x32xi32>
    %330 = arith.cmpi slt, %306, %329 : vector<2x32xi32>
    %c-1_i32_147 = arith.constant -1 : i32
    %c1_i32_148 = arith.constant 1 : i32
    %331 = vector.broadcast %c-1_i32_147 : i32 to vector<2x32xi32>
    %332 = vector.broadcast %c1_i32_148 : i32 to vector<2x32xi32>
    %333 = arith.select %330, %331, %332 : vector<2x32xi1>, vector<2x32xi32>
    %334 = math.absi %306 : vector<2x32xi32>
    %c3968_i32_149 = arith.constant 3968 : i32
    %335 = vector.broadcast %c3968_i32_149 : i32 to vector<2x32xi32>
    %336 = arith.muli %334, %335 : vector<2x32xi32>
    %c12_i32_150 = arith.constant 12 : i32
    %337 = vector.broadcast %c12_i32_150 : i32 to vector<2x32xi32>
    %338 = arith.shrui %336, %337 : vector<2x32xi32>
    %339 = arith.muli %333, %338 : vector<2x32xi32>
    %340 = arith.addi %339, %326 : vector<2x32xi32>
    %341 = arith.select %328, %340, %306 : vector<2x32xi1>, vector<2x32xi32>
    %c5120_i32_151 = arith.constant 5120 : i32
    %342 = vector.broadcast %c5120_i32_151 : i32 to vector<2x32xi32>
    %343 = arith.cmpi sge, %341, %342 : vector<2x32xi32>
    %344 = arith.andi %328, %343 : vector<2x32xi1>
    %cst_152 = arith.constant 1.000000e+00 : f32
    %cst_153 = arith.constant 0.000000e+00 : f32
    %345 = vector.broadcast %cst_152 : f32 to vector<2x32xf32>
    %346 = vector.broadcast %cst_153 : f32 to vector<2x32xf32>
    %347 = arith.select %344, %345, %346 : vector<2x32xi1>, vector<2x32xf32>
    %c0_i32_154 = arith.constant 0 : i32
    %348 = vector.broadcast %c0_i32_154 : i32 to vector<2x32xi32>
    %349 = arith.select %344, %348, %341 : vector<2x32xi1>, vector<2x32xi32>
    %350 = arith.extui %344 : vector<2x32xi1> to vector<2x32xi32>
    %c2_i32_155 = arith.constant 2 : i32
    %351 = arith.addi %312, %c2_i32_155 : i32
    %352 = arith.index_cast %351 : i32 to index
    %c0_156 = arith.constant 0 : index
    %353 = vector.load %arg5[%352, %c0_156] : memref<32x32xf32, #tpu.memory_space<vmem>>, vector<2x32xf32>
    tpu.vector_store %arg5[%352, %c0_156], %347 {strides = array<i32>} : memref<32x32xf32, #tpu.memory_space<vmem>>, vector<2x32xf32>,
    %c8_i32 = arith.constant 8 : i32
    %c2_i32_157 = arith.constant 2 : i32
    %354 = arith.muli %c8_i32, %c2_i32_157 : i32
    %355 = tpu.assume_multiple %354, 2 : i32
    %c0_i32_158 = arith.constant 0 : i32
    %356 = vector.broadcast %c0_i32_158 : i32 to vector<2x32xi32>
    %357 = arith.cmpi slt, %326, %356 : vector<2x32xi32>
    %c-1_i32_159 = arith.constant -1 : i32
    %c1_i32_160 = arith.constant 1 : i32
    %358 = vector.broadcast %c-1_i32_159 : i32 to vector<2x32xi32>
    %359 = vector.broadcast %c1_i32_160 : i32 to vector<2x32xi32>
    %360 = arith.select %357, %358, %359 : vector<2x32xi1>, vector<2x32xi32>
    %361 = math.absi %326 : vector<2x32xi32>
    %c3072_i32_161 = arith.constant 3072 : i32
    %362 = vector.broadcast %c3072_i32_161 : i32 to vector<2x32xi32>
    %363 = arith.muli %361, %362 : vector<2x32xi32>
    %c12_i32_162 = arith.constant 12 : i32
    %364 = vector.broadcast %c12_i32_162 : i32 to vector<2x32xi32>
    %365 = arith.shrui %363, %364 : vector<2x32xi32>
    %366 = arith.muli %360, %365 : vector<2x32xi32>
    %367 = arith.index_cast %355 : i32 to index
    %c0_163 = arith.constant 0 : index
    %368 = vector.load %arg4[%367, %c0_163] : memref<32x32xi32, #tpu.memory_space<vmem>>, vector<2x32xi32>
    %369 = arith.addi %366, %368 : vector<2x32xi32>
    %c0_i32_164 = arith.constant 0 : i32
    %370 = vector.broadcast %c0_i32_164 : i32 to vector<2x32xi32>
    %371 = arith.cmpi eq, %350, %370 : vector<2x32xi32>
    %c0_i32_165 = arith.constant 0 : i32
    %372 = vector.broadcast %c0_i32_165 : i32 to vector<2x32xi32>
    %373 = arith.cmpi slt, %349, %372 : vector<2x32xi32>
    %c-1_i32_166 = arith.constant -1 : i32
    %c1_i32_167 = arith.constant 1 : i32
    %374 = vector.broadcast %c-1_i32_166 : i32 to vector<2x32xi32>
    %375 = vector.broadcast %c1_i32_167 : i32 to vector<2x32xi32>
    %376 = arith.select %373, %374, %375 : vector<2x32xi1>, vector<2x32xi32>
    %377 = math.absi %349 : vector<2x32xi32>
    %c3968_i32_168 = arith.constant 3968 : i32
    %378 = vector.broadcast %c3968_i32_168 : i32 to vector<2x32xi32>
    %379 = arith.muli %377, %378 : vector<2x32xi32>
    %c12_i32_169 = arith.constant 12 : i32
    %380 = vector.broadcast %c12_i32_169 : i32 to vector<2x32xi32>
    %381 = arith.shrui %379, %380 : vector<2x32xi32>
    %382 = arith.muli %376, %381 : vector<2x32xi32>
    %383 = arith.addi %382, %369 : vector<2x32xi32>
    %384 = arith.select %371, %383, %349 : vector<2x32xi1>, vector<2x32xi32>
    %c5120_i32_170 = arith.constant 5120 : i32
    %385 = vector.broadcast %c5120_i32_170 : i32 to vector<2x32xi32>
    %386 = arith.cmpi sge, %384, %385 : vector<2x32xi32>
    %387 = arith.andi %371, %386 : vector<2x32xi1>
    %cst_171 = arith.constant 1.000000e+00 : f32
    %cst_172 = arith.constant 0.000000e+00 : f32
    %388 = vector.broadcast %cst_171 : f32 to vector<2x32xf32>
    %389 = vector.broadcast %cst_172 : f32 to vector<2x32xf32>
    %390 = arith.select %387, %388, %389 : vector<2x32xi1>, vector<2x32xf32>
    %c0_i32_173 = arith.constant 0 : i32
    %391 = vector.broadcast %c0_i32_173 : i32 to vector<2x32xi32>
    %392 = arith.select %387, %391, %384 : vector<2x32xi1>, vector<2x32xi32>
    %393 = arith.extui %387 : vector<2x32xi1> to vector<2x32xi32>
    %c2_i32_174 = arith.constant 2 : i32
    %394 = arith.addi %355, %c2_i32_174 : i32
    %395 = arith.index_cast %394 : i32 to index
    %c0_175 = arith.constant 0 : index
    %396 = vector.load %arg5[%395, %c0_175] : memref<32x32xf32, #tpu.memory_space<vmem>>, vector<2x32xf32>
    tpu.vector_store %arg5[%395, %c0_175], %390 {strides = array<i32>} : memref<32x32xf32, #tpu.memory_space<vmem>>, vector<2x32xf32>,
    %c9_i32 = arith.constant 9 : i32
    %c2_i32_176 = arith.constant 2 : i32
    %397 = arith.muli %c9_i32, %c2_i32_176 : i32
    %398 = tpu.assume_multiple %397, 2 : i32
    %c0_i32_177 = arith.constant 0 : i32
    %399 = vector.broadcast %c0_i32_177 : i32 to vector<2x32xi32>
    %400 = arith.cmpi slt, %369, %399 : vector<2x32xi32>
    %c-1_i32_178 = arith.constant -1 : i32
    %c1_i32_179 = arith.constant 1 : i32
    %401 = vector.broadcast %c-1_i32_178 : i32 to vector<2x32xi32>
    %402 = vector.broadcast %c1_i32_179 : i32 to vector<2x32xi32>
    %403 = arith.select %400, %401, %402 : vector<2x32xi1>, vector<2x32xi32>
    %404 = math.absi %369 : vector<2x32xi32>
    %c3072_i32_180 = arith.constant 3072 : i32
    %405 = vector.broadcast %c3072_i32_180 : i32 to vector<2x32xi32>
    %406 = arith.muli %404, %405 : vector<2x32xi32>
    %c12_i32_181 = arith.constant 12 : i32
    %407 = vector.broadcast %c12_i32_181 : i32 to vector<2x32xi32>
    %408 = arith.shrui %406, %407 : vector<2x32xi32>
    %409 = arith.muli %403, %408 : vector<2x32xi32>
    %410 = arith.index_cast %398 : i32 to index
    %c0_182 = arith.constant 0 : index
    %411 = vector.load %arg4[%410, %c0_182] : memref<32x32xi32, #tpu.memory_space<vmem>>, vector<2x32xi32>
    %412 = arith.addi %409, %411 : vector<2x32xi32>
    %c0_i32_183 = arith.constant 0 : i32
    %413 = vector.broadcast %c0_i32_183 : i32 to vector<2x32xi32>
    %414 = arith.cmpi eq, %393, %413 : vector<2x32xi32>
    %c0_i32_184 = arith.constant 0 : i32
    %415 = vector.broadcast %c0_i32_184 : i32 to vector<2x32xi32>
    %416 = arith.cmpi slt, %392, %415 : vector<2x32xi32>
    %c-1_i32_185 = arith.constant -1 : i32
    %c1_i32_186 = arith.constant 1 : i32
    %417 = vector.broadcast %c-1_i32_185 : i32 to vector<2x32xi32>
    %418 = vector.broadcast %c1_i32_186 : i32 to vector<2x32xi32>
    %419 = arith.select %416, %417, %418 : vector<2x32xi1>, vector<2x32xi32>
    %420 = math.absi %392 : vector<2x32xi32>
    %c3968_i32_187 = arith.constant 3968 : i32
    %421 = vector.broadcast %c3968_i32_187 : i32 to vector<2x32xi32>
    %422 = arith.muli %420, %421 : vector<2x32xi32>
    %c12_i32_188 = arith.constant 12 : i32
    %423 = vector.broadcast %c12_i32_188 : i32 to vector<2x32xi32>
    %424 = arith.shrui %422, %423 : vector<2x32xi32>
    %425 = arith.muli %419, %424 : vector<2x32xi32>
    %426 = arith.addi %425, %412 : vector<2x32xi32>
    %427 = arith.select %414, %426, %392 : vector<2x32xi1>, vector<2x32xi32>
    %c5120_i32_189 = arith.constant 5120 : i32
    %428 = vector.broadcast %c5120_i32_189 : i32 to vector<2x32xi32>
    %429 = arith.cmpi sge, %427, %428 : vector<2x32xi32>
    %430 = arith.andi %414, %429 : vector<2x32xi1>
    %cst_190 = arith.constant 1.000000e+00 : f32
    %cst_191 = arith.constant 0.000000e+00 : f32
    %431 = vector.broadcast %cst_190 : f32 to vector<2x32xf32>
    %432 = vector.broadcast %cst_191 : f32 to vector<2x32xf32>
    %433 = arith.select %430, %431, %432 : vector<2x32xi1>, vector<2x32xf32>
    %c0_i32_192 = arith.constant 0 : i32
    %434 = vector.broadcast %c0_i32_192 : i32 to vector<2x32xi32>
    %435 = arith.select %430, %434, %427 : vector<2x32xi1>, vector<2x32xi32>
    %436 = arith.extui %430 : vector<2x32xi1> to vector<2x32xi32>
    %c2_i32_193 = arith.constant 2 : i32
    %437 = arith.addi %398, %c2_i32_193 : i32
    %438 = arith.index_cast %437 : i32 to index
    %c0_194 = arith.constant 0 : index
    %439 = vector.load %arg5[%438, %c0_194] : memref<32x32xf32, #tpu.memory_space<vmem>>, vector<2x32xf32>
    tpu.vector_store %arg5[%438, %c0_194], %433 {strides = array<i32>} : memref<32x32xf32, #tpu.memory_space<vmem>>, vector<2x32xf32>,
    %c10_i32 = arith.constant 10 : i32
    %c2_i32_195 = arith.constant 2 : i32
    %440 = arith.muli %c10_i32, %c2_i32_195 : i32
    %441 = tpu.assume_multiple %440, 2 : i32
    %c0_i32_196 = arith.constant 0 : i32
    %442 = vector.broadcast %c0_i32_196 : i32 to vector<2x32xi32>
    %443 = arith.cmpi slt, %412, %442 : vector<2x32xi32>
    %c-1_i32_197 = arith.constant -1 : i32
    %c1_i32_198 = arith.constant 1 : i32
    %444 = vector.broadcast %c-1_i32_197 : i32 to vector<2x32xi32>
    %445 = vector.broadcast %c1_i32_198 : i32 to vector<2x32xi32>
    %446 = arith.select %443, %444, %445 : vector<2x32xi1>, vector<2x32xi32>
    %447 = math.absi %412 : vector<2x32xi32>
    %c3072_i32_199 = arith.constant 3072 : i32
    %448 = vector.broadcast %c3072_i32_199 : i32 to vector<2x32xi32>
    %449 = arith.muli %447, %448 : vector<2x32xi32>
    %c12_i32_200 = arith.constant 12 : i32
    %450 = vector.broadcast %c12_i32_200 : i32 to vector<2x32xi32>
    %451 = arith.shrui %449, %450 : vector<2x32xi32>
    %452 = arith.muli %446, %451 : vector<2x32xi32>
    %453 = arith.index_cast %441 : i32 to index
    %c0_201 = arith.constant 0 : index
    %454 = vector.load %arg4[%453, %c0_201] : memref<32x32xi32, #tpu.memory_space<vmem>>, vector<2x32xi32>
    %455 = arith.addi %452, %454 : vector<2x32xi32>
    %c0_i32_202 = arith.constant 0 : i32
    %456 = vector.broadcast %c0_i32_202 : i32 to vector<2x32xi32>
    %457 = arith.cmpi eq, %436, %456 : vector<2x32xi32>
    %c0_i32_203 = arith.constant 0 : i32
    %458 = vector.broadcast %c0_i32_203 : i32 to vector<2x32xi32>
    %459 = arith.cmpi slt, %435, %458 : vector<2x32xi32>
    %c-1_i32_204 = arith.constant -1 : i32
    %c1_i32_205 = arith.constant 1 : i32
    %460 = vector.broadcast %c-1_i32_204 : i32 to vector<2x32xi32>
    %461 = vector.broadcast %c1_i32_205 : i32 to vector<2x32xi32>
    %462 = arith.select %459, %460, %461 : vector<2x32xi1>, vector<2x32xi32>
    %463 = math.absi %435 : vector<2x32xi32>
    %c3968_i32_206 = arith.constant 3968 : i32
    %464 = vector.broadcast %c3968_i32_206 : i32 to vector<2x32xi32>
    %465 = arith.muli %463, %464 : vector<2x32xi32>
    %c12_i32_207 = arith.constant 12 : i32
    %466 = vector.broadcast %c12_i32_207 : i32 to vector<2x32xi32>
    %467 = arith.shrui %465, %466 : vector<2x32xi32>
    %468 = arith.muli %462, %467 : vector<2x32xi32>
    %469 = arith.addi %468, %455 : vector<2x32xi32>
    %470 = arith.select %457, %469, %435 : vector<2x32xi1>, vector<2x32xi32>
    %c5120_i32_208 = arith.constant 5120 : i32
    %471 = vector.broadcast %c5120_i32_208 : i32 to vector<2x32xi32>
    %472 = arith.cmpi sge, %470, %471 : vector<2x32xi32>
    %473 = arith.andi %457, %472 : vector<2x32xi1>
    %cst_209 = arith.constant 1.000000e+00 : f32
    %cst_210 = arith.constant 0.000000e+00 : f32
    %474 = vector.broadcast %cst_209 : f32 to vector<2x32xf32>
    %475 = vector.broadcast %cst_210 : f32 to vector<2x32xf32>
    %476 = arith.select %473, %474, %475 : vector<2x32xi1>, vector<2x32xf32>
    %c0_i32_211 = arith.constant 0 : i32
    %477 = vector.broadcast %c0_i32_211 : i32 to vector<2x32xi32>
    %478 = arith.select %473, %477, %470 : vector<2x32xi1>, vector<2x32xi32>
    %479 = arith.extui %473 : vector<2x32xi1> to vector<2x32xi32>
    %c2_i32_212 = arith.constant 2 : i32
    %480 = arith.addi %441, %c2_i32_212 : i32
    %481 = arith.index_cast %480 : i32 to index
    %c0_213 = arith.constant 0 : index
    %482 = vector.load %arg5[%481, %c0_213] : memref<32x32xf32, #tpu.memory_space<vmem>>, vector<2x32xf32>
    tpu.vector_store %arg5[%481, %c0_213], %476 {strides = array<i32>} : memref<32x32xf32, #tpu.memory_space<vmem>>, vector<2x32xf32>,
    %c11_i32 = arith.constant 11 : i32
    %c2_i32_214 = arith.constant 2 : i32
    %483 = arith.muli %c11_i32, %c2_i32_214 : i32
    %484 = tpu.assume_multiple %483, 2 : i32
    %c0_i32_215 = arith.constant 0 : i32
    %485 = vector.broadcast %c0_i32_215 : i32 to vector<2x32xi32>
    %486 = arith.cmpi slt, %455, %485 : vector<2x32xi32>
    %c-1_i32_216 = arith.constant -1 : i32
    %c1_i32_217 = arith.constant 1 : i32
    %487 = vector.broadcast %c-1_i32_216 : i32 to vector<2x32xi32>
    %488 = vector.broadcast %c1_i32_217 : i32 to vector<2x32xi32>
    %489 = arith.select %486, %487, %488 : vector<2x32xi1>, vector<2x32xi32>
    %490 = math.absi %455 : vector<2x32xi32>
    %c3072_i32_218 = arith.constant 3072 : i32
    %491 = vector.broadcast %c3072_i32_218 : i32 to vector<2x32xi32>
    %492 = arith.muli %490, %491 : vector<2x32xi32>
    %c12_i32_219 = arith.constant 12 : i32
    %493 = vector.broadcast %c12_i32_219 : i32 to vector<2x32xi32>
    %494 = arith.shrui %492, %493 : vector<2x32xi32>
    %495 = arith.muli %489, %494 : vector<2x32xi32>
    %496 = arith.index_cast %484 : i32 to index
    %c0_220 = arith.constant 0 : index
    %497 = vector.load %arg4[%496, %c0_220] : memref<32x32xi32, #tpu.memory_space<vmem>>, vector<2x32xi32>
    %498 = arith.addi %495, %497 : vector<2x32xi32>
    %c0_i32_221 = arith.constant 0 : i32
    %499 = vector.broadcast %c0_i32_221 : i32 to vector<2x32xi32>
    %500 = arith.cmpi eq, %479, %499 : vector<2x32xi32>
    %c0_i32_222 = arith.constant 0 : i32
    %501 = vector.broadcast %c0_i32_222 : i32 to vector<2x32xi32>
    %502 = arith.cmpi slt, %478, %501 : vector<2x32xi32>
    %c-1_i32_223 = arith.constant -1 : i32
    %c1_i32_224 = arith.constant 1 : i32
    %503 = vector.broadcast %c-1_i32_223 : i32 to vector<2x32xi32>
    %504 = vector.broadcast %c1_i32_224 : i32 to vector<2x32xi32>
    %505 = arith.select %502, %503, %504 : vector<2x32xi1>, vector<2x32xi32>
    %506 = math.absi %478 : vector<2x32xi32>
    %c3968_i32_225 = arith.constant 3968 : i32
    %507 = vector.broadcast %c3968_i32_225 : i32 to vector<2x32xi32>
    %508 = arith.muli %506, %507 : vector<2x32xi32>
    %c12_i32_226 = arith.constant 12 : i32
    %509 = vector.broadcast %c12_i32_226 : i32 to vector<2x32xi32>
    %510 = arith.shrui %508, %509 : vector<2x32xi32>
    %511 = arith.muli %505, %510 : vector<2x32xi32>
    %512 = arith.addi %511, %498 : vector<2x32xi32>
    %513 = arith.select %500, %512, %478 : vector<2x32xi1>, vector<2x32xi32>
    %c5120_i32_227 = arith.constant 5120 : i32
    %514 = vector.broadcast %c5120_i32_227 : i32 to vector<2x32xi32>
    %515 = arith.cmpi sge, %513, %514 : vector<2x32xi32>
    %516 = arith.andi %500, %515 : vector<2x32xi1>
    %cst_228 = arith.constant 1.000000e+00 : f32
    %cst_229 = arith.constant 0.000000e+00 : f32
    %517 = vector.broadcast %cst_228 : f32 to vector<2x32xf32>
    %518 = vector.broadcast %cst_229 : f32 to vector<2x32xf32>
    %519 = arith.select %516, %517, %518 : vector<2x32xi1>, vector<2x32xf32>
    %c0_i32_230 = arith.constant 0 : i32
    %520 = vector.broadcast %c0_i32_230 : i32 to vector<2x32xi32>
    %521 = arith.select %516, %520, %513 : vector<2x32xi1>, vector<2x32xi32>
    %522 = arith.extui %516 : vector<2x32xi1> to vector<2x32xi32>
    %c2_i32_231 = arith.constant 2 : i32
    %523 = arith.addi %484, %c2_i32_231 : i32
    %524 = arith.index_cast %523 : i32 to index
    %c0_232 = arith.constant 0 : index
    %525 = vector.load %arg5[%524, %c0_232] : memref<32x32xf32, #tpu.memory_space<vmem>>, vector<2x32xf32>
    tpu.vector_store %arg5[%524, %c0_232], %519 {strides = array<i32>} : memref<32x32xf32, #tpu.memory_space<vmem>>, vector<2x32xf32>,
    %c12_i32_233 = arith.constant 12 : i32
    %c2_i32_234 = arith.constant 2 : i32
    %526 = arith.muli %c12_i32_233, %c2_i32_234 : i32
    %527 = tpu.assume_multiple %526, 2 : i32
    %c0_i32_235 = arith.constant 0 : i32
    %528 = vector.broadcast %c0_i32_235 : i32 to vector<2x32xi32>
    %529 = arith.cmpi slt, %498, %528 : vector<2x32xi32>
    %c-1_i32_236 = arith.constant -1 : i32
    %c1_i32_237 = arith.constant 1 : i32
    %530 = vector.broadcast %c-1_i32_236 : i32 to vector<2x32xi32>
    %531 = vector.broadcast %c1_i32_237 : i32 to vector<2x32xi32>
    %532 = arith.select %529, %530, %531 : vector<2x32xi1>, vector<2x32xi32>
    %533 = math.absi %498 : vector<2x32xi32>
    %c3072_i32_238 = arith.constant 3072 : i32
    %534 = vector.broadcast %c3072_i32_238 : i32 to vector<2x32xi32>
    %535 = arith.muli %533, %534 : vector<2x32xi32>
    %c12_i32_239 = arith.constant 12 : i32
    %536 = vector.broadcast %c12_i32_239 : i32 to vector<2x32xi32>
    %537 = arith.shrui %535, %536 : vector<2x32xi32>
    %538 = arith.muli %532, %537 : vector<2x32xi32>
    %539 = arith.index_cast %527 : i32 to index
    %c0_240 = arith.constant 0 : index
    %540 = vector.load %arg4[%539, %c0_240] : memref<32x32xi32, #tpu.memory_space<vmem>>, vector<2x32xi32>
    %541 = arith.addi %538, %540 : vector<2x32xi32>
    %c0_i32_241 = arith.constant 0 : i32
    %542 = vector.broadcast %c0_i32_241 : i32 to vector<2x32xi32>
    %543 = arith.cmpi eq, %522, %542 : vector<2x32xi32>
    %c0_i32_242 = arith.constant 0 : i32
    %544 = vector.broadcast %c0_i32_242 : i32 to vector<2x32xi32>
    %545 = arith.cmpi slt, %521, %544 : vector<2x32xi32>
    %c-1_i32_243 = arith.constant -1 : i32
    %c1_i32_244 = arith.constant 1 : i32
    %546 = vector.broadcast %c-1_i32_243 : i32 to vector<2x32xi32>
    %547 = vector.broadcast %c1_i32_244 : i32 to vector<2x32xi32>
    %548 = arith.select %545, %546, %547 : vector<2x32xi1>, vector<2x32xi32>
    %549 = math.absi %521 : vector<2x32xi32>
    %c3968_i32_245 = arith.constant 3968 : i32
    %550 = vector.broadcast %c3968_i32_245 : i32 to vector<2x32xi32>
    %551 = arith.muli %549, %550 : vector<2x32xi32>
    %c12_i32_246 = arith.constant 12 : i32
    %552 = vector.broadcast %c12_i32_246 : i32 to vector<2x32xi32>
    %553 = arith.shrui %551, %552 : vector<2x32xi32>
    %554 = arith.muli %548, %553 : vector<2x32xi32>
    %555 = arith.addi %554, %541 : vector<2x32xi32>
    %556 = arith.select %543, %555, %521 : vector<2x32xi1>, vector<2x32xi32>
    %c5120_i32_247 = arith.constant 5120 : i32
    %557 = vector.broadcast %c5120_i32_247 : i32 to vector<2x32xi32>
    %558 = arith.cmpi sge, %556, %557 : vector<2x32xi32>
    %559 = arith.andi %543, %558 : vector<2x32xi1>
    %cst_248 = arith.constant 1.000000e+00 : f32
    %cst_249 = arith.constant 0.000000e+00 : f32
    %560 = vector.broadcast %cst_248 : f32 to vector<2x32xf32>
    %561 = vector.broadcast %cst_249 : f32 to vector<2x32xf32>
    %562 = arith.select %559, %560, %561 : vector<2x32xi1>, vector<2x32xf32>
    %c0_i32_250 = arith.constant 0 : i32
    %563 = vector.broadcast %c0_i32_250 : i32 to vector<2x32xi32>
    %564 = arith.select %559, %563, %556 : vector<2x32xi1>, vector<2x32xi32>
    %565 = arith.extui %559 : vector<2x32xi1> to vector<2x32xi32>
    %c2_i32_251 = arith.constant 2 : i32
    %566 = arith.addi %527, %c2_i32_251 : i32
    %567 = arith.index_cast %566 : i32 to index
    %c0_252 = arith.constant 0 : index
    %568 = vector.load %arg5[%567, %c0_252] : memref<32x32xf32, #tpu.memory_space<vmem>>, vector<2x32xf32>
    tpu.vector_store %arg5[%567, %c0_252], %562 {strides = array<i32>} : memref<32x32xf32, #tpu.memory_space<vmem>>, vector<2x32xf32>,
    %c13_i32 = arith.constant 13 : i32
    %c2_i32_253 = arith.constant 2 : i32
    %569 = arith.muli %c13_i32, %c2_i32_253 : i32
    %570 = tpu.assume_multiple %569, 2 : i32
    %c0_i32_254 = arith.constant 0 : i32
    %571 = vector.broadcast %c0_i32_254 : i32 to vector<2x32xi32>
    %572 = arith.cmpi slt, %541, %571 : vector<2x32xi32>
    %c-1_i32_255 = arith.constant -1 : i32
    %c1_i32_256 = arith.constant 1 : i32
    %573 = vector.broadcast %c-1_i32_255 : i32 to vector<2x32xi32>
    %574 = vector.broadcast %c1_i32_256 : i32 to vector<2x32xi32>
    %575 = arith.select %572, %573, %574 : vector<2x32xi1>, vector<2x32xi32>
    %576 = math.absi %541 : vector<2x32xi32>
    %c3072_i32_257 = arith.constant 3072 : i32
    %577 = vector.broadcast %c3072_i32_257 : i32 to vector<2x32xi32>
    %578 = arith.muli %576, %577 : vector<2x32xi32>
    %c12_i32_258 = arith.constant 12 : i32
    %579 = vector.broadcast %c12_i32_258 : i32 to vector<2x32xi32>
    %580 = arith.shrui %578, %579 : vector<2x32xi32>
    %581 = arith.muli %575, %580 : vector<2x32xi32>
    %582 = arith.index_cast %570 : i32 to index
    %c0_259 = arith.constant 0 : index
    %583 = vector.load %arg4[%582, %c0_259] : memref<32x32xi32, #tpu.memory_space<vmem>>, vector<2x32xi32>
    %584 = arith.addi %581, %583 : vector<2x32xi32>
    %c0_i32_260 = arith.constant 0 : i32
    %585 = vector.broadcast %c0_i32_260 : i32 to vector<2x32xi32>
    %586 = arith.cmpi eq, %565, %585 : vector<2x32xi32>
    %c0_i32_261 = arith.constant 0 : i32
    %587 = vector.broadcast %c0_i32_261 : i32 to vector<2x32xi32>
    %588 = arith.cmpi slt, %564, %587 : vector<2x32xi32>
    %c-1_i32_262 = arith.constant -1 : i32
    %c1_i32_263 = arith.constant 1 : i32
    %589 = vector.broadcast %c-1_i32_262 : i32 to vector<2x32xi32>
    %590 = vector.broadcast %c1_i32_263 : i32 to vector<2x32xi32>
    %591 = arith.select %588, %589, %590 : vector<2x32xi1>, vector<2x32xi32>
    %592 = math.absi %564 : vector<2x32xi32>
    %c3968_i32_264 = arith.constant 3968 : i32
    %593 = vector.broadcast %c3968_i32_264 : i32 to vector<2x32xi32>
    %594 = arith.muli %592, %593 : vector<2x32xi32>
    %c12_i32_265 = arith.constant 12 : i32
    %595 = vector.broadcast %c12_i32_265 : i32 to vector<2x32xi32>
    %596 = arith.shrui %594, %595 : vector<2x32xi32>
    %597 = arith.muli %591, %596 : vector<2x32xi32>
    %598 = arith.addi %597, %584 : vector<2x32xi32>
    %599 = arith.select %586, %598, %564 : vector<2x32xi1>, vector<2x32xi32>
    %c5120_i32_266 = arith.constant 5120 : i32
    %600 = vector.broadcast %c5120_i32_266 : i32 to vector<2x32xi32>
    %601 = arith.cmpi sge, %599, %600 : vector<2x32xi32>
    %602 = arith.andi %586, %601 : vector<2x32xi1>
    %cst_267 = arith.constant 1.000000e+00 : f32
    %cst_268 = arith.constant 0.000000e+00 : f32
    %603 = vector.broadcast %cst_267 : f32 to vector<2x32xf32>
    %604 = vector.broadcast %cst_268 : f32 to vector<2x32xf32>
    %605 = arith.select %602, %603, %604 : vector<2x32xi1>, vector<2x32xf32>
    %c0_i32_269 = arith.constant 0 : i32
    %606 = vector.broadcast %c0_i32_269 : i32 to vector<2x32xi32>
    %607 = arith.select %602, %606, %599 : vector<2x32xi1>, vector<2x32xi32>
    %608 = arith.extui %602 : vector<2x32xi1> to vector<2x32xi32>
    %c2_i32_270 = arith.constant 2 : i32
    %609 = arith.addi %570, %c2_i32_270 : i32
    %610 = arith.index_cast %609 : i32 to index
    %c0_271 = arith.constant 0 : index
    %611 = vector.load %arg5[%610, %c0_271] : memref<32x32xf32, #tpu.memory_space<vmem>>, vector<2x32xf32>
    tpu.vector_store %arg5[%610, %c0_271], %605 {strides = array<i32>} : memref<32x32xf32, #tpu.memory_space<vmem>>, vector<2x32xf32>,
    %c14_i32 = arith.constant 14 : i32
    %c2_i32_272 = arith.constant 2 : i32
    %612 = arith.muli %c14_i32, %c2_i32_272 : i32
    %613 = tpu.assume_multiple %612, 2 : i32
    %c0_i32_273 = arith.constant 0 : i32
    %614 = vector.broadcast %c0_i32_273 : i32 to vector<2x32xi32>
    %615 = arith.cmpi slt, %584, %614 : vector<2x32xi32>
    %c-1_i32_274 = arith.constant -1 : i32
    %c1_i32_275 = arith.constant 1 : i32
    %616 = vector.broadcast %c-1_i32_274 : i32 to vector<2x32xi32>
    %617 = vector.broadcast %c1_i32_275 : i32 to vector<2x32xi32>
    %618 = arith.select %615, %616, %617 : vector<2x32xi1>, vector<2x32xi32>
    %619 = math.absi %584 : vector<2x32xi32>
    %c3072_i32_276 = arith.constant 3072 : i32
    %620 = vector.broadcast %c3072_i32_276 : i32 to vector<2x32xi32>
    %621 = arith.muli %619, %620 : vector<2x32xi32>
    %c12_i32_277 = arith.constant 12 : i32
    %622 = vector.broadcast %c12_i32_277 : i32 to vector<2x32xi32>
    %623 = arith.shrui %621, %622 : vector<2x32xi32>
    %624 = arith.muli %618, %623 : vector<2x32xi32>
    %625 = arith.index_cast %613 : i32 to index
    %c0_278 = arith.constant 0 : index
    %626 = vector.load %arg4[%625, %c0_278] : memref<32x32xi32, #tpu.memory_space<vmem>>, vector<2x32xi32>
    %627 = arith.addi %624, %626 : vector<2x32xi32>
    %c0_i32_279 = arith.constant 0 : i32
    %628 = vector.broadcast %c0_i32_279 : i32 to vector<2x32xi32>
    %629 = arith.cmpi eq, %608, %628 : vector<2x32xi32>
    %c0_i32_280 = arith.constant 0 : i32
    %630 = vector.broadcast %c0_i32_280 : i32 to vector<2x32xi32>
    %631 = arith.cmpi slt, %607, %630 : vector<2x32xi32>
    %c-1_i32_281 = arith.constant -1 : i32
    %c1_i32_282 = arith.constant 1 : i32
    %632 = vector.broadcast %c-1_i32_281 : i32 to vector<2x32xi32>
    %633 = vector.broadcast %c1_i32_282 : i32 to vector<2x32xi32>
    %634 = arith.select %631, %632, %633 : vector<2x32xi1>, vector<2x32xi32>
    %635 = math.absi %607 : vector<2x32xi32>
    %c3968_i32_283 = arith.constant 3968 : i32
    %636 = vector.broadcast %c3968_i32_283 : i32 to vector<2x32xi32>
    %637 = arith.muli %635, %636 : vector<2x32xi32>
    %c12_i32_284 = arith.constant 12 : i32
    %638 = vector.broadcast %c12_i32_284 : i32 to vector<2x32xi32>
    %639 = arith.shrui %637, %638 : vector<2x32xi32>
    %640 = arith.muli %634, %639 : vector<2x32xi32>
    %641 = arith.addi %640, %627 : vector<2x32xi32>
    %642 = arith.select %629, %641, %607 : vector<2x32xi1>, vector<2x32xi32>
    %c5120_i32_285 = arith.constant 5120 : i32
    %643 = vector.broadcast %c5120_i32_285 : i32 to vector<2x32xi32>
    %644 = arith.cmpi sge, %642, %643 : vector<2x32xi32>
    %645 = arith.andi %629, %644 : vector<2x32xi1>
    %cst_286 = arith.constant 1.000000e+00 : f32
    %cst_287 = arith.constant 0.000000e+00 : f32
    %646 = vector.broadcast %cst_286 : f32 to vector<2x32xf32>
    %647 = vector.broadcast %cst_287 : f32 to vector<2x32xf32>
    %648 = arith.select %645, %646, %647 : vector<2x32xi1>, vector<2x32xf32>
    %c0_i32_288 = arith.constant 0 : i32
    %649 = vector.broadcast %c0_i32_288 : i32 to vector<2x32xi32>
    %650 = arith.select %645, %649, %642 : vector<2x32xi1>, vector<2x32xi32>
    %651 = arith.extui %645 : vector<2x32xi1> to vector<2x32xi32>
    %c2_i32_289 = arith.constant 2 : i32
    %652 = arith.addi %613, %c2_i32_289 : i32
    %653 = arith.index_cast %652 : i32 to index
    %c0_290 = arith.constant 0 : index
    %654 = vector.load %arg5[%653, %c0_290] : memref<32x32xf32, #tpu.memory_space<vmem>>, vector<2x32xf32>
    tpu.vector_store %arg5[%653, %c0_290], %648 {strides = array<i32>} : memref<32x32xf32, #tpu.memory_space<vmem>>, vector<2x32xf32>,
    %c15_i32 = arith.constant 15 : i32
    %c0_291 = arith.constant 0 : index
    %c0_292 = arith.constant 0 : index
    %655 = vector.load %arg5[%c0_291, %c0_292] : memref<32x32xf32, #tpu.memory_space<vmem>>, vector<32x32xf32>
    %c0_293 = arith.constant 0 : index
    %c0_294 = arith.constant 0 : index
    %656 = vector.load %arg2[%c0_293, %c0_294] : memref<32x8xf32, #tpu.memory_space<vmem>>, vector<32x8xf32>
    %cst_295 = arith.constant dense<0.000000e+00> : vector<32x8xf32>
    %657 = tpu.matmul %655, %656, %cst_295 {dimension_numbers = #tpu.dot_dimension_numbers<[1], [0], [0], [1], [0, 0, 1, 1], [], []>} : vector<32x32xf32>, vector<32x8xf32>, vector<32x8xf32> -> vector<32x8xf32>
    %cst_296 = arith.constant 6.400000e+01 : f32
    %658 = vector.broadcast %cst_296 : f32 to vector<32x8xf32>
    %659 = arith.mulf %658, %657 : vector<32x8xf32>
    %660 = arith.fptosi %659 : vector<32x8xf32> to vector<32x8xi32>
    %c0_297 = arith.constant 0 : index
    %c0_298 = arith.constant 0 : index
    %661 = vector.load %arg6[%c0_297, %c0_298] : memref<32x8xi32, #tpu.memory_space<vmem>>, vector<32x8xi32>
    tpu.vector_store %arg6[%c0_297, %c0_298], %660 {strides = array<i32>} : memref<32x8xi32, #tpu.memory_space<vmem>>, vector<32x8xi32>,
    %cst_299 = arith.constant 0.000000e+00 : f32
    %662 = vector.broadcast %cst_299 : f32 to vector<2x8xf32>
    %c0_300 = arith.constant 0 : index
    %c0_301 = arith.constant 0 : index
    %663 = vector.load %arg3[%c0_300, %c0_301] : memref<32x8xf32, #tpu.memory_space<vmem>>, vector<2x8xf32>
    tpu.vector_store %arg3[%c0_300, %c0_301], %662 {strides = array<i32>} : memref<32x8xf32, #tpu.memory_space<vmem>>, vector<2x8xf32>,
    %c0_i32_302 = arith.constant 0 : i32
    %664 = vector.broadcast %c0_i32_302 : i32 to vector<2x8xi32>
    %c0_i32_303 = arith.constant 0 : i32
    %c2_i32_304 = arith.constant 2 : i32
    %665 = arith.muli %c0_i32_303, %c2_i32_304 : i32
    %666 = tpu.assume_multiple %665, 2 : i32
    %c0_i32_305 = arith.constant 0 : i32
    %667 = vector.broadcast %c0_i32_305 : i32 to vector<2x8xi32>
    %668 = arith.cmpi slt, %664, %667 : vector<2x8xi32>
    %c-1_i32_306 = arith.constant -1 : i32
    %c1_i32_307 = arith.constant 1 : i32
    %669 = vector.broadcast %c-1_i32_306 : i32 to vector<2x8xi32>
    %670 = vector.broadcast %c1_i32_307 : i32 to vector<2x8xi32>
    %671 = arith.select %668, %669, %670 : vector<2x8xi1>, vector<2x8xi32>
    %672 = math.absi %664 : vector<2x8xi32>
    %c3072_i32_308 = arith.constant 3072 : i32
    %673 = vector.broadcast %c3072_i32_308 : i32 to vector<2x8xi32>
    %674 = arith.muli %672, %673 : vector<2x8xi32>
    %c12_i32_309 = arith.constant 12 : i32
    %675 = vector.broadcast %c12_i32_309 : i32 to vector<2x8xi32>
    %676 = arith.shrui %674, %675 : vector<2x8xi32>
    %677 = arith.muli %671, %676 : vector<2x8xi32>
    %678 = arith.index_cast %666 : i32 to index
    %c0_310 = arith.constant 0 : index
    %679 = vector.load %arg6[%678, %c0_310] : memref<32x8xi32, #tpu.memory_space<vmem>>, vector<2x8xi32>
    %680 = arith.addi %677, %679 : vector<2x8xi32>
    %c0_i32_311 = arith.constant 0 : i32
    %681 = vector.broadcast %c0_i32_311 : i32 to vector<2x8xi32>
    %682 = arith.cmpi eq, %664, %681 : vector<2x8xi32>
    %c0_i32_312 = arith.constant 0 : i32
    %683 = vector.broadcast %c0_i32_312 : i32 to vector<2x8xi32>
    %684 = arith.cmpi slt, %664, %683 : vector<2x8xi32>
    %c-1_i32_313 = arith.constant -1 : i32
    %c1_i32_314 = arith.constant 1 : i32
    %685 = vector.broadcast %c-1_i32_313 : i32 to vector<2x8xi32>
    %686 = vector.broadcast %c1_i32_314 : i32 to vector<2x8xi32>
    %687 = arith.select %684, %685, %686 : vector<2x8xi1>, vector<2x8xi32>
    %688 = math.absi %664 : vector<2x8xi32>
    %c3968_i32_315 = arith.constant 3968 : i32
    %689 = vector.broadcast %c3968_i32_315 : i32 to vector<2x8xi32>
    %690 = arith.muli %688, %689 : vector<2x8xi32>
    %c12_i32_316 = arith.constant 12 : i32
    %691 = vector.broadcast %c12_i32_316 : i32 to vector<2x8xi32>
    %692 = arith.shrui %690, %691 : vector<2x8xi32>
    %693 = arith.muli %687, %692 : vector<2x8xi32>
    %694 = arith.addi %693, %680 : vector<2x8xi32>
    %695 = arith.select %682, %694, %664 : vector<2x8xi1>, vector<2x8xi32>
    %c5120_i32_317 = arith.constant 5120 : i32
    %696 = vector.broadcast %c5120_i32_317 : i32 to vector<2x8xi32>
    %697 = arith.cmpi sge, %695, %696 : vector<2x8xi32>
    %698 = arith.andi %682, %697 : vector<2x8xi1>
    %cst_318 = arith.constant 1.000000e+00 : f32
    %cst_319 = arith.constant 0.000000e+00 : f32
    %699 = vector.broadcast %cst_318 : f32 to vector<2x8xf32>
    %700 = vector.broadcast %cst_319 : f32 to vector<2x8xf32>
    %701 = arith.select %698, %699, %700 : vector<2x8xi1>, vector<2x8xf32>
    %c0_i32_320 = arith.constant 0 : i32
    %702 = vector.broadcast %c0_i32_320 : i32 to vector<2x8xi32>
    %703 = arith.select %698, %702, %695 : vector<2x8xi1>, vector<2x8xi32>
    %704 = arith.extui %698 : vector<2x8xi1> to vector<2x8xi32>
    %c2_i32_321 = arith.constant 2 : i32
    %705 = arith.addi %666, %c2_i32_321 : i32
    %706 = arith.index_cast %705 : i32 to index
    %c0_322 = arith.constant 0 : index
    %707 = vector.load %arg3[%706, %c0_322] : memref<32x8xf32, #tpu.memory_space<vmem>>, vector<2x8xf32>
    tpu.vector_store %arg3[%706, %c0_322], %701 {strides = array<i32>} : memref<32x8xf32, #tpu.memory_space<vmem>>, vector<2x8xf32>,
    %c1_i32_323 = arith.constant 1 : i32
    %c2_i32_324 = arith.constant 2 : i32
    %708 = arith.muli %c1_i32_323, %c2_i32_324 : i32
    %709 = tpu.assume_multiple %708, 2 : i32
    %c0_i32_325 = arith.constant 0 : i32
    %710 = vector.broadcast %c0_i32_325 : i32 to vector<2x8xi32>
    %711 = arith.cmpi slt, %680, %710 : vector<2x8xi32>
    %c-1_i32_326 = arith.constant -1 : i32
    %c1_i32_327 = arith.constant 1 : i32
    %712 = vector.broadcast %c-1_i32_326 : i32 to vector<2x8xi32>
    %713 = vector.broadcast %c1_i32_327 : i32 to vector<2x8xi32>
    %714 = arith.select %711, %712, %713 : vector<2x8xi1>, vector<2x8xi32>
    %715 = math.absi %680 : vector<2x8xi32>
    %c3072_i32_328 = arith.constant 3072 : i32
    %716 = vector.broadcast %c3072_i32_328 : i32 to vector<2x8xi32>
    %717 = arith.muli %715, %716 : vector<2x8xi32>
    %c12_i32_329 = arith.constant 12 : i32
    %718 = vector.broadcast %c12_i32_329 : i32 to vector<2x8xi32>
    %719 = arith.shrui %717, %718 : vector<2x8xi32>
    %720 = arith.muli %714, %719 : vector<2x8xi32>
    %721 = arith.index_cast %709 : i32 to index
    %c0_330 = arith.constant 0 : index
    %722 = vector.load %arg6[%721, %c0_330] : memref<32x8xi32, #tpu.memory_space<vmem>>, vector<2x8xi32>
    %723 = arith.addi %720, %722 : vector<2x8xi32>
    %c0_i32_331 = arith.constant 0 : i32
    %724 = vector.broadcast %c0_i32_331 : i32 to vector<2x8xi32>
    %725 = arith.cmpi eq, %704, %724 : vector<2x8xi32>
    %c0_i32_332 = arith.constant 0 : i32
    %726 = vector.broadcast %c0_i32_332 : i32 to vector<2x8xi32>
    %727 = arith.cmpi slt, %703, %726 : vector<2x8xi32>
    %c-1_i32_333 = arith.constant -1 : i32
    %c1_i32_334 = arith.constant 1 : i32
    %728 = vector.broadcast %c-1_i32_333 : i32 to vector<2x8xi32>
    %729 = vector.broadcast %c1_i32_334 : i32 to vector<2x8xi32>
    %730 = arith.select %727, %728, %729 : vector<2x8xi1>, vector<2x8xi32>
    %731 = math.absi %703 : vector<2x8xi32>
    %c3968_i32_335 = arith.constant 3968 : i32
    %732 = vector.broadcast %c3968_i32_335 : i32 to vector<2x8xi32>
    %733 = arith.muli %731, %732 : vector<2x8xi32>
    %c12_i32_336 = arith.constant 12 : i32
    %734 = vector.broadcast %c12_i32_336 : i32 to vector<2x8xi32>
    %735 = arith.shrui %733, %734 : vector<2x8xi32>
    %736 = arith.muli %730, %735 : vector<2x8xi32>
    %737 = arith.addi %736, %723 : vector<2x8xi32>
    %738 = arith.select %725, %737, %703 : vector<2x8xi1>, vector<2x8xi32>
    %c5120_i32_337 = arith.constant 5120 : i32
    %739 = vector.broadcast %c5120_i32_337 : i32 to vector<2x8xi32>
    %740 = arith.cmpi sge, %738, %739 : vector<2x8xi32>
    %741 = arith.andi %725, %740 : vector<2x8xi1>
    %cst_338 = arith.constant 1.000000e+00 : f32
    %cst_339 = arith.constant 0.000000e+00 : f32
    %742 = vector.broadcast %cst_338 : f32 to vector<2x8xf32>
    %743 = vector.broadcast %cst_339 : f32 to vector<2x8xf32>
    %744 = arith.select %741, %742, %743 : vector<2x8xi1>, vector<2x8xf32>
    %c0_i32_340 = arith.constant 0 : i32
    %745 = vector.broadcast %c0_i32_340 : i32 to vector<2x8xi32>
    %746 = arith.select %741, %745, %738 : vector<2x8xi1>, vector<2x8xi32>
    %747 = arith.extui %741 : vector<2x8xi1> to vector<2x8xi32>
    %c2_i32_341 = arith.constant 2 : i32
    %748 = arith.addi %709, %c2_i32_341 : i32
    %749 = arith.index_cast %748 : i32 to index
    %c0_342 = arith.constant 0 : index
    %750 = vector.load %arg3[%749, %c0_342] : memref<32x8xf32, #tpu.memory_space<vmem>>, vector<2x8xf32>
    tpu.vector_store %arg3[%749, %c0_342], %744 {strides = array<i32>} : memref<32x8xf32, #tpu.memory_space<vmem>>, vector<2x8xf32>,
    %c2_i32_343 = arith.constant 2 : i32
    %c2_i32_344 = arith.constant 2 : i32
    %751 = arith.muli %c2_i32_343, %c2_i32_344 : i32
    %752 = tpu.assume_multiple %751, 2 : i32
    %c0_i32_345 = arith.constant 0 : i32
    %753 = vector.broadcast %c0_i32_345 : i32 to vector<2x8xi32>
    %754 = arith.cmpi slt, %723, %753 : vector<2x8xi32>
    %c-1_i32_346 = arith.constant -1 : i32
    %c1_i32_347 = arith.constant 1 : i32
    %755 = vector.broadcast %c-1_i32_346 : i32 to vector<2x8xi32>
    %756 = vector.broadcast %c1_i32_347 : i32 to vector<2x8xi32>
    %757 = arith.select %754, %755, %756 : vector<2x8xi1>, vector<2x8xi32>
    %758 = math.absi %723 : vector<2x8xi32>
    %c3072_i32_348 = arith.constant 3072 : i32
    %759 = vector.broadcast %c3072_i32_348 : i32 to vector<2x8xi32>
    %760 = arith.muli %758, %759 : vector<2x8xi32>
    %c12_i32_349 = arith.constant 12 : i32
    %761 = vector.broadcast %c12_i32_349 : i32 to vector<2x8xi32>
    %762 = arith.shrui %760, %761 : vector<2x8xi32>
    %763 = arith.muli %757, %762 : vector<2x8xi32>
    %764 = arith.index_cast %752 : i32 to index
    %c0_350 = arith.constant 0 : index
    %765 = vector.load %arg6[%764, %c0_350] : memref<32x8xi32, #tpu.memory_space<vmem>>, vector<2x8xi32>
    %766 = arith.addi %763, %765 : vector<2x8xi32>
    %c0_i32_351 = arith.constant 0 : i32
    %767 = vector.broadcast %c0_i32_351 : i32 to vector<2x8xi32>
    %768 = arith.cmpi eq, %747, %767 : vector<2x8xi32>
    %c0_i32_352 = arith.constant 0 : i32
    %769 = vector.broadcast %c0_i32_352 : i32 to vector<2x8xi32>
    %770 = arith.cmpi slt, %746, %769 : vector<2x8xi32>
    %c-1_i32_353 = arith.constant -1 : i32
    %c1_i32_354 = arith.constant 1 : i32
    %771 = vector.broadcast %c-1_i32_353 : i32 to vector<2x8xi32>
    %772 = vector.broadcast %c1_i32_354 : i32 to vector<2x8xi32>
    %773 = arith.select %770, %771, %772 : vector<2x8xi1>, vector<2x8xi32>
    %774 = math.absi %746 : vector<2x8xi32>
    %c3968_i32_355 = arith.constant 3968 : i32
    %775 = vector.broadcast %c3968_i32_355 : i32 to vector<2x8xi32>
    %776 = arith.muli %774, %775 : vector<2x8xi32>
    %c12_i32_356 = arith.constant 12 : i32
    %777 = vector.broadcast %c12_i32_356 : i32 to vector<2x8xi32>
    %778 = arith.shrui %776, %777 : vector<2x8xi32>
    %779 = arith.muli %773, %778 : vector<2x8xi32>
    %780 = arith.addi %779, %766 : vector<2x8xi32>
    %781 = arith.select %768, %780, %746 : vector<2x8xi1>, vector<2x8xi32>
    %c5120_i32_357 = arith.constant 5120 : i32
    %782 = vector.broadcast %c5120_i32_357 : i32 to vector<2x8xi32>
    %783 = arith.cmpi sge, %781, %782 : vector<2x8xi32>
    %784 = arith.andi %768, %783 : vector<2x8xi1>
    %cst_358 = arith.constant 1.000000e+00 : f32
    %cst_359 = arith.constant 0.000000e+00 : f32
    %785 = vector.broadcast %cst_358 : f32 to vector<2x8xf32>
    %786 = vector.broadcast %cst_359 : f32 to vector<2x8xf32>
    %787 = arith.select %784, %785, %786 : vector<2x8xi1>, vector<2x8xf32>
    %c0_i32_360 = arith.constant 0 : i32
    %788 = vector.broadcast %c0_i32_360 : i32 to vector<2x8xi32>
    %789 = arith.select %784, %788, %781 : vector<2x8xi1>, vector<2x8xi32>
    %790 = arith.extui %784 : vector<2x8xi1> to vector<2x8xi32>
    %c2_i32_361 = arith.constant 2 : i32
    %791 = arith.addi %752, %c2_i32_361 : i32
    %792 = arith.index_cast %791 : i32 to index
    %c0_362 = arith.constant 0 : index
    %793 = vector.load %arg3[%792, %c0_362] : memref<32x8xf32, #tpu.memory_space<vmem>>, vector<2x8xf32>
    tpu.vector_store %arg3[%792, %c0_362], %787 {strides = array<i32>} : memref<32x8xf32, #tpu.memory_space<vmem>>, vector<2x8xf32>,
    %c3_i32_363 = arith.constant 3 : i32
    %c2_i32_364 = arith.constant 2 : i32
    %794 = arith.muli %c3_i32_363, %c2_i32_364 : i32
    %795 = tpu.assume_multiple %794, 2 : i32
    %c0_i32_365 = arith.constant 0 : i32
    %796 = vector.broadcast %c0_i32_365 : i32 to vector<2x8xi32>
    %797 = arith.cmpi slt, %766, %796 : vector<2x8xi32>
    %c-1_i32_366 = arith.constant -1 : i32
    %c1_i32_367 = arith.constant 1 : i32
    %798 = vector.broadcast %c-1_i32_366 : i32 to vector<2x8xi32>
    %799 = vector.broadcast %c1_i32_367 : i32 to vector<2x8xi32>
    %800 = arith.select %797, %798, %799 : vector<2x8xi1>, vector<2x8xi32>
    %801 = math.absi %766 : vector<2x8xi32>
    %c3072_i32_368 = arith.constant 3072 : i32
    %802 = vector.broadcast %c3072_i32_368 : i32 to vector<2x8xi32>
    %803 = arith.muli %801, %802 : vector<2x8xi32>
    %c12_i32_369 = arith.constant 12 : i32
    %804 = vector.broadcast %c12_i32_369 : i32 to vector<2x8xi32>
    %805 = arith.shrui %803, %804 : vector<2x8xi32>
    %806 = arith.muli %800, %805 : vector<2x8xi32>
    %807 = arith.index_cast %795 : i32 to index
    %c0_370 = arith.constant 0 : index
    %808 = vector.load %arg6[%807, %c0_370] : memref<32x8xi32, #tpu.memory_space<vmem>>, vector<2x8xi32>
    %809 = arith.addi %806, %808 : vector<2x8xi32>
    %c0_i32_371 = arith.constant 0 : i32
    %810 = vector.broadcast %c0_i32_371 : i32 to vector<2x8xi32>
    %811 = arith.cmpi eq, %790, %810 : vector<2x8xi32>
    %c0_i32_372 = arith.constant 0 : i32
    %812 = vector.broadcast %c0_i32_372 : i32 to vector<2x8xi32>
    %813 = arith.cmpi slt, %789, %812 : vector<2x8xi32>
    %c-1_i32_373 = arith.constant -1 : i32
    %c1_i32_374 = arith.constant 1 : i32
    %814 = vector.broadcast %c-1_i32_373 : i32 to vector<2x8xi32>
    %815 = vector.broadcast %c1_i32_374 : i32 to vector<2x8xi32>
    %816 = arith.select %813, %814, %815 : vector<2x8xi1>, vector<2x8xi32>
    %817 = math.absi %789 : vector<2x8xi32>
    %c3968_i32_375 = arith.constant 3968 : i32
    %818 = vector.broadcast %c3968_i32_375 : i32 to vector<2x8xi32>
    %819 = arith.muli %817, %818 : vector<2x8xi32>
    %c12_i32_376 = arith.constant 12 : i32
    %820 = vector.broadcast %c12_i32_376 : i32 to vector<2x8xi32>
    %821 = arith.shrui %819, %820 : vector<2x8xi32>
    %822 = arith.muli %816, %821 : vector<2x8xi32>
    %823 = arith.addi %822, %809 : vector<2x8xi32>
    %824 = arith.select %811, %823, %789 : vector<2x8xi1>, vector<2x8xi32>
    %c5120_i32_377 = arith.constant 5120 : i32
    %825 = vector.broadcast %c5120_i32_377 : i32 to vector<2x8xi32>
    %826 = arith.cmpi sge, %824, %825 : vector<2x8xi32>
    %827 = arith.andi %811, %826 : vector<2x8xi1>
    %cst_378 = arith.constant 1.000000e+00 : f32
    %cst_379 = arith.constant 0.000000e+00 : f32
    %828 = vector.broadcast %cst_378 : f32 to vector<2x8xf32>
    %829 = vector.broadcast %cst_379 : f32 to vector<2x8xf32>
    %830 = arith.select %827, %828, %829 : vector<2x8xi1>, vector<2x8xf32>
    %c0_i32_380 = arith.constant 0 : i32
    %831 = vector.broadcast %c0_i32_380 : i32 to vector<2x8xi32>
    %832 = arith.select %827, %831, %824 : vector<2x8xi1>, vector<2x8xi32>
    %833 = arith.extui %827 : vector<2x8xi1> to vector<2x8xi32>
    %c2_i32_381 = arith.constant 2 : i32
    %834 = arith.addi %795, %c2_i32_381 : i32
    %835 = arith.index_cast %834 : i32 to index
    %c0_382 = arith.constant 0 : index
    %836 = vector.load %arg3[%835, %c0_382] : memref<32x8xf32, #tpu.memory_space<vmem>>, vector<2x8xf32>
    tpu.vector_store %arg3[%835, %c0_382], %830 {strides = array<i32>} : memref<32x8xf32, #tpu.memory_space<vmem>>, vector<2x8xf32>,
    %c4_i32_383 = arith.constant 4 : i32
    %c2_i32_384 = arith.constant 2 : i32
    %837 = arith.muli %c4_i32_383, %c2_i32_384 : i32
    %838 = tpu.assume_multiple %837, 2 : i32
    %c0_i32_385 = arith.constant 0 : i32
    %839 = vector.broadcast %c0_i32_385 : i32 to vector<2x8xi32>
    %840 = arith.cmpi slt, %809, %839 : vector<2x8xi32>
    %c-1_i32_386 = arith.constant -1 : i32
    %c1_i32_387 = arith.constant 1 : i32
    %841 = vector.broadcast %c-1_i32_386 : i32 to vector<2x8xi32>
    %842 = vector.broadcast %c1_i32_387 : i32 to vector<2x8xi32>
    %843 = arith.select %840, %841, %842 : vector<2x8xi1>, vector<2x8xi32>
    %844 = math.absi %809 : vector<2x8xi32>
    %c3072_i32_388 = arith.constant 3072 : i32
    %845 = vector.broadcast %c3072_i32_388 : i32 to vector<2x8xi32>
    %846 = arith.muli %844, %845 : vector<2x8xi32>
    %c12_i32_389 = arith.constant 12 : i32
    %847 = vector.broadcast %c12_i32_389 : i32 to vector<2x8xi32>
    %848 = arith.shrui %846, %847 : vector<2x8xi32>
    %849 = arith.muli %843, %848 : vector<2x8xi32>
    %850 = arith.index_cast %838 : i32 to index
    %c0_390 = arith.constant 0 : index
    %851 = vector.load %arg6[%850, %c0_390] : memref<32x8xi32, #tpu.memory_space<vmem>>, vector<2x8xi32>
    %852 = arith.addi %849, %851 : vector<2x8xi32>
    %c0_i32_391 = arith.constant 0 : i32
    %853 = vector.broadcast %c0_i32_391 : i32 to vector<2x8xi32>
    %854 = arith.cmpi eq, %833, %853 : vector<2x8xi32>
    %c0_i32_392 = arith.constant 0 : i32
    %855 = vector.broadcast %c0_i32_392 : i32 to vector<2x8xi32>
    %856 = arith.cmpi slt, %832, %855 : vector<2x8xi32>
    %c-1_i32_393 = arith.constant -1 : i32
    %c1_i32_394 = arith.constant 1 : i32
    %857 = vector.broadcast %c-1_i32_393 : i32 to vector<2x8xi32>
    %858 = vector.broadcast %c1_i32_394 : i32 to vector<2x8xi32>
    %859 = arith.select %856, %857, %858 : vector<2x8xi1>, vector<2x8xi32>
    %860 = math.absi %832 : vector<2x8xi32>
    %c3968_i32_395 = arith.constant 3968 : i32
    %861 = vector.broadcast %c3968_i32_395 : i32 to vector<2x8xi32>
    %862 = arith.muli %860, %861 : vector<2x8xi32>
    %c12_i32_396 = arith.constant 12 : i32
    %863 = vector.broadcast %c12_i32_396 : i32 to vector<2x8xi32>
    %864 = arith.shrui %862, %863 : vector<2x8xi32>
    %865 = arith.muli %859, %864 : vector<2x8xi32>
    %866 = arith.addi %865, %852 : vector<2x8xi32>
    %867 = arith.select %854, %866, %832 : vector<2x8xi1>, vector<2x8xi32>
    %c5120_i32_397 = arith.constant 5120 : i32
    %868 = vector.broadcast %c5120_i32_397 : i32 to vector<2x8xi32>
    %869 = arith.cmpi sge, %867, %868 : vector<2x8xi32>
    %870 = arith.andi %854, %869 : vector<2x8xi1>
    %cst_398 = arith.constant 1.000000e+00 : f32
    %cst_399 = arith.constant 0.000000e+00 : f32
    %871 = vector.broadcast %cst_398 : f32 to vector<2x8xf32>
    %872 = vector.broadcast %cst_399 : f32 to vector<2x8xf32>
    %873 = arith.select %870, %871, %872 : vector<2x8xi1>, vector<2x8xf32>
    %c0_i32_400 = arith.constant 0 : i32
    %874 = vector.broadcast %c0_i32_400 : i32 to vector<2x8xi32>
    %875 = arith.select %870, %874, %867 : vector<2x8xi1>, vector<2x8xi32>
    %876 = arith.extui %870 : vector<2x8xi1> to vector<2x8xi32>
    %c2_i32_401 = arith.constant 2 : i32
    %877 = arith.addi %838, %c2_i32_401 : i32
    %878 = arith.index_cast %877 : i32 to index
    %c0_402 = arith.constant 0 : index
    %879 = vector.load %arg3[%878, %c0_402] : memref<32x8xf32, #tpu.memory_space<vmem>>, vector<2x8xf32>
    tpu.vector_store %arg3[%878, %c0_402], %873 {strides = array<i32>} : memref<32x8xf32, #tpu.memory_space<vmem>>, vector<2x8xf32>,
    %c5_i32_403 = arith.constant 5 : i32
    %c2_i32_404 = arith.constant 2 : i32
    %880 = arith.muli %c5_i32_403, %c2_i32_404 : i32
    %881 = tpu.assume_multiple %880, 2 : i32
    %c0_i32_405 = arith.constant 0 : i32
    %882 = vector.broadcast %c0_i32_405 : i32 to vector<2x8xi32>
    %883 = arith.cmpi slt, %852, %882 : vector<2x8xi32>
    %c-1_i32_406 = arith.constant -1 : i32
    %c1_i32_407 = arith.constant 1 : i32
    %884 = vector.broadcast %c-1_i32_406 : i32 to vector<2x8xi32>
    %885 = vector.broadcast %c1_i32_407 : i32 to vector<2x8xi32>
    %886 = arith.select %883, %884, %885 : vector<2x8xi1>, vector<2x8xi32>
    %887 = math.absi %852 : vector<2x8xi32>
    %c3072_i32_408 = arith.constant 3072 : i32
    %888 = vector.broadcast %c3072_i32_408 : i32 to vector<2x8xi32>
    %889 = arith.muli %887, %888 : vector<2x8xi32>
    %c12_i32_409 = arith.constant 12 : i32
    %890 = vector.broadcast %c12_i32_409 : i32 to vector<2x8xi32>
    %891 = arith.shrui %889, %890 : vector<2x8xi32>
    %892 = arith.muli %886, %891 : vector<2x8xi32>
    %893 = arith.index_cast %881 : i32 to index
    %c0_410 = arith.constant 0 : index
    %894 = vector.load %arg6[%893, %c0_410] : memref<32x8xi32, #tpu.memory_space<vmem>>, vector<2x8xi32>
    %895 = arith.addi %892, %894 : vector<2x8xi32>
    %c0_i32_411 = arith.constant 0 : i32
    %896 = vector.broadcast %c0_i32_411 : i32 to vector<2x8xi32>
    %897 = arith.cmpi eq, %876, %896 : vector<2x8xi32>
    %c0_i32_412 = arith.constant 0 : i32
    %898 = vector.broadcast %c0_i32_412 : i32 to vector<2x8xi32>
    %899 = arith.cmpi slt, %875, %898 : vector<2x8xi32>
    %c-1_i32_413 = arith.constant -1 : i32
    %c1_i32_414 = arith.constant 1 : i32
    %900 = vector.broadcast %c-1_i32_413 : i32 to vector<2x8xi32>
    %901 = vector.broadcast %c1_i32_414 : i32 to vector<2x8xi32>
    %902 = arith.select %899, %900, %901 : vector<2x8xi1>, vector<2x8xi32>
    %903 = math.absi %875 : vector<2x8xi32>
    %c3968_i32_415 = arith.constant 3968 : i32
    %904 = vector.broadcast %c3968_i32_415 : i32 to vector<2x8xi32>
    %905 = arith.muli %903, %904 : vector<2x8xi32>
    %c12_i32_416 = arith.constant 12 : i32
    %906 = vector.broadcast %c12_i32_416 : i32 to vector<2x8xi32>
    %907 = arith.shrui %905, %906 : vector<2x8xi32>
    %908 = arith.muli %902, %907 : vector<2x8xi32>
    %909 = arith.addi %908, %895 : vector<2x8xi32>
    %910 = arith.select %897, %909, %875 : vector<2x8xi1>, vector<2x8xi32>
    %c5120_i32_417 = arith.constant 5120 : i32
    %911 = vector.broadcast %c5120_i32_417 : i32 to vector<2x8xi32>
    %912 = arith.cmpi sge, %910, %911 : vector<2x8xi32>
    %913 = arith.andi %897, %912 : vector<2x8xi1>
    %cst_418 = arith.constant 1.000000e+00 : f32
    %cst_419 = arith.constant 0.000000e+00 : f32
    %914 = vector.broadcast %cst_418 : f32 to vector<2x8xf32>
    %915 = vector.broadcast %cst_419 : f32 to vector<2x8xf32>
    %916 = arith.select %913, %914, %915 : vector<2x8xi1>, vector<2x8xf32>
    %c0_i32_420 = arith.constant 0 : i32
    %917 = vector.broadcast %c0_i32_420 : i32 to vector<2x8xi32>
    %918 = arith.select %913, %917, %910 : vector<2x8xi1>, vector<2x8xi32>
    %919 = arith.extui %913 : vector<2x8xi1> to vector<2x8xi32>
    %c2_i32_421 = arith.constant 2 : i32
    %920 = arith.addi %881, %c2_i32_421 : i32
    %921 = arith.index_cast %920 : i32 to index
    %c0_422 = arith.constant 0 : index
    %922 = vector.load %arg3[%921, %c0_422] : memref<32x8xf32, #tpu.memory_space<vmem>>, vector<2x8xf32>
    tpu.vector_store %arg3[%921, %c0_422], %916 {strides = array<i32>} : memref<32x8xf32, #tpu.memory_space<vmem>>, vector<2x8xf32>,
    %c6_i32_423 = arith.constant 6 : i32
    %c2_i32_424 = arith.constant 2 : i32
    %923 = arith.muli %c6_i32_423, %c2_i32_424 : i32
    %924 = tpu.assume_multiple %923, 2 : i32
    %c0_i32_425 = arith.constant 0 : i32
    %925 = vector.broadcast %c0_i32_425 : i32 to vector<2x8xi32>
    %926 = arith.cmpi slt, %895, %925 : vector<2x8xi32>
    %c-1_i32_426 = arith.constant -1 : i32
    %c1_i32_427 = arith.constant 1 : i32
    %927 = vector.broadcast %c-1_i32_426 : i32 to vector<2x8xi32>
    %928 = vector.broadcast %c1_i32_427 : i32 to vector<2x8xi32>
    %929 = arith.select %926, %927, %928 : vector<2x8xi1>, vector<2x8xi32>
    %930 = math.absi %895 : vector<2x8xi32>
    %c3072_i32_428 = arith.constant 3072 : i32
    %931 = vector.broadcast %c3072_i32_428 : i32 to vector<2x8xi32>
    %932 = arith.muli %930, %931 : vector<2x8xi32>
    %c12_i32_429 = arith.constant 12 : i32
    %933 = vector.broadcast %c12_i32_429 : i32 to vector<2x8xi32>
    %934 = arith.shrui %932, %933 : vector<2x8xi32>
    %935 = arith.muli %929, %934 : vector<2x8xi32>
    %936 = arith.index_cast %924 : i32 to index
    %c0_430 = arith.constant 0 : index
    %937 = vector.load %arg6[%936, %c0_430] : memref<32x8xi32, #tpu.memory_space<vmem>>, vector<2x8xi32>
    %938 = arith.addi %935, %937 : vector<2x8xi32>
    %c0_i32_431 = arith.constant 0 : i32
    %939 = vector.broadcast %c0_i32_431 : i32 to vector<2x8xi32>
    %940 = arith.cmpi eq, %919, %939 : vector<2x8xi32>
    %c0_i32_432 = arith.constant 0 : i32
    %941 = vector.broadcast %c0_i32_432 : i32 to vector<2x8xi32>
    %942 = arith.cmpi slt, %918, %941 : vector<2x8xi32>
    %c-1_i32_433 = arith.constant -1 : i32
    %c1_i32_434 = arith.constant 1 : i32
    %943 = vector.broadcast %c-1_i32_433 : i32 to vector<2x8xi32>
    %944 = vector.broadcast %c1_i32_434 : i32 to vector<2x8xi32>
    %945 = arith.select %942, %943, %944 : vector<2x8xi1>, vector<2x8xi32>
    %946 = math.absi %918 : vector<2x8xi32>
    %c3968_i32_435 = arith.constant 3968 : i32
    %947 = vector.broadcast %c3968_i32_435 : i32 to vector<2x8xi32>
    %948 = arith.muli %946, %947 : vector<2x8xi32>
    %c12_i32_436 = arith.constant 12 : i32
    %949 = vector.broadcast %c12_i32_436 : i32 to vector<2x8xi32>
    %950 = arith.shrui %948, %949 : vector<2x8xi32>
    %951 = arith.muli %945, %950 : vector<2x8xi32>
    %952 = arith.addi %951, %938 : vector<2x8xi32>
    %953 = arith.select %940, %952, %918 : vector<2x8xi1>, vector<2x8xi32>
    %c5120_i32_437 = arith.constant 5120 : i32
    %954 = vector.broadcast %c5120_i32_437 : i32 to vector<2x8xi32>
    %955 = arith.cmpi sge, %953, %954 : vector<2x8xi32>
    %956 = arith.andi %940, %955 : vector<2x8xi1>
    %cst_438 = arith.constant 1.000000e+00 : f32
    %cst_439 = arith.constant 0.000000e+00 : f32
    %957 = vector.broadcast %cst_438 : f32 to vector<2x8xf32>
    %958 = vector.broadcast %cst_439 : f32 to vector<2x8xf32>
    %959 = arith.select %956, %957, %958 : vector<2x8xi1>, vector<2x8xf32>
    %c0_i32_440 = arith.constant 0 : i32
    %960 = vector.broadcast %c0_i32_440 : i32 to vector<2x8xi32>
    %961 = arith.select %956, %960, %953 : vector<2x8xi1>, vector<2x8xi32>
    %962 = arith.extui %956 : vector<2x8xi1> to vector<2x8xi32>
    %c2_i32_441 = arith.constant 2 : i32
    %963 = arith.addi %924, %c2_i32_441 : i32
    %964 = arith.index_cast %963 : i32 to index
    %c0_442 = arith.constant 0 : index
    %965 = vector.load %arg3[%964, %c0_442] : memref<32x8xf32, #tpu.memory_space<vmem>>, vector<2x8xf32>
    tpu.vector_store %arg3[%964, %c0_442], %959 {strides = array<i32>} : memref<32x8xf32, #tpu.memory_space<vmem>>, vector<2x8xf32>,
    %c7_i32_443 = arith.constant 7 : i32
    %c2_i32_444 = arith.constant 2 : i32
    %966 = arith.muli %c7_i32_443, %c2_i32_444 : i32
    %967 = tpu.assume_multiple %966, 2 : i32
    %c0_i32_445 = arith.constant 0 : i32
    %968 = vector.broadcast %c0_i32_445 : i32 to vector<2x8xi32>
    %969 = arith.cmpi slt, %938, %968 : vector<2x8xi32>
    %c-1_i32_446 = arith.constant -1 : i32
    %c1_i32_447 = arith.constant 1 : i32
    %970 = vector.broadcast %c-1_i32_446 : i32 to vector<2x8xi32>
    %971 = vector.broadcast %c1_i32_447 : i32 to vector<2x8xi32>
    %972 = arith.select %969, %970, %971 : vector<2x8xi1>, vector<2x8xi32>
    %973 = math.absi %938 : vector<2x8xi32>
    %c3072_i32_448 = arith.constant 3072 : i32
    %974 = vector.broadcast %c3072_i32_448 : i32 to vector<2x8xi32>
    %975 = arith.muli %973, %974 : vector<2x8xi32>
    %c12_i32_449 = arith.constant 12 : i32
    %976 = vector.broadcast %c12_i32_449 : i32 to vector<2x8xi32>
    %977 = arith.shrui %975, %976 : vector<2x8xi32>
    %978 = arith.muli %972, %977 : vector<2x8xi32>
    %979 = arith.index_cast %967 : i32 to index
    %c0_450 = arith.constant 0 : index
    %980 = vector.load %arg6[%979, %c0_450] : memref<32x8xi32, #tpu.memory_space<vmem>>, vector<2x8xi32>
    %981 = arith.addi %978, %980 : vector<2x8xi32>
    %c0_i32_451 = arith.constant 0 : i32
    %982 = vector.broadcast %c0_i32_451 : i32 to vector<2x8xi32>
    %983 = arith.cmpi eq, %962, %982 : vector<2x8xi32>
    %c0_i32_452 = arith.constant 0 : i32
    %984 = vector.broadcast %c0_i32_452 : i32 to vector<2x8xi32>
    %985 = arith.cmpi slt, %961, %984 : vector<2x8xi32>
    %c-1_i32_453 = arith.constant -1 : i32
    %c1_i32_454 = arith.constant 1 : i32
    %986 = vector.broadcast %c-1_i32_453 : i32 to vector<2x8xi32>
    %987 = vector.broadcast %c1_i32_454 : i32 to vector<2x8xi32>
    %988 = arith.select %985, %986, %987 : vector<2x8xi1>, vector<2x8xi32>
    %989 = math.absi %961 : vector<2x8xi32>
    %c3968_i32_455 = arith.constant 3968 : i32
    %990 = vector.broadcast %c3968_i32_455 : i32 to vector<2x8xi32>
    %991 = arith.muli %989, %990 : vector<2x8xi32>
    %c12_i32_456 = arith.constant 12 : i32
    %992 = vector.broadcast %c12_i32_456 : i32 to vector<2x8xi32>
    %993 = arith.shrui %991, %992 : vector<2x8xi32>
    %994 = arith.muli %988, %993 : vector<2x8xi32>
    %995 = arith.addi %994, %981 : vector<2x8xi32>
    %996 = arith.select %983, %995, %961 : vector<2x8xi1>, vector<2x8xi32>
    %c5120_i32_457 = arith.constant 5120 : i32
    %997 = vector.broadcast %c5120_i32_457 : i32 to vector<2x8xi32>
    %998 = arith.cmpi sge, %996, %997 : vector<2x8xi32>
    %999 = arith.andi %983, %998 : vector<2x8xi1>
    %cst_458 = arith.constant 1.000000e+00 : f32
    %cst_459 = arith.constant 0.000000e+00 : f32
    %1000 = vector.broadcast %cst_458 : f32 to vector<2x8xf32>
    %1001 = vector.broadcast %cst_459 : f32 to vector<2x8xf32>
    %1002 = arith.select %999, %1000, %1001 : vector<2x8xi1>, vector<2x8xf32>
    %c0_i32_460 = arith.constant 0 : i32
    %1003 = vector.broadcast %c0_i32_460 : i32 to vector<2x8xi32>
    %1004 = arith.select %999, %1003, %996 : vector<2x8xi1>, vector<2x8xi32>
    %1005 = arith.extui %999 : vector<2x8xi1> to vector<2x8xi32>
    %c2_i32_461 = arith.constant 2 : i32
    %1006 = arith.addi %967, %c2_i32_461 : i32
    %1007 = arith.index_cast %1006 : i32 to index
    %c0_462 = arith.constant 0 : index
    %1008 = vector.load %arg3[%1007, %c0_462] : memref<32x8xf32, #tpu.memory_space<vmem>>, vector<2x8xf32>
    tpu.vector_store %arg3[%1007, %c0_462], %1002 {strides = array<i32>} : memref<32x8xf32, #tpu.memory_space<vmem>>, vector<2x8xf32>,
    %c8_i32_463 = arith.constant 8 : i32
    %c2_i32_464 = arith.constant 2 : i32
    %1009 = arith.muli %c8_i32_463, %c2_i32_464 : i32
    %1010 = tpu.assume_multiple %1009, 2 : i32
    %c0_i32_465 = arith.constant 0 : i32
    %1011 = vector.broadcast %c0_i32_465 : i32 to vector<2x8xi32>
    %1012 = arith.cmpi slt, %981, %1011 : vector<2x8xi32>
    %c-1_i32_466 = arith.constant -1 : i32
    %c1_i32_467 = arith.constant 1 : i32
    %1013 = vector.broadcast %c-1_i32_466 : i32 to vector<2x8xi32>
    %1014 = vector.broadcast %c1_i32_467 : i32 to vector<2x8xi32>
    %1015 = arith.select %1012, %1013, %1014 : vector<2x8xi1>, vector<2x8xi32>
    %1016 = math.absi %981 : vector<2x8xi32>
    %c3072_i32_468 = arith.constant 3072 : i32
    %1017 = vector.broadcast %c3072_i32_468 : i32 to vector<2x8xi32>
    %1018 = arith.muli %1016, %1017 : vector<2x8xi32>
    %c12_i32_469 = arith.constant 12 : i32
    %1019 = vector.broadcast %c12_i32_469 : i32 to vector<2x8xi32>
    %1020 = arith.shrui %1018, %1019 : vector<2x8xi32>
    %1021 = arith.muli %1015, %1020 : vector<2x8xi32>
    %1022 = arith.index_cast %1010 : i32 to index
    %c0_470 = arith.constant 0 : index
    %1023 = vector.load %arg6[%1022, %c0_470] : memref<32x8xi32, #tpu.memory_space<vmem>>, vector<2x8xi32>
    %1024 = arith.addi %1021, %1023 : vector<2x8xi32>
    %c0_i32_471 = arith.constant 0 : i32
    %1025 = vector.broadcast %c0_i32_471 : i32 to vector<2x8xi32>
    %1026 = arith.cmpi eq, %1005, %1025 : vector<2x8xi32>
    %c0_i32_472 = arith.constant 0 : i32
    %1027 = vector.broadcast %c0_i32_472 : i32 to vector<2x8xi32>
    %1028 = arith.cmpi slt, %1004, %1027 : vector<2x8xi32>
    %c-1_i32_473 = arith.constant -1 : i32
    %c1_i32_474 = arith.constant 1 : i32
    %1029 = vector.broadcast %c-1_i32_473 : i32 to vector<2x8xi32>
    %1030 = vector.broadcast %c1_i32_474 : i32 to vector<2x8xi32>
    %1031 = arith.select %1028, %1029, %1030 : vector<2x8xi1>, vector<2x8xi32>
    %1032 = math.absi %1004 : vector<2x8xi32>
    %c3968_i32_475 = arith.constant 3968 : i32
    %1033 = vector.broadcast %c3968_i32_475 : i32 to vector<2x8xi32>
    %1034 = arith.muli %1032, %1033 : vector<2x8xi32>
    %c12_i32_476 = arith.constant 12 : i32
    %1035 = vector.broadcast %c12_i32_476 : i32 to vector<2x8xi32>
    %1036 = arith.shrui %1034, %1035 : vector<2x8xi32>
    %1037 = arith.muli %1031, %1036 : vector<2x8xi32>
    %1038 = arith.addi %1037, %1024 : vector<2x8xi32>
    %1039 = arith.select %1026, %1038, %1004 : vector<2x8xi1>, vector<2x8xi32>
    %c5120_i32_477 = arith.constant 5120 : i32
    %1040 = vector.broadcast %c5120_i32_477 : i32 to vector<2x8xi32>
    %1041 = arith.cmpi sge, %1039, %1040 : vector<2x8xi32>
    %1042 = arith.andi %1026, %1041 : vector<2x8xi1>
    %cst_478 = arith.constant 1.000000e+00 : f32
    %cst_479 = arith.constant 0.000000e+00 : f32
    %1043 = vector.broadcast %cst_478 : f32 to vector<2x8xf32>
    %1044 = vector.broadcast %cst_479 : f32 to vector<2x8xf32>
    %1045 = arith.select %1042, %1043, %1044 : vector<2x8xi1>, vector<2x8xf32>
    %c0_i32_480 = arith.constant 0 : i32
    %1046 = vector.broadcast %c0_i32_480 : i32 to vector<2x8xi32>
    %1047 = arith.select %1042, %1046, %1039 : vector<2x8xi1>, vector<2x8xi32>
    %1048 = arith.extui %1042 : vector<2x8xi1> to vector<2x8xi32>
    %c2_i32_481 = arith.constant 2 : i32
    %1049 = arith.addi %1010, %c2_i32_481 : i32
    %1050 = arith.index_cast %1049 : i32 to index
    %c0_482 = arith.constant 0 : index
    %1051 = vector.load %arg3[%1050, %c0_482] : memref<32x8xf32, #tpu.memory_space<vmem>>, vector<2x8xf32>
    tpu.vector_store %arg3[%1050, %c0_482], %1045 {strides = array<i32>} : memref<32x8xf32, #tpu.memory_space<vmem>>, vector<2x8xf32>,
    %c9_i32_483 = arith.constant 9 : i32
    %c2_i32_484 = arith.constant 2 : i32
    %1052 = arith.muli %c9_i32_483, %c2_i32_484 : i32
    %1053 = tpu.assume_multiple %1052, 2 : i32
    %c0_i32_485 = arith.constant 0 : i32
    %1054 = vector.broadcast %c0_i32_485 : i32 to vector<2x8xi32>
    %1055 = arith.cmpi slt, %1024, %1054 : vector<2x8xi32>
    %c-1_i32_486 = arith.constant -1 : i32
    %c1_i32_487 = arith.constant 1 : i32
    %1056 = vector.broadcast %c-1_i32_486 : i32 to vector<2x8xi32>
    %1057 = vector.broadcast %c1_i32_487 : i32 to vector<2x8xi32>
    %1058 = arith.select %1055, %1056, %1057 : vector<2x8xi1>, vector<2x8xi32>
    %1059 = math.absi %1024 : vector<2x8xi32>
    %c3072_i32_488 = arith.constant 3072 : i32
    %1060 = vector.broadcast %c3072_i32_488 : i32 to vector<2x8xi32>
    %1061 = arith.muli %1059, %1060 : vector<2x8xi32>
    %c12_i32_489 = arith.constant 12 : i32
    %1062 = vector.broadcast %c12_i32_489 : i32 to vector<2x8xi32>
    %1063 = arith.shrui %1061, %1062 : vector<2x8xi32>
    %1064 = arith.muli %1058, %1063 : vector<2x8xi32>
    %1065 = arith.index_cast %1053 : i32 to index
    %c0_490 = arith.constant 0 : index
    %1066 = vector.load %arg6[%1065, %c0_490] : memref<32x8xi32, #tpu.memory_space<vmem>>, vector<2x8xi32>
    %1067 = arith.addi %1064, %1066 : vector<2x8xi32>
    %c0_i32_491 = arith.constant 0 : i32
    %1068 = vector.broadcast %c0_i32_491 : i32 to vector<2x8xi32>
    %1069 = arith.cmpi eq, %1048, %1068 : vector<2x8xi32>
    %c0_i32_492 = arith.constant 0 : i32
    %1070 = vector.broadcast %c0_i32_492 : i32 to vector<2x8xi32>
    %1071 = arith.cmpi slt, %1047, %1070 : vector<2x8xi32>
    %c-1_i32_493 = arith.constant -1 : i32
    %c1_i32_494 = arith.constant 1 : i32
    %1072 = vector.broadcast %c-1_i32_493 : i32 to vector<2x8xi32>
    %1073 = vector.broadcast %c1_i32_494 : i32 to vector<2x8xi32>
    %1074 = arith.select %1071, %1072, %1073 : vector<2x8xi1>, vector<2x8xi32>
    %1075 = math.absi %1047 : vector<2x8xi32>
    %c3968_i32_495 = arith.constant 3968 : i32
    %1076 = vector.broadcast %c3968_i32_495 : i32 to vector<2x8xi32>
    %1077 = arith.muli %1075, %1076 : vector<2x8xi32>
    %c12_i32_496 = arith.constant 12 : i32
    %1078 = vector.broadcast %c12_i32_496 : i32 to vector<2x8xi32>
    %1079 = arith.shrui %1077, %1078 : vector<2x8xi32>
    %1080 = arith.muli %1074, %1079 : vector<2x8xi32>
    %1081 = arith.addi %1080, %1067 : vector<2x8xi32>
    %1082 = arith.select %1069, %1081, %1047 : vector<2x8xi1>, vector<2x8xi32>
    %c5120_i32_497 = arith.constant 5120 : i32
    %1083 = vector.broadcast %c5120_i32_497 : i32 to vector<2x8xi32>
    %1084 = arith.cmpi sge, %1082, %1083 : vector<2x8xi32>
    %1085 = arith.andi %1069, %1084 : vector<2x8xi1>
    %cst_498 = arith.constant 1.000000e+00 : f32
    %cst_499 = arith.constant 0.000000e+00 : f32
    %1086 = vector.broadcast %cst_498 : f32 to vector<2x8xf32>
    %1087 = vector.broadcast %cst_499 : f32 to vector<2x8xf32>
    %1088 = arith.select %1085, %1086, %1087 : vector<2x8xi1>, vector<2x8xf32>
    %c0_i32_500 = arith.constant 0 : i32
    %1089 = vector.broadcast %c0_i32_500 : i32 to vector<2x8xi32>
    %1090 = arith.select %1085, %1089, %1082 : vector<2x8xi1>, vector<2x8xi32>
    %1091 = arith.extui %1085 : vector<2x8xi1> to vector<2x8xi32>
    %c2_i32_501 = arith.constant 2 : i32
    %1092 = arith.addi %1053, %c2_i32_501 : i32
    %1093 = arith.index_cast %1092 : i32 to index
    %c0_502 = arith.constant 0 : index
    %1094 = vector.load %arg3[%1093, %c0_502] : memref<32x8xf32, #tpu.memory_space<vmem>>, vector<2x8xf32>
    tpu.vector_store %arg3[%1093, %c0_502], %1088 {strides = array<i32>} : memref<32x8xf32, #tpu.memory_space<vmem>>, vector<2x8xf32>,
    %c10_i32_503 = arith.constant 10 : i32
    %c2_i32_504 = arith.constant 2 : i32
    %1095 = arith.muli %c10_i32_503, %c2_i32_504 : i32
    %1096 = tpu.assume_multiple %1095, 2 : i32
    %c0_i32_505 = arith.constant 0 : i32
    %1097 = vector.broadcast %c0_i32_505 : i32 to vector<2x8xi32>
    %1098 = arith.cmpi slt, %1067, %1097 : vector<2x8xi32>
    %c-1_i32_506 = arith.constant -1 : i32
    %c1_i32_507 = arith.constant 1 : i32
    %1099 = vector.broadcast %c-1_i32_506 : i32 to vector<2x8xi32>
    %1100 = vector.broadcast %c1_i32_507 : i32 to vector<2x8xi32>
    %1101 = arith.select %1098, %1099, %1100 : vector<2x8xi1>, vector<2x8xi32>
    %1102 = math.absi %1067 : vector<2x8xi32>
    %c3072_i32_508 = arith.constant 3072 : i32
    %1103 = vector.broadcast %c3072_i32_508 : i32 to vector<2x8xi32>
    %1104 = arith.muli %1102, %1103 : vector<2x8xi32>
    %c12_i32_509 = arith.constant 12 : i32
    %1105 = vector.broadcast %c12_i32_509 : i32 to vector<2x8xi32>
    %1106 = arith.shrui %1104, %1105 : vector<2x8xi32>
    %1107 = arith.muli %1101, %1106 : vector<2x8xi32>
    %1108 = arith.index_cast %1096 : i32 to index
    %c0_510 = arith.constant 0 : index
    %1109 = vector.load %arg6[%1108, %c0_510] : memref<32x8xi32, #tpu.memory_space<vmem>>, vector<2x8xi32>
    %1110 = arith.addi %1107, %1109 : vector<2x8xi32>
    %c0_i32_511 = arith.constant 0 : i32
    %1111 = vector.broadcast %c0_i32_511 : i32 to vector<2x8xi32>
    %1112 = arith.cmpi eq, %1091, %1111 : vector<2x8xi32>
    %c0_i32_512 = arith.constant 0 : i32
    %1113 = vector.broadcast %c0_i32_512 : i32 to vector<2x8xi32>
    %1114 = arith.cmpi slt, %1090, %1113 : vector<2x8xi32>
    %c-1_i32_513 = arith.constant -1 : i32
    %c1_i32_514 = arith.constant 1 : i32
    %1115 = vector.broadcast %c-1_i32_513 : i32 to vector<2x8xi32>
    %1116 = vector.broadcast %c1_i32_514 : i32 to vector<2x8xi32>
    %1117 = arith.select %1114, %1115, %1116 : vector<2x8xi1>, vector<2x8xi32>
    %1118 = math.absi %1090 : vector<2x8xi32>
    %c3968_i32_515 = arith.constant 3968 : i32
    %1119 = vector.broadcast %c3968_i32_515 : i32 to vector<2x8xi32>
    %1120 = arith.muli %1118, %1119 : vector<2x8xi32>
    %c12_i32_516 = arith.constant 12 : i32
    %1121 = vector.broadcast %c12_i32_516 : i32 to vector<2x8xi32>
    %1122 = arith.shrui %1120, %1121 : vector<2x8xi32>
    %1123 = arith.muli %1117, %1122 : vector<2x8xi32>
    %1124 = arith.addi %1123, %1110 : vector<2x8xi32>
    %1125 = arith.select %1112, %1124, %1090 : vector<2x8xi1>, vector<2x8xi32>
    %c5120_i32_517 = arith.constant 5120 : i32
    %1126 = vector.broadcast %c5120_i32_517 : i32 to vector<2x8xi32>
    %1127 = arith.cmpi sge, %1125, %1126 : vector<2x8xi32>
    %1128 = arith.andi %1112, %1127 : vector<2x8xi1>
    %cst_518 = arith.constant 1.000000e+00 : f32
    %cst_519 = arith.constant 0.000000e+00 : f32
    %1129 = vector.broadcast %cst_518 : f32 to vector<2x8xf32>
    %1130 = vector.broadcast %cst_519 : f32 to vector<2x8xf32>
    %1131 = arith.select %1128, %1129, %1130 : vector<2x8xi1>, vector<2x8xf32>
    %c0_i32_520 = arith.constant 0 : i32
    %1132 = vector.broadcast %c0_i32_520 : i32 to vector<2x8xi32>
    %1133 = arith.select %1128, %1132, %1125 : vector<2x8xi1>, vector<2x8xi32>
    %1134 = arith.extui %1128 : vector<2x8xi1> to vector<2x8xi32>
    %c2_i32_521 = arith.constant 2 : i32
    %1135 = arith.addi %1096, %c2_i32_521 : i32
    %1136 = arith.index_cast %1135 : i32 to index
    %c0_522 = arith.constant 0 : index
    %1137 = vector.load %arg3[%1136, %c0_522] : memref<32x8xf32, #tpu.memory_space<vmem>>, vector<2x8xf32>
    tpu.vector_store %arg3[%1136, %c0_522], %1131 {strides = array<i32>} : memref<32x8xf32, #tpu.memory_space<vmem>>, vector<2x8xf32>,
    %c11_i32_523 = arith.constant 11 : i32
    %c2_i32_524 = arith.constant 2 : i32
    %1138 = arith.muli %c11_i32_523, %c2_i32_524 : i32
    %1139 = tpu.assume_multiple %1138, 2 : i32
    %c0_i32_525 = arith.constant 0 : i32
    %1140 = vector.broadcast %c0_i32_525 : i32 to vector<2x8xi32>
    %1141 = arith.cmpi slt, %1110, %1140 : vector<2x8xi32>
    %c-1_i32_526 = arith.constant -1 : i32
    %c1_i32_527 = arith.constant 1 : i32
    %1142 = vector.broadcast %c-1_i32_526 : i32 to vector<2x8xi32>
    %1143 = vector.broadcast %c1_i32_527 : i32 to vector<2x8xi32>
    %1144 = arith.select %1141, %1142, %1143 : vector<2x8xi1>, vector<2x8xi32>
    %1145 = math.absi %1110 : vector<2x8xi32>
    %c3072_i32_528 = arith.constant 3072 : i32
    %1146 = vector.broadcast %c3072_i32_528 : i32 to vector<2x8xi32>
    %1147 = arith.muli %1145, %1146 : vector<2x8xi32>
    %c12_i32_529 = arith.constant 12 : i32
    %1148 = vector.broadcast %c12_i32_529 : i32 to vector<2x8xi32>
    %1149 = arith.shrui %1147, %1148 : vector<2x8xi32>
    %1150 = arith.muli %1144, %1149 : vector<2x8xi32>
    %1151 = arith.index_cast %1139 : i32 to index
    %c0_530 = arith.constant 0 : index
    %1152 = vector.load %arg6[%1151, %c0_530] : memref<32x8xi32, #tpu.memory_space<vmem>>, vector<2x8xi32>
    %1153 = arith.addi %1150, %1152 : vector<2x8xi32>
    %c0_i32_531 = arith.constant 0 : i32
    %1154 = vector.broadcast %c0_i32_531 : i32 to vector<2x8xi32>
    %1155 = arith.cmpi eq, %1134, %1154 : vector<2x8xi32>
    %c0_i32_532 = arith.constant 0 : i32
    %1156 = vector.broadcast %c0_i32_532 : i32 to vector<2x8xi32>
    %1157 = arith.cmpi slt, %1133, %1156 : vector<2x8xi32>
    %c-1_i32_533 = arith.constant -1 : i32
    %c1_i32_534 = arith.constant 1 : i32
    %1158 = vector.broadcast %c-1_i32_533 : i32 to vector<2x8xi32>
    %1159 = vector.broadcast %c1_i32_534 : i32 to vector<2x8xi32>
    %1160 = arith.select %1157, %1158, %1159 : vector<2x8xi1>, vector<2x8xi32>
    %1161 = math.absi %1133 : vector<2x8xi32>
    %c3968_i32_535 = arith.constant 3968 : i32
    %1162 = vector.broadcast %c3968_i32_535 : i32 to vector<2x8xi32>
    %1163 = arith.muli %1161, %1162 : vector<2x8xi32>
    %c12_i32_536 = arith.constant 12 : i32
    %1164 = vector.broadcast %c12_i32_536 : i32 to vector<2x8xi32>
    %1165 = arith.shrui %1163, %1164 : vector<2x8xi32>
    %1166 = arith.muli %1160, %1165 : vector<2x8xi32>
    %1167 = arith.addi %1166, %1153 : vector<2x8xi32>
    %1168 = arith.select %1155, %1167, %1133 : vector<2x8xi1>, vector<2x8xi32>
    %c5120_i32_537 = arith.constant 5120 : i32
    %1169 = vector.broadcast %c5120_i32_537 : i32 to vector<2x8xi32>
    %1170 = arith.cmpi sge, %1168, %1169 : vector<2x8xi32>
    %1171 = arith.andi %1155, %1170 : vector<2x8xi1>
    %cst_538 = arith.constant 1.000000e+00 : f32
    %cst_539 = arith.constant 0.000000e+00 : f32
    %1172 = vector.broadcast %cst_538 : f32 to vector<2x8xf32>
    %1173 = vector.broadcast %cst_539 : f32 to vector<2x8xf32>
    %1174 = arith.select %1171, %1172, %1173 : vector<2x8xi1>, vector<2x8xf32>
    %c0_i32_540 = arith.constant 0 : i32
    %1175 = vector.broadcast %c0_i32_540 : i32 to vector<2x8xi32>
    %1176 = arith.select %1171, %1175, %1168 : vector<2x8xi1>, vector<2x8xi32>
    %1177 = arith.extui %1171 : vector<2x8xi1> to vector<2x8xi32>
    %c2_i32_541 = arith.constant 2 : i32
    %1178 = arith.addi %1139, %c2_i32_541 : i32
    %1179 = arith.index_cast %1178 : i32 to index
    %c0_542 = arith.constant 0 : index
    %1180 = vector.load %arg3[%1179, %c0_542] : memref<32x8xf32, #tpu.memory_space<vmem>>, vector<2x8xf32>
    tpu.vector_store %arg3[%1179, %c0_542], %1174 {strides = array<i32>} : memref<32x8xf32, #tpu.memory_space<vmem>>, vector<2x8xf32>,
    %c12_i32_543 = arith.constant 12 : i32
    %c2_i32_544 = arith.constant 2 : i32
    %1181 = arith.muli %c12_i32_543, %c2_i32_544 : i32
    %1182 = tpu.assume_multiple %1181, 2 : i32
    %c0_i32_545 = arith.constant 0 : i32
    %1183 = vector.broadcast %c0_i32_545 : i32 to vector<2x8xi32>
    %1184 = arith.cmpi slt, %1153, %1183 : vector<2x8xi32>
    %c-1_i32_546 = arith.constant -1 : i32
    %c1_i32_547 = arith.constant 1 : i32
    %1185 = vector.broadcast %c-1_i32_546 : i32 to vector<2x8xi32>
    %1186 = vector.broadcast %c1_i32_547 : i32 to vector<2x8xi32>
    %1187 = arith.select %1184, %1185, %1186 : vector<2x8xi1>, vector<2x8xi32>
    %1188 = math.absi %1153 : vector<2x8xi32>
    %c3072_i32_548 = arith.constant 3072 : i32
    %1189 = vector.broadcast %c3072_i32_548 : i32 to vector<2x8xi32>
    %1190 = arith.muli %1188, %1189 : vector<2x8xi32>
    %c12_i32_549 = arith.constant 12 : i32
    %1191 = vector.broadcast %c12_i32_549 : i32 to vector<2x8xi32>
    %1192 = arith.shrui %1190, %1191 : vector<2x8xi32>
    %1193 = arith.muli %1187, %1192 : vector<2x8xi32>
    %1194 = arith.index_cast %1182 : i32 to index
    %c0_550 = arith.constant 0 : index
    %1195 = vector.load %arg6[%1194, %c0_550] : memref<32x8xi32, #tpu.memory_space<vmem>>, vector<2x8xi32>
    %1196 = arith.addi %1193, %1195 : vector<2x8xi32>
    %c0_i32_551 = arith.constant 0 : i32
    %1197 = vector.broadcast %c0_i32_551 : i32 to vector<2x8xi32>
    %1198 = arith.cmpi eq, %1177, %1197 : vector<2x8xi32>
    %c0_i32_552 = arith.constant 0 : i32
    %1199 = vector.broadcast %c0_i32_552 : i32 to vector<2x8xi32>
    %1200 = arith.cmpi slt, %1176, %1199 : vector<2x8xi32>
    %c-1_i32_553 = arith.constant -1 : i32
    %c1_i32_554 = arith.constant 1 : i32
    %1201 = vector.broadcast %c-1_i32_553 : i32 to vector<2x8xi32>
    %1202 = vector.broadcast %c1_i32_554 : i32 to vector<2x8xi32>
    %1203 = arith.select %1200, %1201, %1202 : vector<2x8xi1>, vector<2x8xi32>
    %1204 = math.absi %1176 : vector<2x8xi32>
    %c3968_i32_555 = arith.constant 3968 : i32
    %1205 = vector.broadcast %c3968_i32_555 : i32 to vector<2x8xi32>
    %1206 = arith.muli %1204, %1205 : vector<2x8xi32>
    %c12_i32_556 = arith.constant 12 : i32
    %1207 = vector.broadcast %c12_i32_556 : i32 to vector<2x8xi32>
    %1208 = arith.shrui %1206, %1207 : vector<2x8xi32>
    %1209 = arith.muli %1203, %1208 : vector<2x8xi32>
    %1210 = arith.addi %1209, %1196 : vector<2x8xi32>
    %1211 = arith.select %1198, %1210, %1176 : vector<2x8xi1>, vector<2x8xi32>
    %c5120_i32_557 = arith.constant 5120 : i32
    %1212 = vector.broadcast %c5120_i32_557 : i32 to vector<2x8xi32>
    %1213 = arith.cmpi sge, %1211, %1212 : vector<2x8xi32>
    %1214 = arith.andi %1198, %1213 : vector<2x8xi1>
    %cst_558 = arith.constant 1.000000e+00 : f32
    %cst_559 = arith.constant 0.000000e+00 : f32
    %1215 = vector.broadcast %cst_558 : f32 to vector<2x8xf32>
    %1216 = vector.broadcast %cst_559 : f32 to vector<2x8xf32>
    %1217 = arith.select %1214, %1215, %1216 : vector<2x8xi1>, vector<2x8xf32>
    %c0_i32_560 = arith.constant 0 : i32
    %1218 = vector.broadcast %c0_i32_560 : i32 to vector<2x8xi32>
    %1219 = arith.select %1214, %1218, %1211 : vector<2x8xi1>, vector<2x8xi32>
    %1220 = arith.extui %1214 : vector<2x8xi1> to vector<2x8xi32>
    %c2_i32_561 = arith.constant 2 : i32
    %1221 = arith.addi %1182, %c2_i32_561 : i32
    %1222 = arith.index_cast %1221 : i32 to index
    %c0_562 = arith.constant 0 : index
    %1223 = vector.load %arg3[%1222, %c0_562] : memref<32x8xf32, #tpu.memory_space<vmem>>, vector<2x8xf32>
    tpu.vector_store %arg3[%1222, %c0_562], %1217 {strides = array<i32>} : memref<32x8xf32, #tpu.memory_space<vmem>>, vector<2x8xf32>,
    %c13_i32_563 = arith.constant 13 : i32
    %c2_i32_564 = arith.constant 2 : i32
    %1224 = arith.muli %c13_i32_563, %c2_i32_564 : i32
    %1225 = tpu.assume_multiple %1224, 2 : i32
    %c0_i32_565 = arith.constant 0 : i32
    %1226 = vector.broadcast %c0_i32_565 : i32 to vector<2x8xi32>
    %1227 = arith.cmpi slt, %1196, %1226 : vector<2x8xi32>
    %c-1_i32_566 = arith.constant -1 : i32
    %c1_i32_567 = arith.constant 1 : i32
    %1228 = vector.broadcast %c-1_i32_566 : i32 to vector<2x8xi32>
    %1229 = vector.broadcast %c1_i32_567 : i32 to vector<2x8xi32>
    %1230 = arith.select %1227, %1228, %1229 : vector<2x8xi1>, vector<2x8xi32>
    %1231 = math.absi %1196 : vector<2x8xi32>
    %c3072_i32_568 = arith.constant 3072 : i32
    %1232 = vector.broadcast %c3072_i32_568 : i32 to vector<2x8xi32>
    %1233 = arith.muli %1231, %1232 : vector<2x8xi32>
    %c12_i32_569 = arith.constant 12 : i32
    %1234 = vector.broadcast %c12_i32_569 : i32 to vector<2x8xi32>
    %1235 = arith.shrui %1233, %1234 : vector<2x8xi32>
    %1236 = arith.muli %1230, %1235 : vector<2x8xi32>
    %1237 = arith.index_cast %1225 : i32 to index
    %c0_570 = arith.constant 0 : index
    %1238 = vector.load %arg6[%1237, %c0_570] : memref<32x8xi32, #tpu.memory_space<vmem>>, vector<2x8xi32>
    %1239 = arith.addi %1236, %1238 : vector<2x8xi32>
    %c0_i32_571 = arith.constant 0 : i32
    %1240 = vector.broadcast %c0_i32_571 : i32 to vector<2x8xi32>
    %1241 = arith.cmpi eq, %1220, %1240 : vector<2x8xi32>
    %c0_i32_572 = arith.constant 0 : i32
    %1242 = vector.broadcast %c0_i32_572 : i32 to vector<2x8xi32>
    %1243 = arith.cmpi slt, %1219, %1242 : vector<2x8xi32>
    %c-1_i32_573 = arith.constant -1 : i32
    %c1_i32_574 = arith.constant 1 : i32
    %1244 = vector.broadcast %c-1_i32_573 : i32 to vector<2x8xi32>
    %1245 = vector.broadcast %c1_i32_574 : i32 to vector<2x8xi32>
    %1246 = arith.select %1243, %1244, %1245 : vector<2x8xi1>, vector<2x8xi32>
    %1247 = math.absi %1219 : vector<2x8xi32>
    %c3968_i32_575 = arith.constant 3968 : i32
    %1248 = vector.broadcast %c3968_i32_575 : i32 to vector<2x8xi32>
    %1249 = arith.muli %1247, %1248 : vector<2x8xi32>
    %c12_i32_576 = arith.constant 12 : i32
    %1250 = vector.broadcast %c12_i32_576 : i32 to vector<2x8xi32>
    %1251 = arith.shrui %1249, %1250 : vector<2x8xi32>
    %1252 = arith.muli %1246, %1251 : vector<2x8xi32>
    %1253 = arith.addi %1252, %1239 : vector<2x8xi32>
    %1254 = arith.select %1241, %1253, %1219 : vector<2x8xi1>, vector<2x8xi32>
    %c5120_i32_577 = arith.constant 5120 : i32
    %1255 = vector.broadcast %c5120_i32_577 : i32 to vector<2x8xi32>
    %1256 = arith.cmpi sge, %1254, %1255 : vector<2x8xi32>
    %1257 = arith.andi %1241, %1256 : vector<2x8xi1>
    %cst_578 = arith.constant 1.000000e+00 : f32
    %cst_579 = arith.constant 0.000000e+00 : f32
    %1258 = vector.broadcast %cst_578 : f32 to vector<2x8xf32>
    %1259 = vector.broadcast %cst_579 : f32 to vector<2x8xf32>
    %1260 = arith.select %1257, %1258, %1259 : vector<2x8xi1>, vector<2x8xf32>
    %c0_i32_580 = arith.constant 0 : i32
    %1261 = vector.broadcast %c0_i32_580 : i32 to vector<2x8xi32>
    %1262 = arith.select %1257, %1261, %1254 : vector<2x8xi1>, vector<2x8xi32>
    %1263 = arith.extui %1257 : vector<2x8xi1> to vector<2x8xi32>
    %c2_i32_581 = arith.constant 2 : i32
    %1264 = arith.addi %1225, %c2_i32_581 : i32
    %1265 = arith.index_cast %1264 : i32 to index
    %c0_582 = arith.constant 0 : index
    %1266 = vector.load %arg3[%1265, %c0_582] : memref<32x8xf32, #tpu.memory_space<vmem>>, vector<2x8xf32>
    tpu.vector_store %arg3[%1265, %c0_582], %1260 {strides = array<i32>} : memref<32x8xf32, #tpu.memory_space<vmem>>, vector<2x8xf32>,
    %c14_i32_583 = arith.constant 14 : i32
    %c2_i32_584 = arith.constant 2 : i32
    %1267 = arith.muli %c14_i32_583, %c2_i32_584 : i32
    %1268 = tpu.assume_multiple %1267, 2 : i32
    %c0_i32_585 = arith.constant 0 : i32
    %1269 = vector.broadcast %c0_i32_585 : i32 to vector<2x8xi32>
    %1270 = arith.cmpi slt, %1239, %1269 : vector<2x8xi32>
    %c-1_i32_586 = arith.constant -1 : i32
    %c1_i32_587 = arith.constant 1 : i32
    %1271 = vector.broadcast %c-1_i32_586 : i32 to vector<2x8xi32>
    %1272 = vector.broadcast %c1_i32_587 : i32 to vector<2x8xi32>
    %1273 = arith.select %1270, %1271, %1272 : vector<2x8xi1>, vector<2x8xi32>
    %1274 = math.absi %1239 : vector<2x8xi32>
    %c3072_i32_588 = arith.constant 3072 : i32
    %1275 = vector.broadcast %c3072_i32_588 : i32 to vector<2x8xi32>
    %1276 = arith.muli %1274, %1275 : vector<2x8xi32>
    %c12_i32_589 = arith.constant 12 : i32
    %1277 = vector.broadcast %c12_i32_589 : i32 to vector<2x8xi32>
    %1278 = arith.shrui %1276, %1277 : vector<2x8xi32>
    %1279 = arith.muli %1273, %1278 : vector<2x8xi32>
    %1280 = arith.index_cast %1268 : i32 to index
    %c0_590 = arith.constant 0 : index
    %1281 = vector.load %arg6[%1280, %c0_590] : memref<32x8xi32, #tpu.memory_space<vmem>>, vector<2x8xi32>
    %1282 = arith.addi %1279, %1281 : vector<2x8xi32>
    %c0_i32_591 = arith.constant 0 : i32
    %1283 = vector.broadcast %c0_i32_591 : i32 to vector<2x8xi32>
    %1284 = arith.cmpi eq, %1263, %1283 : vector<2x8xi32>
    %c0_i32_592 = arith.constant 0 : i32
    %1285 = vector.broadcast %c0_i32_592 : i32 to vector<2x8xi32>
    %1286 = arith.cmpi slt, %1262, %1285 : vector<2x8xi32>
    %c-1_i32_593 = arith.constant -1 : i32
    %c1_i32_594 = arith.constant 1 : i32
    %1287 = vector.broadcast %c-1_i32_593 : i32 to vector<2x8xi32>
    %1288 = vector.broadcast %c1_i32_594 : i32 to vector<2x8xi32>
    %1289 = arith.select %1286, %1287, %1288 : vector<2x8xi1>, vector<2x8xi32>
    %1290 = math.absi %1262 : vector<2x8xi32>
    %c3968_i32_595 = arith.constant 3968 : i32
    %1291 = vector.broadcast %c3968_i32_595 : i32 to vector<2x8xi32>
    %1292 = arith.muli %1290, %1291 : vector<2x8xi32>
    %c12_i32_596 = arith.constant 12 : i32
    %1293 = vector.broadcast %c12_i32_596 : i32 to vector<2x8xi32>
    %1294 = arith.shrui %1292, %1293 : vector<2x8xi32>
    %1295 = arith.muli %1289, %1294 : vector<2x8xi32>
    %1296 = arith.addi %1295, %1282 : vector<2x8xi32>
    %1297 = arith.select %1284, %1296, %1262 : vector<2x8xi1>, vector<2x8xi32>
    %c5120_i32_597 = arith.constant 5120 : i32
    %1298 = vector.broadcast %c5120_i32_597 : i32 to vector<2x8xi32>
    %1299 = arith.cmpi sge, %1297, %1298 : vector<2x8xi32>
    %1300 = arith.andi %1284, %1299 : vector<2x8xi1>
    %cst_598 = arith.constant 1.000000e+00 : f32
    %cst_599 = arith.constant 0.000000e+00 : f32
    %1301 = vector.broadcast %cst_598 : f32 to vector<2x8xf32>
    %1302 = vector.broadcast %cst_599 : f32 to vector<2x8xf32>
    %1303 = arith.select %1300, %1301, %1302 : vector<2x8xi1>, vector<2x8xf32>
    %c0_i32_600 = arith.constant 0 : i32
    %1304 = vector.broadcast %c0_i32_600 : i32 to vector<2x8xi32>
    %1305 = arith.select %1300, %1304, %1297 : vector<2x8xi1>, vector<2x8xi32>
    %1306 = arith.extui %1300 : vector<2x8xi1> to vector<2x8xi32>
    %c2_i32_601 = arith.constant 2 : i32
    %1307 = arith.addi %1268, %c2_i32_601 : i32
    %1308 = arith.index_cast %1307 : i32 to index
    %c0_602 = arith.constant 0 : index
    %1309 = vector.load %arg3[%1308, %c0_602] : memref<32x8xf32, #tpu.memory_space<vmem>>, vector<2x8xf32>
    tpu.vector_store %arg3[%1308, %c0_602], %1303 {strides = array<i32>} : memref<32x8xf32, #tpu.memory_space<vmem>>, vector<2x8xf32>,
    %c15_i32_603 = arith.constant 15 : i32
    return
  }
}

</mosaic_0001>

<llo_original>
// kernel: tpu_custom_call.1
$region0: #{tpu_custom_call.1}
  #allocation0 [shape = 'u32[]', space=smem, size = 0x4, offset = 0x4, fixed_abs, tag = 'smem constant byte address 0x4 - core index']
  #allocation1 [shape = 'u32[144,128]{1,0:T(1,128)}', space=vmem, size = 0x12000, scoped, tag = 'internal scratch']
  #allocation2 [shape = 's32[32,32]{1,0:T(8,128)}', space=vmem, size = 0x4000, scoped, tag = 'scratch operand']
  #allocation3 [shape = 'f32[32,32]{1,0:T(8,128)}', space=vmem, size = 0x4000, scoped, tag = 'scratch operand']
  #allocation4 [shape = 's32[32,8]{1,0:T(8,128)}', space=vmem, size = 0x4000, scoped, tag = 'scratch operand']
  %s0 = inlined_call_operand.vmem [shape: f32[32,64], index: 0, kind: input, shape index: {}]
  %s1 = inlined_call_operand.vmem [shape: f32[64,32], index: 1, kind: input, shape index: {}]
  %s2 = inlined_call_operand.vmem [shape: f32[32,8], index: 2, kind: input, shape index: {}]
  %s3 = inlined_call_operand.vmem [shape: f32[32,8], index: 3, kind: output, shape index: {}]
  %s4 = sld [smem:[#allocation0]]
  $region22: #{tpu_custom_call.1} parent=0
    _
  %s6 = ssub.s32 1, %s4
  %s7 = scalar_select 0, %s6, %s4
  // Predicated region
  $region2: #{tpu_custom_call.1} parent=0 // pred_check
    _
  $region3: #{tpu_custom_call.1} parent=0 // pred_check_branch
    %9 = sbr.rel (0) target = $region5
  $region4: #{tpu_custom_call.1} parent=0 // pred_region
    _
  $region5: #{tpu_custom_call.1} parent=0 // pred_fallthru
    _
  // Predicated region
  $region6: #{tpu_custom_call.1} parent=0 // pred_check
    _
  $region7: #{tpu_custom_call.1} parent=0 // pred_check_branch
    %11 = sbr.rel (0) target = $region9
  $region8: #{tpu_custom_call.1} parent=0 // pred_region
    _
  $region9: #{tpu_custom_call.1} parent=0 // pred_fallthru
    _
  // Predicated region
  $region10: #{tpu_custom_call.1} parent=0 // pred_check
    _
  $region11: #{tpu_custom_call.1} parent=0 // pred_check_branch
    %13 = sbr.rel (0) target = $region13
  $region12: #{tpu_custom_call.1} parent=0 // pred_region
    _
  $region13: #{tpu_custom_call.1} parent=0 // pred_fallthru
    _
  %v14 = vld [vmem:[%s0] sm:$0xff]
  %v15 = vld [vmem:[%s0 + $0x8] sm:$0xff]
  %v16 = vld [vmem:[%s0 + $0x10] sm:$0xff]
  %v17 = vld [vmem:[%s0 + $0x18] sm:$0xff]
  %v18 = vld [vmem:[%s1] sm:$0xff]
  %v19 = vld [vmem:[%s1 + $0x8] sm:$0xff]
  %v20 = vld [vmem:[%s1 + $0x10] sm:$0xff]
  %v21 = vld [vmem:[%s1 + $0x18] sm:$0xff]
  %v22 = vld [vmem:[%s1 + $0x20] sm:$0xff]
  %v23 = vld [vmem:[%s1 + $0x28] sm:$0xff]
  %v24 = vld [vmem:[%s1 + $0x30] sm:$0xff]
  %v25 = vld [vmem:[%s1 + $0x38] sm:$0xff]
  %vm26 = vcmask 523264
  %v28 = vsel %vm26, %v14, 0
  %v31 = vsel %vm26, %v15, 0
  %v34 = vsel %vm26, %v16, 0
  %v37 = vsel %vm26, %v17, 0
  %39 = vmatprep.subr.mxu0 0.0
  %40 = vmatpush1.msra.mxu0 %v18
  %41 = vmatprep.subr.mxu0 0.0
  %42 = vmatpush1.msra.mxu0 %v19
  %43 = vmatprep.subr.mxu0 0.0
  %44 = vmatpush1.msra.mxu0 %v20
  %45 = vmatprep.subr.mxu0 0.0
  %46 = vmatpush1.msra.mxu0 %v21
  %47 = vmatprep.subr.mxu0 0.0
  %48 = vmatpush1.msra.mxu0 %v22
  %49 = vmatprep.subr.mxu0 0.0
  %50 = vmatpush1.msra.mxu0 %v23
  %51 = vmatprep.subr.mxu0 0.0
  %52 = vmatpush1.msra.mxu0 %v24
  %53 = vmatprep.subr.mxu0 0.0
  %54 = vmatpush1.msra.mxu0 %v25
  %55 = vmatprep.subr.mxu0 0.0
  %56 = vmatpush1.msra.mxu0 0.0
  %57 = vmatprep.subr.mxu0 0.0
  %58 = vmatpush1.msra.mxu0 0.0
  %59 = vmatprep.subr.mxu0 0.0
  %60 = vmatpush1.msra.mxu0 0.0
  %61 = vmatprep.subr.mxu0 0.0
  %62 = vmatpush1.msra.mxu0 0.0
  %63 = vmatprep.subr.mxu0 0.0
  %64 = vmatpush1.msra.mxu0 0.0
  %65 = vmatprep.subr.mxu0 0.0
  %66 = vmatpush1.msra.mxu0 0.0
  %67 = vmatprep.subr.mxu0 0.0
  %68 = vmatpush1.msra.mxu0 0.0
  %69 = vmatprep.subr.mxu0 0.0
  %70 = vmatpush1.msra.mxu0 0.0
  %71 = vmatprep.subr.mxu0 0.0
  %72 = vmatpush1.msra.mxu0 0.0
  %73 = vmatprep.subr.mxu0 0.0
  %74 = vmatpush1.msra.mxu0 0.0
  %75 = vmatprep.subr.mxu0 0.0
  %76 = vmatpush1.msra.mxu0 0.0
  %77 = vmatprep.subr.mxu0 0.0
  %78 = vmatpush1.msra.mxu0 0.0
  %79 = vmatprep.subr.mxu0 0.0
  %80 = vmatpush1.msra.mxu0 0.0
  %81 = vmatprep.subr.mxu0 0.0
  %82 = vmatpush1.msra.mxu0 0.0
  %83 = vmatprep.subr.mxu0 0.0
  %84 = vmatpush1.msra.mxu0 0.0
  %85 = vmatprep.subr.mxu0 0.0
  %86 = vmatpush1.msra.mxu0 0.0
  %87 = vmatprep.subr.mxu0 0.0
  %88 = vmatpush1.msra.mxu0 0.0
  %89 = vmatprep.subr.mxu0 0.0
  %90 = vmatpush1.msra.mxu0 0.0
  %91 = vmatprep.subr.mxu0 0.0
  %92 = vmatpush1.msra.mxu0 0.0
  %93 = vmatprep.subr.mxu0 0.0
  %94 = vmatpush1.msra.mxu0 0.0
  %95 = vmatprep.subr.mxu0 0.0
  %96 = vmatpush1.msra.mxu0 0.0
  %97 = vmatprep.subr.mxu0 0.0
  %98 = vmatpush1.msra.mxu0 0.0
  %99 = vmatprep.subr.mxu0 0.0
  %100 = vmatpush1.msra.mxu0 0.0
  %101 = vmatprep.subr.mxu0 0.0
  %102 = vmatpush1.msra.mxu0 0.0
  %103 = vmatprep.mubr.f32.mxu0 0.0
  %104 = vmatmul.mubr.f32.gmra.mrb[0].mxu0 %v28
  %v105 = vpop.f32.mrb[0].mxu0
  %v106 = vadd.f32 0.0, %v105
  %v107 = vpop.f32.mrb[0].mxu0
  %108 = vmatprep.mubr.f32.mxu0 0.0
  %109 = vmatmul.mubr.f32.gmra.mrb[0].mxu0 %v31
  %v110 = vpop.f32.mrb[0].mxu0
  %v111 = vadd.f32 0.0, %v110
  %v112 = vpop.f32.mrb[0].mxu0
  %113 = vmatprep.mubr.f32.mxu0 0.0
  %114 = vmatmul.mubr.f32.gmra.mrb[0].mxu0 %v34
  %v115 = vpop.f32.mrb[0].mxu0
  %v116 = vadd.f32 0.0, %v115
  %v117 = vpop.f32.mrb[0].mxu0
  %118 = vmatprep.mubr.f32.mxu0 0.0
  %119 = vmatmul.mubr.f32.gmra.mrb[0].mxu0 %v37
  %v120 = vpop.f32.mrb[0].mxu0
  %v121 = vadd.f32 0.0, %v120
  %v122 = vpop.f32.mrb[0].mxu0
  %123 = vdwg.mxu0
  %v124 = vmul.f32 %v106, 64.0
  %v125 = vmul.f32 %v111, 64.0
  %v126 = vmul.f32 %v116, 64.0
  %v127 = vmul.f32 %v121, 64.0
  %v128 = vcvt.f32.s32.to.zero.pseudo %v124
  %v129 = vcvt.f32.s32.to.zero.pseudo %v125
  %v130 = vcvt.f32.s32.to.zero.pseudo %v126
  %v131 = vcvt.f32.s32.to.zero.pseudo %v127
  %vm132 = vcmask 261120
  %133 = vst.msk [vmem:[#allocation2] sm:$0xff] %vm132, %v128
  %134 = vst.msk [vmem:[#allocation2 + $0x8] sm:$0xff] %vm132, %v129
  %135 = vst.msk [vmem:[#allocation2 + $0x10] sm:$0xff] %vm132, %v130
  %136 = vst.msk [vmem:[#allocation2 + $0x18] sm:$0xff] %vm132, %v131
  %vm137 = vcmask 254976
  %138 = vst.msk [vmem:[#allocation3] sm:$0x3] %vm137, 0.0
  %v139 = vld [vmem:[#allocation2] sm:$0x3]
  %vm140 = vcmp.ge.s32.totalorder %v139, 5120
  %v141 = vsel %vm140, 1.0, 0.0
  %v142 = vsel %vm140, 0, %v139
  %v143 = vsel %vm140, 1, 0
  %s144 = sadd.s32 0, 2
  %s145 = scalar_lea.vmem [#allocation3], %s144
  %146 = vst.msk [vmem:[%s145] sm:$0x3] %vm137, %v141
  %vm147 = vcmp.lt.s32.totalorder %v139, 0
  %v148 = vsel %vm147, 4294967295, 1
  %v149 = vsub.s32 0, %v139
  %v150 = vsel %vm147, %v149, %v139
  %v151 = vmul.u32 %v150, 3072
  %v152 = vshrl.u32 %v151, 12
  %v153 = vmul.u32 %v148, %v152
  %s154 = scalar_lea.vmem [#allocation2], 2
  %v155 = vld [vmem:[%s154] sm:$0x3]
  %v156 = vadd.s32 %v153, %v155
  %vm157 = vcmp.eq.s32.totalorder %v143, 0
  %vm158 = vcmp.lt.s32.totalorder %v142, 0
  %v159 = vsel %vm158, 4294967295, 1
  %v160 = vsub.s32 0, %v142
  %v161 = vsel %vm158, %v160, %v142
  %v162 = vmul.u32 %v161, 3968
  %v163 = vshrl.u32 %v162, 12
  %v164 = vmul.u32 %v159, %v163
  %v165 = vadd.s32 %v164, %v156
  %v166 = vsel %vm157, %v165, %v142
  %vm167 = vcmp.ge.s32.totalorder %v166, 5120
  %vm168 = vmand %vm157, %vm167
  %v169 = vsel %vm168, 1.0, 0.0
  %v170 = vsel %vm168, 0, %v166
  %v171 = vsel %vm168, 1, 0
  %s172 = sadd.s32 2, 2
  %s173 = scalar_lea.vmem [#allocation3], %s172
  %174 = vst.msk [vmem:[%s173] sm:$0x3] %vm137, %v169
  %vm175 = vcmp.lt.s32.totalorder %v156, 0
  %v176 = vsel %vm175, 4294967295, 1
  %v177 = vsub.s32 0, %v156
  %v178 = vsel %vm175, %v177, %v156
  %v179 = vmul.u32 %v178, 3072
  %v180 = vshrl.u32 %v179, 12
  %v181 = vmul.u32 %v176, %v180
  %s182 = scalar_lea.vmem [#allocation2], 4
  %v183 = vld [vmem:[%s182] sm:$0x3]
  %v184 = vadd.s32 %v181, %v183
  %vm185 = vcmp.eq.s32.totalorder %v171, 0
  %vm186 = vcmp.lt.s32.totalorder %v170, 0
  %v187 = vsel %vm186, 4294967295, 1
  %v188 = vsub.s32 0, %v170
  %v189 = vsel %vm186, %v188, %v170
  %v190 = vmul.u32 %v189, 3968
  %v191 = vshrl.u32 %v190, 12
  %v192 = vmul.u32 %v187, %v191
  %v193 = vadd.s32 %v192, %v184
  %v194 = vsel %vm185, %v193, %v170
  %vm195 = vcmp.ge.s32.totalorder %v194, 5120
  %vm196 = vmand %vm185, %vm195
  %v197 = vsel %vm196, 1.0, 0.0
  %v198 = vsel %vm196, 0, %v194
  %v199 = vsel %vm196, 1, 0
  %s200 = sadd.s32 4, 2
  %s201 = scalar_lea.vmem [#allocation3], %s200
  %202 = vst.msk [vmem:[%s201] sm:$0x3] %vm137, %v197
  %vm203 = vcmp.lt.s32.totalorder %v184, 0
  %v204 = vsel %vm203, 4294967295, 1
  %v205 = vsub.s32 0, %v184
  %v206 = vsel %vm203, %v205, %v184
  %v207 = vmul.u32 %v206, 3072
  %v208 = vshrl.u32 %v207, 12
  %v209 = vmul.u32 %v204, %v208
  %s210 = scalar_lea.vmem [#allocation2], 6
  %v211 = vld [vmem:[%s210] sm:$0x3]
  %v212 = vadd.s32 %v209, %v211
  %vm213 = vcmp.eq.s32.totalorder %v199, 0
  %vm214 = vcmp.lt.s32.totalorder %v198, 0
  %v215 = vsel %vm214, 4294967295, 1
  %v216 = vsub.s32 0, %v198
  %v217 = vsel %vm214, %v216, %v198
  %v218 = vmul.u32 %v217, 3968
  %v219 = vshrl.u32 %v218, 12
  %v220 = vmul.u32 %v215, %v219
  %v221 = vadd.s32 %v220, %v212
  %v222 = vsel %vm213, %v221, %v198
  %vm223 = vcmp.ge.s32.totalorder %v222, 5120
  %vm224 = vmand %vm213, %vm223
  %v225 = vsel %vm224, 1.0, 0.0
  %v226 = vsel %vm224, 0, %v222
  %v227 = vsel %vm224, 1, 0
  %s228 = sadd.s32 6, 2
  %s229 = scalar_lea.vmem [#allocation3], %s228
  %230 = vst.msk [vmem:[%s229] sm:$0x3] %vm137, %v225
  %vm231 = vcmp.lt.s32.totalorder %v212, 0
  %v232 = vsel %vm231, 4294967295, 1
  %v233 = vsub.s32 0, %v212
  %v234 = vsel %vm231, %v233, %v212
  %v235 = vmul.u32 %v234, 3072
  %v236 = vshrl.u32 %v235, 12
  %v237 = vmul.u32 %v232, %v236
  %s238 = scalar_lea.vmem [#allocation2], 8
  %v239 = vld [vmem:[%s238] sm:$0x3]
  %v240 = vadd.s32 %v237, %v239
  %vm241 = vcmp.eq.s32.totalorder %v227, 0
  %vm242 = vcmp.lt.s32.totalorder %v226, 0
  %v243 = vsel %vm242, 4294967295, 1
  %v244 = vsub.s32 0, %v226
  %v245 = vsel %vm242, %v244, %v226
  %v246 = vmul.u32 %v245, 3968
  %v247 = vshrl.u32 %v246, 12
  %v248 = vmul.u32 %v243, %v247
  %v249 = vadd.s32 %v248, %v240
  %v250 = vsel %vm241, %v249, %v226
  %vm251 = vcmp.ge.s32.totalorder %v250, 5120
  %vm252 = vmand %vm241, %vm251
  %v253 = vsel %vm252, 1.0, 0.0
  %v254 = vsel %vm252, 0, %v250
  %v255 = vsel %vm252, 1, 0
  %s256 = sadd.s32 8, 2
  %s257 = scalar_lea.vmem [#allocation3], %s256
  %258 = vst.msk [vmem:[%s257] sm:$0x3] %vm137, %v253
  %vm259 = vcmp.lt.s32.totalorder %v240, 0
  %v260 = vsel %vm259, 4294967295, 1
  %v261 = vsub.s32 0, %v240
  %v262 = vsel %vm259, %v261, %v240
  %v263 = vmul.u32 %v262, 3072
  %v264 = vshrl.u32 %v263, 12
  %v265 = vmul.u32 %v260, %v264
  %s266 = scalar_lea.vmem [#allocation2], 10
  %v267 = vld [vmem:[%s266] sm:$0x3]
  %v268 = vadd.s32 %v265, %v267
  %vm269 = vcmp.eq.s32.totalorder %v255, 0
  %vm270 = vcmp.lt.s32.totalorder %v254, 0
  %v271 = vsel %vm270, 4294967295, 1
  %v272 = vsub.s32 0, %v254
  %v273 = vsel %vm270, %v272, %v254
  %v274 = vmul.u32 %v273, 3968
  %v275 = vshrl.u32 %v274, 12
  %v276 = vmul.u32 %v271, %v275
  %v277 = vadd.s32 %v276, %v268
  %v278 = vsel %vm269, %v277, %v254
  %vm279 = vcmp.ge.s32.totalorder %v278, 5120
  %vm280 = vmand %vm269, %vm279
  %v281 = vsel %vm280, 1.0, 0.0
  %v282 = vsel %vm280, 0, %v278
  %v283 = vsel %vm280, 1, 0
  %s284 = sadd.s32 10, 2
  %s285 = scalar_lea.vmem [#allocation3], %s284
  %286 = vst.msk [vmem:[%s285] sm:$0x3] %vm137, %v281
  %vm287 = vcmp.lt.s32.totalorder %v268, 0
  %v288 = vsel %vm287, 4294967295, 1
  %v289 = vsub.s32 0, %v268
  %v290 = vsel %vm287, %v289, %v268
  %v291 = vmul.u32 %v290, 3072
  %v292 = vshrl.u32 %v291, 12
  %v293 = vmul.u32 %v288, %v292
  %s294 = scalar_lea.vmem [#allocation2], 12
  %v295 = vld [vmem:[%s294] sm:$0x3]
  %v296 = vadd.s32 %v293, %v295
  %vm297 = vcmp.eq.s32.totalorder %v283, 0
  %vm298 = vcmp.lt.s32.totalorder %v282, 0
  %v299 = vsel %vm298, 4294967295, 1
  %v300 = vsub.s32 0, %v282
  %v301 = vsel %vm298, %v300, %v282
  %v302 = vmul.u32 %v301, 3968
  %v303 = vshrl.u32 %v302, 12
  %v304 = vmul.u32 %v299, %v303
  %v305 = vadd.s32 %v304, %v296
  %v306 = vsel %vm297, %v305, %v282
  %vm307 = vcmp.ge.s32.totalorder %v306, 5120
  %vm308 = vmand %vm297, %vm307
  %v309 = vsel %vm308, 1.0, 0.0
  %v310 = vsel %vm308, 0, %v306
  %v311 = vsel %vm308, 1, 0
  %s312 = sadd.s32 12, 2
  %s313 = scalar_lea.vmem [#allocation3], %s312
  %314 = vst.msk [vmem:[%s313] sm:$0x3] %vm137, %v309
  %vm315 = vcmp.lt.s32.totalorder %v296, 0
  %v316 = vsel %vm315, 4294967295, 1
  %v317 = vsub.s32 0, %v296
  %v318 = vsel %vm315, %v317, %v296
  %v319 = vmul.u32 %v318, 3072
  %v320 = vshrl.u32 %v319, 12
  %v321 = vmul.u32 %v316, %v320
  %s322 = scalar_lea.vmem [#allocation2], 14
  %v323 = vld [vmem:[%s322] sm:$0x3]
  %v324 = vadd.s32 %v321, %v323
  %vm325 = vcmp.eq.s32.totalorder %v311, 0
  %vm326 = vcmp.lt.s32.totalorder %v310, 0
  %v327 = vsel %vm326, 4294967295, 1
  %v328 = vsub.s32 0, %v310
  %v329 = vsel %vm326, %v328, %v310
  %v330 = vmul.u32 %v329, 3968
  %v331 = vshrl.u32 %v330, 12
  %v332 = vmul.u32 %v327, %v331
  %v333 = vadd.s32 %v332, %v324
  %v334 = vsel %vm325, %v333, %v310
  %vm335 = vcmp.ge.s32.totalorder %v334, 5120
  %vm336 = vmand %vm325, %vm335
  %v337 = vsel %vm336, 1.0, 0.0
  %v338 = vsel %vm336, 0, %v334
  %v339 = vsel %vm336, 1, 0
  %s340 = sadd.s32 14, 2
  %s341 = scalar_lea.vmem [#allocation3], %s340
  %342 = vst.msk [vmem:[%s341] sm:$0x3] %vm137, %v337
  %vm343 = vcmp.lt.s32.totalorder %v324, 0
  %v344 = vsel %vm343, 4294967295, 1
  %v345 = vsub.s32 0, %v324
  %v346 = vsel %vm343, %v345, %v324
  %v347 = vmul.u32 %v346, 3072
  %v348 = vshrl.u32 %v347, 12
  %v349 = vmul.u32 %v344, %v348
  %s350 = scalar_lea.vmem [#allocation2], 16
  %v351 = vld [vmem:[%s350] sm:$0x3]
  %v352 = vadd.s32 %v349, %v351
  %vm353 = vcmp.eq.s32.totalorder %v339, 0
  %vm354 = vcmp.lt.s32.totalorder %v338, 0
  %v355 = vsel %vm354, 4294967295, 1
  %v356 = vsub.s32 0, %v338
  %v357 = vsel %vm354, %v356, %v338
  %v358 = vmul.u32 %v357, 3968
  %v359 = vshrl.u32 %v358, 12
  %v360 = vmul.u32 %v355, %v359
  %v361 = vadd.s32 %v360, %v352
  %v362 = vsel %vm353, %v361, %v338
  %vm363 = vcmp.ge.s32.totalorder %v362, 5120
  %vm364 = vmand %vm353, %vm363
  %v365 = vsel %vm364, 1.0, 0.0
  %v366 = vsel %vm364, 0, %v362
  %v367 = vsel %vm364, 1, 0
  %s368 = sadd.s32 16, 2
  %s369 = scalar_lea.vmem [#allocation3], %s368
  %370 = vst.msk [vmem:[%s369] sm:$0x3] %vm137, %v365
  %vm371 = vcmp.lt.s32.totalorder %v352, 0
  %v372 = vsel %vm371, 4294967295, 1
  %v373 = vsub.s32 0, %v352
  %v374 = vsel %vm371, %v373, %v352
  %v375 = vmul.u32 %v374, 3072
  %v376 = vshrl.u32 %v375, 12
  %v377 = vmul.u32 %v372, %v376
  %s378 = scalar_lea.vmem [#allocation2], 18
  %v379 = vld [vmem:[%s378] sm:$0x3]
  %v380 = vadd.s32 %v377, %v379
  %vm381 = vcmp.eq.s32.totalorder %v367, 0
  %vm382 = vcmp.lt.s32.totalorder %v366, 0
  %v383 = vsel %vm382, 4294967295, 1
  %v384 = vsub.s32 0, %v366
  %v385 = vsel %vm382, %v384, %v366
  %v386 = vmul.u32 %v385, 3968
  %v387 = vshrl.u32 %v386, 12
  %v388 = vmul.u32 %v383, %v387
  %v389 = vadd.s32 %v388, %v380
  %v390 = vsel %vm381, %v389, %v366
  %vm391 = vcmp.ge.s32.totalorder %v390, 5120
  %vm392 = vmand %vm381, %vm391
  %v393 = vsel %vm392, 1.0, 0.0
  %v394 = vsel %vm392, 0, %v390
  %v395 = vsel %vm392, 1, 0
  %s396 = sadd.s32 18, 2
  %s397 = scalar_lea.vmem [#allocation3], %s396
  %398 = vst.msk [vmem:[%s397] sm:$0x3] %vm137, %v393
  %vm399 = vcmp.lt.s32.totalorder %v380, 0
  %v400 = vsel %vm399, 4294967295, 1
  %v401 = vsub.s32 0, %v380
  %v402 = vsel %vm399, %v401, %v380
  %v403 = vmul.u32 %v402, 3072
  %v404 = vshrl.u32 %v403, 12
  %v405 = vmul.u32 %v400, %v404
  %s406 = scalar_lea.vmem [#allocation2], 20
  %v407 = vld [vmem:[%s406] sm:$0x3]
  %v408 = vadd.s32 %v405, %v407
  %vm409 = vcmp.eq.s32.totalorder %v395, 0
  %vm410 = vcmp.lt.s32.totalorder %v394, 0
  %v411 = vsel %vm410, 4294967295, 1
  %v412 = vsub.s32 0, %v394
  %v413 = vsel %vm410, %v412, %v394
  %v414 = vmul.u32 %v413, 3968
  %v415 = vshrl.u32 %v414, 12
  %v416 = vmul.u32 %v411, %v415
  %v417 = vadd.s32 %v416, %v408
  %v418 = vsel %vm409, %v417, %v394
  %vm419 = vcmp.ge.s32.totalorder %v418, 5120
  %vm420 = vmand %vm409, %vm419
  %v421 = vsel %vm420, 1.0, 0.0
  %v422 = vsel %vm420, 0, %v418
  %v423 = vsel %vm420, 1, 0
  %s424 = sadd.s32 20, 2
  %s425 = scalar_lea.vmem [#allocation3], %s424
  %426 = vst.msk [vmem:[%s425] sm:$0x3] %vm137, %v421
  %vm427 = vcmp.lt.s32.totalorder %v408, 0
  %v428 = vsel %vm427, 4294967295, 1
  %v429 = vsub.s32 0, %v408
  %v430 = vsel %vm427, %v429, %v408
  %v431 = vmul.u32 %v430, 3072
  %v432 = vshrl.u32 %v431, 12
  %v433 = vmul.u32 %v428, %v432
  %s434 = scalar_lea.vmem [#allocation2], 22
  %v435 = vld [vmem:[%s434] sm:$0x3]
  %v436 = vadd.s32 %v433, %v435
  %vm437 = vcmp.eq.s32.totalorder %v423, 0
  %vm438 = vcmp.lt.s32.totalorder %v422, 0
  %v439 = vsel %vm438, 4294967295, 1
  %v440 = vsub.s32 0, %v422
  %v441 = vsel %vm438, %v440, %v422
  %v442 = vmul.u32 %v441, 3968
  %v443 = vshrl.u32 %v442, 12
  %v444 = vmul.u32 %v439, %v443
  %v445 = vadd.s32 %v444, %v436
  %v446 = vsel %vm437, %v445, %v422
  %vm447 = vcmp.ge.s32.totalorder %v446, 5120
  %vm448 = vmand %vm437, %vm447
  %v449 = vsel %vm448, 1.0, 0.0
  %v450 = vsel %vm448, 0, %v446
  %v451 = vsel %vm448, 1, 0
  %s452 = sadd.s32 22, 2
  %s453 = scalar_lea.vmem [#allocation3], %s452
  %454 = vst.msk [vmem:[%s453] sm:$0x3] %vm137, %v449
  %vm455 = vcmp.lt.s32.totalorder %v436, 0
  %v456 = vsel %vm455, 4294967295, 1
  %v457 = vsub.s32 0, %v436
  %v458 = vsel %vm455, %v457, %v436
  %v459 = vmul.u32 %v458, 3072
  %v460 = vshrl.u32 %v459, 12
  %v461 = vmul.u32 %v456, %v460
  %s462 = scalar_lea.vmem [#allocation2], 24
  %v463 = vld [vmem:[%s462] sm:$0x3]
  %v464 = vadd.s32 %v461, %v463
  %vm465 = vcmp.eq.s32.totalorder %v451, 0
  %vm466 = vcmp.lt.s32.totalorder %v450, 0
  %v467 = vsel %vm466, 4294967295, 1
  %v468 = vsub.s32 0, %v450
  %v469 = vsel %vm466, %v468, %v450
  %v470 = vmul.u32 %v469, 3968
  %v471 = vshrl.u32 %v470, 12
  %v472 = vmul.u32 %v467, %v471
  %v473 = vadd.s32 %v472, %v464
  %v474 = vsel %vm465, %v473, %v450
  %vm475 = vcmp.ge.s32.totalorder %v474, 5120
  %vm476 = vmand %vm465, %vm475
  %v477 = vsel %vm476, 1.0, 0.0
  %v478 = vsel %vm476, 0, %v474
  %v479 = vsel %vm476, 1, 0
  %s480 = sadd.s32 24, 2
  %s481 = scalar_lea.vmem [#allocation3], %s480
  %482 = vst.msk [vmem:[%s481] sm:$0x3] %vm137, %v477
  %vm483 = vcmp.lt.s32.totalorder %v464, 0
  %v484 = vsel %vm483, 4294967295, 1
  %v485 = vsub.s32 0, %v464
  %v486 = vsel %vm483, %v485, %v464
  %v487 = vmul.u32 %v486, 3072
  %v488 = vshrl.u32 %v487, 12
  %v489 = vmul.u32 %v484, %v488
  %s490 = scalar_lea.vmem [#allocation2], 26
  %v491 = vld [vmem:[%s490] sm:$0x3]
  %v492 = vadd.s32 %v489, %v491
  %vm493 = vcmp.eq.s32.totalorder %v479, 0
  %vm494 = vcmp.lt.s32.totalorder %v478, 0
  %v495 = vsel %vm494, 4294967295, 1
  %v496 = vsub.s32 0, %v478
  %v497 = vsel %vm494, %v496, %v478
  %v498 = vmul.u32 %v497, 3968
  %v499 = vshrl.u32 %v498, 12
  %v500 = vmul.u32 %v495, %v499
  %v501 = vadd.s32 %v500, %v492
  %v502 = vsel %vm493, %v501, %v478
  %vm503 = vcmp.ge.s32.totalorder %v502, 5120
  %vm504 = vmand %vm493, %vm503
  %v505 = vsel %vm504, 1.0, 0.0
  %v506 = vsel %vm504, 0, %v502
  %v507 = vsel %vm504, 1, 0
  %s508 = sadd.s32 26, 2
  %s509 = scalar_lea.vmem [#allocation3], %s508
  %510 = vst.msk [vmem:[%s509] sm:$0x3] %vm137, %v505
  %vm511 = vcmp.lt.s32.totalorder %v492, 0
  %v512 = vsel %vm511, 4294967295, 1
  %v513 = vsub.s32 0, %v492
  %v514 = vsel %vm511, %v513, %v492
  %v515 = vmul.u32 %v514, 3072
  %v516 = vshrl.u32 %v515, 12
  %v517 = vmul.u32 %v512, %v516
  %s518 = scalar_lea.vmem [#allocation2], 28
  %v519 = vld [vmem:[%s518] sm:$0x3]
  %v520 = vadd.s32 %v517, %v519
  %vm521 = vcmp.eq.s32.totalorder %v507, 0
  %vm522 = vcmp.lt.s32.totalorder %v506, 0
  %v523 = vsel %vm522, 4294967295, 1
  %v524 = vsub.s32 0, %v506
  %v525 = vsel %vm522, %v524, %v506
  %v526 = vmul.u32 %v525, 3968
  %v527 = vshrl.u32 %v526, 12
  %v528 = vmul.u32 %v523, %v527
  %v529 = vadd.s32 %v528, %v520
  %v530 = vsel %vm521, %v529, %v506
  %vm531 = vcmp.ge.s32.totalorder %v530, 5120
  %vm532 = vmand %vm521, %vm531
  %v533 = vsel %vm532, 1.0, 0.0
  %s534 = sadd.s32 28, 2
  %s535 = scalar_lea.vmem [#allocation3], %s534
  %536 = vst.msk [vmem:[%s535] sm:$0x3] %vm137, %v533
  %v537 = vld [vmem:[#allocation3] sm:$0xff]
  %v538 = vld [vmem:[#allocation3 + $0x8] sm:$0xff]
  %v539 = vld [vmem:[#allocation3 + $0x10] sm:$0xff]
  %v540 = vld [vmem:[#allocation3 + $0x18] sm:$0xff]
  %v541 = vld [vmem:[%s2] sm:$0xff]
  %v542 = vld [vmem:[%s2 + $0x8] sm:$0xff]
  %v543 = vld [vmem:[%s2 + $0x10] sm:$0xff]
  %v544 = vld [vmem:[%s2 + $0x18] sm:$0xff]
  %v546 = vsel %vm132, %v537, 0
  %v549 = vsel %vm132, %v538, 0
  %v552 = vsel %vm132, %v539, 0
  %v555 = vsel %vm132, %v540, 0
  %557 = vmatprep.subr.mxu0 0.0
  %558 = vmatpush1.msra.mxu0 %v541
  %559 = vmatprep.subr.mxu0 0.0
  %560 = vmatpush1.msra.mxu0 %v542
  %561 = vmatprep.subr.mxu0 0.0
  %562 = vmatpush1.msra.mxu0 %v543
  %563 = vmatprep.subr.mxu0 0.0
  %564 = vmatpush1.msra.mxu0 %v544
  %565 = vmatprep.subr.mxu0 0.0
  %566 = vmatpush1.msra.mxu0 0.0
  %567 = vmatprep.subr.mxu0 0.0
  %568 = vmatpush1.msra.mxu0 0.0
  %569 = vmatprep.subr.mxu0 0.0
  %570 = vmatpush1.msra.mxu0 0.0
  %571 = vmatprep.subr.mxu0 0.0
  %572 = vmatpush1.msra.mxu0 0.0
  %573 = vmatprep.subr.mxu0 0.0
  %574 = vmatpush1.msra.mxu0 0.0
  %575 = vmatprep.subr.mxu0 0.0
  %576 = vmatpush1.msra.mxu0 0.0
  %577 = vmatprep.subr.mxu0 0.0
  %578 = vmatpush1.msra.mxu0 0.0
  %579 = vmatprep.subr.mxu0 0.0
  %580 = vmatpush1.msra.mxu0 0.0
  %581 = vmatprep.subr.mxu0 0.0
  %582 = vmatpush1.msra.mxu0 0.0
  %583 = vmatprep.subr.mxu0 0.0
  %584 = vmatpush1.msra.mxu0 0.0
  %585 = vmatprep.subr.mxu0 0.0
  %586 = vmatpush1.msra.mxu0 0.0
  %587 = vmatprep.subr.mxu0 0.0
  %588 = vmatpush1.msra.mxu0 0.0
  %589 = vmatprep.subr.mxu0 0.0
  %590 = vmatpush1.msra.mxu0 0.0
  %591 = vmatprep.subr.mxu0 0.0
  %592 = vmatpush1.msra.mxu0 0.0
  %593 = vmatprep.subr.mxu0 0.0
  %594 = vmatpush1.msra.mxu0 0.0
  %595 = vmatprep.subr.mxu0 0.0
  %596 = vmatpush1.msra.mxu0 0.0
  %597 = vmatprep.subr.mxu0 0.0
  %598 = vmatpush1.msra.mxu0 0.0
  %599 = vmatprep.subr.mxu0 0.0
  %600 = vmatpush1.msra.mxu0 0.0
  %601 = vmatprep.subr.mxu0 0.0
  %602 = vmatpush1.msra.mxu0 0.0
  %603 = vmatprep.subr.mxu0 0.0
  %604 = vmatpush1.msra.mxu0 0.0
  %605 = vmatprep.subr.mxu0 0.0
  %606 = vmatpush1.msra.mxu0 0.0
  %607 = vmatprep.subr.mxu0 0.0
  %608 = vmatpush1.msra.mxu0 0.0
  %609 = vmatprep.subr.mxu0 0.0
  %610 = vmatpush1.msra.mxu0 0.0
  %611 = vmatprep.subr.mxu0 0.0
  %612 = vmatpush1.msra.mxu0 0.0
  %613 = vmatprep.subr.mxu0 0.0
  %614 = vmatpush1.msra.mxu0 0.0
  %615 = vmatprep.subr.mxu0 0.0
  %616 = vmatpush1.msra.mxu0 0.0
  %617 = vmatprep.subr.mxu0 0.0
  %618 = vmatpush1.msra.mxu0 0.0
  %619 = vmatprep.subr.mxu0 0.0
  %620 = vmatpush1.msra.mxu0 0.0
  %621 = vmatprep.mubr.f32.mxu0 0.0
  %622 = vmatmul.mubr.f32.gmra.mrb[0].mxu0 %v546
  %v623 = vpop.f32.mrb[0].mxu0
  %v624 = vadd.f32 0.0, %v623
  %v625 = vpop.f32.mrb[0].mxu0
  %626 = vmatprep.mubr.f32.mxu0 0.0
  %627 = vmatmul.mubr.f32.gmra.mrb[0].mxu0 %v549
  %v628 = vpop.f32.mrb[0].mxu0
  %v629 = vadd.f32 0.0, %v628
  %v630 = vpop.f32.mrb[0].mxu0
  %631 = vmatprep.mubr.f32.mxu0 0.0
  %632 = vmatmul.mubr.f32.gmra.mrb[0].mxu0 %v552
  %v633 = vpop.f32.mrb[0].mxu0
  %v634 = vadd.f32 0.0, %v633
  %v635 = vpop.f32.mrb[0].mxu0
  %636 = vmatprep.mubr.f32.mxu0 0.0
  %637 = vmatmul.mubr.f32.gmra.mrb[0].mxu0 %v555
  %v638 = vpop.f32.mrb[0].mxu0
  %v639 = vadd.f32 0.0, %v638
  %v640 = vpop.f32.mrb[0].mxu0
  %641 = vdwg.mxu0
  %v642 = vmul.f32 %v624, 64.0
  %v643 = vmul.f32 %v629, 64.0
  %v644 = vmul.f32 %v634, 64.0
  %v645 = vmul.f32 %v639, 64.0
  %v646 = vcvt.f32.s32.to.zero.pseudo %v642
  %v647 = vcvt.f32.s32.to.zero.pseudo %v643
  %v648 = vcvt.f32.s32.to.zero.pseudo %v644
  %v649 = vcvt.f32.s32.to.zero.pseudo %v645
  %vm650 = vcmask 64512
  %651 = vst.msk [vmem:[#allocation4] sm:$0xff] %vm650, %v646
  %652 = vst.msk [vmem:[#allocation4 + $0x8] sm:$0xff] %vm650, %v647
  %653 = vst.msk [vmem:[#allocation4 + $0x10] sm:$0xff] %vm650, %v648
  %654 = vst.msk [vmem:[#allocation4 + $0x18] sm:$0xff] %vm650, %v649
  %vm655 = vcmask 58368
  %656 = vst.msk [vmem:[%s3] sm:$0x3] %vm655, 0.0
  %v657 = vld [vmem:[#allocation4] sm:$0x3]
  %vm658 = vcmp.ge.s32.totalorder %v657, 5120
  %v659 = vsel %vm658, 1.0, 0.0
  %v660 = vsel %vm658, 0, %v657
  %v661 = vsel %vm658, 1, 0
  %s662 = scalar_lea.vmem %s3, %s144
  %663 = vst.msk [vmem:[%s662] sm:$0x3] %vm655, %v659
  %vm664 = vcmp.lt.s32.totalorder %v657, 0
  %v665 = vsel %vm664, 4294967295, 1
  %v666 = vsub.s32 0, %v657
  %v667 = vsel %vm664, %v666, %v657
  %v668 = vmul.u32 %v667, 3072
  %v669 = vshrl.u32 %v668, 12
  %v670 = vmul.u32 %v665, %v669
  %s671 = scalar_lea.vmem [#allocation4], 2
  %v672 = vld [vmem:[%s671] sm:$0x3]
  %v673 = vadd.s32 %v670, %v672
  %vm674 = vcmp.eq.s32.totalorder %v661, 0
  %vm675 = vcmp.lt.s32.totalorder %v660, 0
  %v676 = vsel %vm675, 4294967295, 1
  %v677 = vsub.s32 0, %v660
  %v678 = vsel %vm675, %v677, %v660
  %v679 = vmul.u32 %v678, 3968
  %v680 = vshrl.u32 %v679, 12
  %v681 = vmul.u32 %v676, %v680
  %v682 = vadd.s32 %v681, %v673
  %v683 = vsel %vm674, %v682, %v660
  %vm684 = vcmp.ge.s32.totalorder %v683, 5120
  %vm685 = vmand %vm674, %vm684
  %v686 = vsel %vm685, 1.0, 0.0
  %v687 = vsel %vm685, 0, %v683
  %v688 = vsel %vm685, 1, 0
  %s689 = scalar_lea.vmem %s3, %s172
  %690 = vst.msk [vmem:[%s689] sm:$0x3] %vm655, %v686
  %vm691 = vcmp.lt.s32.totalorder %v673, 0
  %v692 = vsel %vm691, 4294967295, 1
  %v693 = vsub.s32 0, %v673
  %v694 = vsel %vm691, %v693, %v673
  %v695 = vmul.u32 %v694, 3072
  %v696 = vshrl.u32 %v695, 12
  %v697 = vmul.u32 %v692, %v696
  %s698 = scalar_lea.vmem [#allocation4], 4
  %v699 = vld [vmem:[%s698] sm:$0x3]
  %v700 = vadd.s32 %v697, %v699
  %vm701 = vcmp.eq.s32.totalorder %v688, 0
  %vm702 = vcmp.lt.s32.totalorder %v687, 0
  %v703 = vsel %vm702, 4294967295, 1
  %v704 = vsub.s32 0, %v687
  %v705 = vsel %vm702, %v704, %v687
  %v706 = vmul.u32 %v705, 3968
  %v707 = vshrl.u32 %v706, 12
  %v708 = vmul.u32 %v703, %v707
  %v709 = vadd.s32 %v708, %v700
  %v710 = vsel %vm701, %v709, %v687
  %vm711 = vcmp.ge.s32.totalorder %v710, 5120
  %vm712 = vmand %vm701, %vm711
  %v713 = vsel %vm712, 1.0, 0.0
  %v714 = vsel %vm712, 0, %v710
  %v715 = vsel %vm712, 1, 0
  %s716 = scalar_lea.vmem %s3, %s200
  %717 = vst.msk [vmem:[%s716] sm:$0x3] %vm655, %v713
  %vm718 = vcmp.lt.s32.totalorder %v700, 0
  %v719 = vsel %vm718, 4294967295, 1
  %v720 = vsub.s32 0, %v700
  %v721 = vsel %vm718, %v720, %v700
  %v722 = vmul.u32 %v721, 3072
  %v723 = vshrl.u32 %v722, 12
  %v724 = vmul.u32 %v719, %v723
  %s725 = scalar_lea.vmem [#allocation4], 6
  %v726 = vld [vmem:[%s725] sm:$0x3]
  %v727 = vadd.s32 %v724, %v726
  %vm728 = vcmp.eq.s32.totalorder %v715, 0
  %vm729 = vcmp.lt.s32.totalorder %v714, 0
  %v730 = vsel %vm729, 4294967295, 1
  %v731 = vsub.s32 0, %v714
  %v732 = vsel %vm729, %v731, %v714
  %v733 = vmul.u32 %v732, 3968
  %v734 = vshrl.u32 %v733, 12
  %v735 = vmul.u32 %v730, %v734
  %v736 = vadd.s32 %v735, %v727
  %v737 = vsel %vm728, %v736, %v714
  %vm738 = vcmp.ge.s32.totalorder %v737, 5120
  %vm739 = vmand %vm728, %vm738
  %v740 = vsel %vm739, 1.0, 0.0
  %v741 = vsel %vm739, 0, %v737
  %v742 = vsel %vm739, 1, 0
  %s743 = scalar_lea.vmem %s3, %s228
  %744 = vst.msk [vmem:[%s743] sm:$0x3] %vm655, %v740
  %vm745 = vcmp.lt.s32.totalorder %v727, 0
  %v746 = vsel %vm745, 4294967295, 1
  %v747 = vsub.s32 0, %v727
  %v748 = vsel %vm745, %v747, %v727
  %v749 = vmul.u32 %v748, 3072
  %v750 = vshrl.u32 %v749, 12
  %v751 = vmul.u32 %v746, %v750
  %s752 = scalar_lea.vmem [#allocation4], 8
  %v753 = vld [vmem:[%s752] sm:$0x3]
  %v754 = vadd.s32 %v751, %v753
  %vm755 = vcmp.eq.s32.totalorder %v742, 0
  %vm756 = vcmp.lt.s32.totalorder %v741, 0
  %v757 = vsel %vm756, 4294967295, 1
  %v758 = vsub.s32 0, %v741
  %v759 = vsel %vm756, %v758, %v741
  %v760 = vmul.u32 %v759, 3968
  %v761 = vshrl.u32 %v760, 12
  %v762 = vmul.u32 %v757, %v761
  %v763 = vadd.s32 %v762, %v754
  %v764 = vsel %vm755, %v763, %v741
  %vm765 = vcmp.ge.s32.totalorder %v764, 5120
  %vm766 = vmand %vm755, %vm765
  %v767 = vsel %vm766, 1.0, 0.0
  %v768 = vsel %vm766, 0, %v764
  %v769 = vsel %vm766, 1, 0
  %s770 = scalar_lea.vmem %s3, %s256
  %771 = vst.msk [vmem:[%s770] sm:$0x3] %vm655, %v767
  %vm772 = vcmp.lt.s32.totalorder %v754, 0
  %v773 = vsel %vm772, 4294967295, 1
  %v774 = vsub.s32 0, %v754
  %v775 = vsel %vm772, %v774, %v754
  %v776 = vmul.u32 %v775, 3072
  %v777 = vshrl.u32 %v776, 12
  %v778 = vmul.u32 %v773, %v777
  %s779 = scalar_lea.vmem [#allocation4], 10
  %v780 = vld [vmem:[%s779] sm:$0x3]
  %v781 = vadd.s32 %v778, %v780
  %vm782 = vcmp.eq.s32.totalorder %v769, 0
  %vm783 = vcmp.lt.s32.totalorder %v768, 0
  %v784 = vsel %vm783, 4294967295, 1
  %v785 = vsub.s32 0, %v768
  %v786 = vsel %vm783, %v785, %v768
  %v787 = vmul.u32 %v786, 3968
  %v788 = vshrl.u32 %v787, 12
  %v789 = vmul.u32 %v784, %v788
  %v790 = vadd.s32 %v789, %v781
  %v791 = vsel %vm782, %v790, %v768
  %vm792 = vcmp.ge.s32.totalorder %v791, 5120
  %vm793 = vmand %vm782, %vm792
  %v794 = vsel %vm793, 1.0, 0.0
  %v795 = vsel %vm793, 0, %v791
  %v796 = vsel %vm793, 1, 0
  %s797 = scalar_lea.vmem %s3, %s284
  %798 = vst.msk [vmem:[%s797] sm:$0x3] %vm655, %v794
  %vm799 = vcmp.lt.s32.totalorder %v781, 0
  %v800 = vsel %vm799, 4294967295, 1
  %v801 = vsub.s32 0, %v781
  %v802 = vsel %vm799, %v801, %v781
  %v803 = vmul.u32 %v802, 3072
  %v804 = vshrl.u32 %v803, 12
  %v805 = vmul.u32 %v800, %v804
  %s806 = scalar_lea.vmem [#allocation4], 12
  %v807 = vld [vmem:[%s806] sm:$0x3]
  %v808 = vadd.s32 %v805, %v807
  %vm809 = vcmp.eq.s32.totalorder %v796, 0
  %vm810 = vcmp.lt.s32.totalorder %v795, 0
  %v811 = vsel %vm810, 4294967295, 1
  %v812 = vsub.s32 0, %v795
  %v813 = vsel %vm810, %v812, %v795
  %v814 = vmul.u32 %v813, 3968
  %v815 = vshrl.u32 %v814, 12
  %v816 = vmul.u32 %v811, %v815
  %v817 = vadd.s32 %v816, %v808
  %v818 = vsel %vm809, %v817, %v795
  %vm819 = vcmp.ge.s32.totalorder %v818, 5120
  %vm820 = vmand %vm809, %vm819
  %v821 = vsel %vm820, 1.0, 0.0
  %v822 = vsel %vm820, 0, %v818
  %v823 = vsel %vm820, 1, 0
  %s824 = scalar_lea.vmem %s3, %s312
  %825 = vst.msk [vmem:[%s824] sm:$0x3] %vm655, %v821
  %vm826 = vcmp.lt.s32.totalorder %v808, 0
  %v827 = vsel %vm826, 4294967295, 1
  %v828 = vsub.s32 0, %v808
  %v829 = vsel %vm826, %v828, %v808
  %v830 = vmul.u32 %v829, 3072
  %v831 = vshrl.u32 %v830, 12
  %v832 = vmul.u32 %v827, %v831
  %s833 = scalar_lea.vmem [#allocation4], 14
  %v834 = vld [vmem:[%s833] sm:$0x3]
  %v835 = vadd.s32 %v832, %v834
  %vm836 = vcmp.eq.s32.totalorder %v823, 0
  %vm837 = vcmp.lt.s32.totalorder %v822, 0
  %v838 = vsel %vm837, 4294967295, 1
  %v839 = vsub.s32 0, %v822
  %v840 = vsel %vm837, %v839, %v822
  %v841 = vmul.u32 %v840, 3968
  %v842 = vshrl.u32 %v841, 12
  %v843 = vmul.u32 %v838, %v842
  %v844 = vadd.s32 %v843, %v835
  %v845 = vsel %vm836, %v844, %v822
  %vm846 = vcmp.ge.s32.totalorder %v845, 5120
  %vm847 = vmand %vm836, %vm846
  %v848 = vsel %vm847, 1.0, 0.0
  %v849 = vsel %vm847, 0, %v845
  %v850 = vsel %vm847, 1, 0
  %s851 = scalar_lea.vmem %s3, %s340
  %852 = vst.msk [vmem:[%s851] sm:$0x3] %vm655, %v848
  %vm853 = vcmp.lt.s32.totalorder %v835, 0
  %v854 = vsel %vm853, 4294967295, 1
  %v855 = vsub.s32 0, %v835
  %v856 = vsel %vm853, %v855, %v835
  %v857 = vmul.u32 %v856, 3072
  %v858 = vshrl.u32 %v857, 12
  %v859 = vmul.u32 %v854, %v858
  %s860 = scalar_lea.vmem [#allocation4], 16
  %v861 = vld [vmem:[%s860] sm:$0x3]
  %v862 = vadd.s32 %v859, %v861
  %vm863 = vcmp.eq.s32.totalorder %v850, 0
  %vm864 = vcmp.lt.s32.totalorder %v849, 0
  %v865 = vsel %vm864, 4294967295, 1
  %v866 = vsub.s32 0, %v849
  %v867 = vsel %vm864, %v866, %v849
  %v868 = vmul.u32 %v867, 3968
  %v869 = vshrl.u32 %v868, 12
  %v870 = vmul.u32 %v865, %v869
  %v871 = vadd.s32 %v870, %v862
  %v872 = vsel %vm863, %v871, %v849
  %vm873 = vcmp.ge.s32.totalorder %v872, 5120
  %vm874 = vmand %vm863, %vm873
  %v875 = vsel %vm874, 1.0, 0.0
  %v876 = vsel %vm874, 0, %v872
  %v877 = vsel %vm874, 1, 0
  %s878 = scalar_lea.vmem %s3, %s368
  %879 = vst.msk [vmem:[%s878] sm:$0x3] %vm655, %v875
  %vm880 = vcmp.lt.s32.totalorder %v862, 0
  %v881 = vsel %vm880, 4294967295, 1
  %v882 = vsub.s32 0, %v862
  %v883 = vsel %vm880, %v882, %v862
  %v884 = vmul.u32 %v883, 3072
  %v885 = vshrl.u32 %v884, 12
  %v886 = vmul.u32 %v881, %v885
  %s887 = scalar_lea.vmem [#allocation4], 18
  %v888 = vld [vmem:[%s887] sm:$0x3]
  %v889 = vadd.s32 %v886, %v888
  %vm890 = vcmp.eq.s32.totalorder %v877, 0
  %vm891 = vcmp.lt.s32.totalorder %v876, 0
  %v892 = vsel %vm891, 4294967295, 1
  %v893 = vsub.s32 0, %v876
  %v894 = vsel %vm891, %v893, %v876
  %v895 = vmul.u32 %v894, 3968
  %v896 = vshrl.u32 %v895, 12
  %v897 = vmul.u32 %v892, %v896
  %v898 = vadd.s32 %v897, %v889
  %v899 = vsel %vm890, %v898, %v876
  %vm900 = vcmp.ge.s32.totalorder %v899, 5120
  %vm901 = vmand %vm890, %vm900
  %v902 = vsel %vm901, 1.0, 0.0
  %v903 = vsel %vm901, 0, %v899
  %v904 = vsel %vm901, 1, 0
  %s905 = scalar_lea.vmem %s3, %s396
  %906 = vst.msk [vmem:[%s905] sm:$0x3] %vm655, %v902
  %vm907 = vcmp.lt.s32.totalorder %v889, 0
  %v908 = vsel %vm907, 4294967295, 1
  %v909 = vsub.s32 0, %v889
  %v910 = vsel %vm907, %v909, %v889
  %v911 = vmul.u32 %v910, 3072
  %v912 = vshrl.u32 %v911, 12
  %v913 = vmul.u32 %v908, %v912
  %s914 = scalar_lea.vmem [#allocation4], 20
  %v915 = vld [vmem:[%s914] sm:$0x3]
  %v916 = vadd.s32 %v913, %v915
  %vm917 = vcmp.eq.s32.totalorder %v904, 0
  %vm918 = vcmp.lt.s32.totalorder %v903, 0
  %v919 = vsel %vm918, 4294967295, 1
  %v920 = vsub.s32 0, %v903
  %v921 = vsel %vm918, %v920, %v903
  %v922 = vmul.u32 %v921, 3968
  %v923 = vshrl.u32 %v922, 12
  %v924 = vmul.u32 %v919, %v923
  %v925 = vadd.s32 %v924, %v916
  %v926 = vsel %vm917, %v925, %v903
  %vm927 = vcmp.ge.s32.totalorder %v926, 5120
  %vm928 = vmand %vm917, %vm927
  %v929 = vsel %vm928, 1.0, 0.0
  %v930 = vsel %vm928, 0, %v926
  %v931 = vsel %vm928, 1, 0
  %s932 = scalar_lea.vmem %s3, %s424
  %933 = vst.msk [vmem:[%s932] sm:$0x3] %vm655, %v929
  %vm934 = vcmp.lt.s32.totalorder %v916, 0
  %v935 = vsel %vm934, 4294967295, 1
  %v936 = vsub.s32 0, %v916
  %v937 = vsel %vm934, %v936, %v916
  %v938 = vmul.u32 %v937, 3072
  %v939 = vshrl.u32 %v938, 12
  %v940 = vmul.u32 %v935, %v939
  %s941 = scalar_lea.vmem [#allocation4], 22
  %v942 = vld [vmem:[%s941] sm:$0x3]
  %v943 = vadd.s32 %v940, %v942
  %vm944 = vcmp.eq.s32.totalorder %v931, 0
  %vm945 = vcmp.lt.s32.totalorder %v930, 0
  %v946 = vsel %vm945, 4294967295, 1
  %v947 = vsub.s32 0, %v930
  %v948 = vsel %vm945, %v947, %v930
  %v949 = vmul.u32 %v948, 3968
  %v950 = vshrl.u32 %v949, 12
  %v951 = vmul.u32 %v946, %v950
  %v952 = vadd.s32 %v951, %v943
  %v953 = vsel %vm944, %v952, %v930
  %vm954 = vcmp.ge.s32.totalorder %v953, 5120
  %vm955 = vmand %vm944, %vm954
  %v956 = vsel %vm955, 1.0, 0.0
  %v957 = vsel %vm955, 0, %v953
  %v958 = vsel %vm955, 1, 0
  %s959 = scalar_lea.vmem %s3, %s452
  %960 = vst.msk [vmem:[%s959] sm:$0x3] %vm655, %v956
  %vm961 = vcmp.lt.s32.totalorder %v943, 0
  %v962 = vsel %vm961, 4294967295, 1
  %v963 = vsub.s32 0, %v943
  %v964 = vsel %vm961, %v963, %v943
  %v965 = vmul.u32 %v964, 3072
  %v966 = vshrl.u32 %v965, 12
  %v967 = vmul.u32 %v962, %v966
  %s968 = scalar_lea.vmem [#allocation4], 24
  %v969 = vld [vmem:[%s968] sm:$0x3]
  %v970 = vadd.s32 %v967, %v969
  %vm971 = vcmp.eq.s32.totalorder %v958, 0
  %vm972 = vcmp.lt.s32.totalorder %v957, 0
  %v973 = vsel %vm972, 4294967295, 1
  %v974 = vsub.s32 0, %v957
  %v975 = vsel %vm972, %v974, %v957
  %v976 = vmul.u32 %v975, 3968
  %v977 = vshrl.u32 %v976, 12
  %v978 = vmul.u32 %v973, %v977
  %v979 = vadd.s32 %v978, %v970
  %v980 = vsel %vm971, %v979, %v957
  %vm981 = vcmp.ge.s32.totalorder %v980, 5120
  %vm982 = vmand %vm971, %vm981
  %v983 = vsel %vm982, 1.0, 0.0
  %v984 = vsel %vm982, 0, %v980
  %v985 = vsel %vm982, 1, 0
  %s986 = scalar_lea.vmem %s3, %s480
  %987 = vst.msk [vmem:[%s986] sm:$0x3] %vm655, %v983
  %vm988 = vcmp.lt.s32.totalorder %v970, 0
  %v989 = vsel %vm988, 4294967295, 1
  %v990 = vsub.s32 0, %v970
  %v991 = vsel %vm988, %v990, %v970
  %v992 = vmul.u32 %v991, 3072
  %v993 = vshrl.u32 %v992, 12
  %v994 = vmul.u32 %v989, %v993
  %s995 = scalar_lea.vmem [#allocation4], 26
  %v996 = vld [vmem:[%s995] sm:$0x3]
  %v997 = vadd.s32 %v994, %v996
  %vm998 = vcmp.eq.s32.totalorder %v985, 0
  %vm999 = vcmp.lt.s32.totalorder %v984, 0
  %v1000 = vsel %vm999, 4294967295, 1
  %v1001 = vsub.s32 0, %v984
  %v1002 = vsel %vm999, %v1001, %v984
  %v1003 = vmul.u32 %v1002, 3968
  %v1004 = vshrl.u32 %v1003, 12
  %v1005 = vmul.u32 %v1000, %v1004
  %v1006 = vadd.s32 %v1005, %v997
  %v1007 = vsel %vm998, %v1006, %v984
  %vm1008 = vcmp.ge.s32.totalorder %v1007, 5120
  %vm1009 = vmand %vm998, %vm1008
  %v1010 = vsel %vm1009, 1.0, 0.0
  %v1011 = vsel %vm1009, 0, %v1007
  %v1012 = vsel %vm1009, 1, 0
  %s1013 = scalar_lea.vmem %s3, %s508
  %1014 = vst.msk [vmem:[%s1013] sm:$0x3] %vm655, %v1010
  %vm1015 = vcmp.lt.s32.totalorder %v997, 0
  %v1016 = vsel %vm1015, 4294967295, 1
  %v1017 = vsub.s32 0, %v997
  %v1018 = vsel %vm1015, %v1017, %v997
  %v1019 = vmul.u32 %v1018, 3072
  %v1020 = vshrl.u32 %v1019, 12
  %v1021 = vmul.u32 %v1016, %v1020
  %s1022 = scalar_lea.vmem [#allocation4], 28
  %v1023 = vld [vmem:[%s1022] sm:$0x3]
  %v1024 = vadd.s32 %v1021, %v1023
  %vm1025 = vcmp.eq.s32.totalorder %v1012, 0
  %vm1026 = vcmp.lt.s32.totalorder %v1011, 0
  %v1027 = vsel %vm1026, 4294967295, 1
  %v1028 = vsub.s32 0, %v1011
  %v1029 = vsel %vm1026, %v1028, %v1011
  %v1030 = vmul.u32 %v1029, 3968
  %v1031 = vshrl.u32 %v1030, 12
  %v1032 = vmul.u32 %v1027, %v1031
  %v1033 = vadd.s32 %v1032, %v1024
  %v1034 = vsel %vm1025, %v1033, %v1011
  %vm1035 = vcmp.ge.s32.totalorder %v1034, 5120
  %vm1036 = vmand %vm1025, %vm1035
  %v1037 = vsel %vm1036, 1.0, 0.0
  %s1038 = scalar_lea.vmem %s3, %s534
  %1039 = vst.msk [vmem:[%s1038] sm:$0x3] %vm655, %v1037
  // Predicated region
  $region14: #{tpu_custom_call.1} parent=0 // pred_check
    _
  $region15: #{tpu_custom_call.1} parent=0 // pred_check_branch
    %1041 = sbr.rel (0) target = $region17
  $region16: #{tpu_custom_call.1} parent=0 // pred_region
    _
  $region17: #{tpu_custom_call.1} parent=0 // pred_fallthru
    _
  // Predicated region
  $region18: #{tpu_custom_call.1} parent=0 // pred_check
    _
  $region19: #{tpu_custom_call.1} parent=0 // pred_check_branch
    %1043 = sbr.rel (0) target = $region21
  $region20: #{tpu_custom_call.1} parent=0 // pred_region
    _
  $region21: #{tpu_custom_call.1} parent=0 // pred_fallthru
    _

</llo_original>
